<compile_context>
chip_gen: v7x
topology: tpu7x:2x2x1
jax: 0.10.0
libtpu: 0.0.40
codegen_flags: <defaults>
</compile_context>

<pallas_src>
import numpy as np
import jax
import jax.numpy as jnp
from jax import lax
from jax.experimental import pallas as pl
from jax.experimental.pallas import tpu as pltpu

# Sequence length must be 514 so the conv stack ends at 32 channels x 30 steps
# (matching the Linear(in_features=32*30) layer of the PyTorch module).
L_IN = 514
L1, L2, L3, L4, L5, L6 = 512, 256, 127, 63, 31, 30   # lengths after each stage
E = 8                                                 # examples packed on lanes
C_IN, C1, C2, C3 = 6, 16, 16, 32
H_FC, N_OUT = 16, 3


def _gait_kernel(xin_ref, w1_ref, b1_ref, w2_ref, b2_ref, w3_ref, b3_ref,
                 wl_ref, mask_ref, csum_ref, bfc_ref, wout_ref, bout_ref,
                 o_ref, s1, s2, s3, s4, s5, s6):
    f32 = jnp.float32

    # conv1 (6 -> 16, k=3, s=1): 3 taps lane-concatenated -> one MXU matmul.
    cat1 = jnp.concatenate(
        [xin_ref[0, pl.ds(j, L1), :] for j in range(3)], axis=1)         # (512, 144)
    s1[...] = jnp.dot(cat1, w1_ref[...],
                      preferred_element_type=f32) + b1_ref[...]          # (512, 128)

    # maxpool k=2 s=2: (512, 128) -> (256, 128)
    s2[...] = jnp.maximum(s1[pl.ds(0, L2, stride=2), :],
                          s1[pl.ds(1, L2, stride=2), :])

    # conv2 (16 -> 16, k=3, s=2): 127 valid output rows
    cat2 = jnp.concatenate(
        [s2[pl.ds(j, L3, stride=2), :] for j in range(3)], axis=1)       # (127, 384)
    s3[0:L3, :] = jnp.dot(cat2, w2_ref[...],
                          preferred_element_type=f32) + b2_ref[...]

    # maxpool k=3 s=2: 127 -> 63 rows
    p = s3[pl.ds(0, L4, stride=2), :]
    p = jnp.maximum(p, s3[pl.ds(1, L4, stride=2), :])
    p = jnp.maximum(p, s3[pl.ds(2, L4, stride=2), :])
    s4[0:L4, :] = p

    # conv3 (16 -> 32, k=3, s=2): 31 valid rows, 256 lanes (e*32 + oc)
    cat3 = jnp.concatenate(
        [s4[pl.ds(j, L5, stride=2), :] for j in range(3)], axis=1)       # (31, 384)
    s5[0:L5, :] = jnp.dot(cat3, w3_ref[...],
                          preferred_element_type=f32) + b3_ref[...]

    # maxpool k=2 s=1: 31 -> 30 rows
    y6 = jnp.maximum(s5[0:L6, :], s5[pl.ds(1, L6), :])                   # (30, 256)

    # Flatten + Linear(960 -> 16), examples kept on lanes.
    #   s6[c*16+h, e*32+c'] = sum_t wfc[h, c*30+t] * y6[t, e*32+c']
    #   q[h, e*32+c]        = s6[c*16+h, e*32+c]        (mask + fold over c)
    #   hidden[h, e]        = sum_c q[h, e*32+c] + bfc[h]
    s6[...] = jnp.dot(wl_ref[...], y6, preferred_element_type=f32)       # (512, 256)
    q = s6[0:H_FC, :] * mask_ref[0:H_FC, :]
    for c in range(1, C3):
        q = q + s6[c * H_FC:(c + 1) * H_FC, :] * mask_ref[c * H_FC:(c + 1) * H_FC, :]
    hidden = jnp.dot(q, csum_ref[...],
                     preferred_element_type=f32) + bfc_ref[...]          # (16, 128)

    # Linear(16 -> 3): rows = outputs (padded to 8), lanes = examples (padded to 128)
    o_ref[0] = jnp.dot(wout_ref[...], hidden,
                       preferred_element_type=f32) + bout_ref[...]       # (8, 128)


def gait_forward_pallas(x_ncl, params):
    """x_ncl: (B, 6, 514) float32 in PyTorch NCL layout."""
    (w1, b1, w2, b2, w3, b3, wfc, bfc, wout, bout) = params
    f32 = jnp.float32
    B = x_ncl.shape[0]
    assert x_ncl.shape[1:] == (C_IN, L_IN)
    Bp = ((B + E - 1) // E) * E
    G = Bp // E

    x = x_ncl.astype(f32)
    if Bp != B:
        x = jnp.pad(x, ((0, Bp - B), (0, 0), (0, 0)))
    # time-major, 8 examples on lanes: xp[g, t, e*6 + ic] = x[g*8+e, ic, t]
    xp = x.reshape(G, E, C_IN, L_IN).transpose(0, 3, 1, 2).reshape(G, L_IN, E * C_IN)

    # per-example block-diagonal conv weights in the kernel's tap-concat layout:
    #   W[j*E*ic + e*ic + i, e*oc + o] = w[o, i, j]
    def block_diag_taps(w):
        oc, ic, k = w.shape
        eye = jnp.eye(E, dtype=f32)
        blk = jnp.transpose(w.astype(f32), (2, 1, 0))            # (k, ic, oc)
        out = jnp.einsum('ab,kio->kaibo', eye, blk)
        return out.reshape(k * E * ic, E * oc)

    w1bd = block_diag_taps(w1)                                   # (144, 128)
    w2bd = block_diag_taps(w2)                                   # (384, 128)
    w3bd = block_diag_taps(w3)                                   # (384, 256)
    b1row = jnp.tile(b1.astype(f32), E)[None, :]                 # (1, 128)
    b2row = jnp.tile(b2.astype(f32), E)[None, :]                 # (1, 128)
    b3row = jnp.tile(b3.astype(f32), E)[None, :]                 # (1, 256)

    # FC1 weight as MXU LHS: wl[c*16 + h, t] = wfc[h, c*30 + t]   (no duplication)
    wl = jnp.transpose(wfc.astype(f32).reshape(H_FC, C3, L6), (1, 0, 2))
    wl = wl.reshape(C3 * H_FC, L6)                               # (512, 30)
    rows = np.arange(C3 * H_FC)
    cols = np.arange(E * C3)
    mask = jnp.asarray((rows[:, None] // H_FC == cols[None, :] % C3)
                       .astype(np.float32))                      # (512, 256)
    kidx = np.arange(E * C3)
    lane = np.arange(E * H_FC)
    csum = jnp.asarray((lane[None, :] == kidx[:, None] // C3)
                       .astype(np.float32))                      # (256, 128)
    bfc_mat = jnp.broadcast_to(bfc.astype(f32).reshape(H_FC, 1), (H_FC, E * H_FC))
    wout_pad = jnp.zeros((8, H_FC), f32).at[0:N_OUT, :].set(wout.astype(f32))
    bout_mat = jnp.broadcast_to(
        jnp.zeros((8, 1), f32).at[0:N_OUT, 0].set(bout.astype(f32)), (8, E * H_FC))

    def fixed(shape):
        nd = len(shape)
        return pl.BlockSpec(shape, lambda i, _nd=nd: (0,) * _nd)

    out = pl.pallas_call(
        _gait_kernel,
        out_shape=jax.ShapeDtypeStruct((G, 8, 128), f32),
        grid_spec=pltpu.PrefetchScalarGridSpec(
            num_scalar_prefetch=0,
            grid=(G,),
            in_specs=[
                pl.BlockSpec((1, L_IN, E * C_IN), lambda i: (i, 0, 0)),  # input
                fixed((3 * E * C_IN, E * C1)), fixed((1, E * C1)),       # conv1
                fixed((3 * E * C1, E * C2)), fixed((1, E * C2)),         # conv2
                fixed((3 * E * C2, E * C3)), fixed((1, E * C3)),         # conv3
                fixed((C3 * H_FC, L6)),                                  # fc1 weight
                fixed((C3 * H_FC, E * C3)),                              # channel mask
                fixed((E * C3, E * H_FC)),                               # lane-group sum
                fixed((H_FC, E * H_FC)),                                 # fc1 bias
                fixed((8, H_FC)), fixed((8, E * H_FC)),                  # out layer
            ],
            out_specs=pl.BlockSpec((1, 8, 128), lambda i: (i, 0, 0)),
            scratch_shapes=[
                pltpu.VMEM((L1, E * C1), f32),        # conv1 out (512, 128)
                pltpu.VMEM((L2, E * C1), f32),        # pool1 out (256, 128)
                pltpu.VMEM((128, E * C2), f32),       # conv2 out (127 valid rows)
                pltpu.VMEM((64, E * C2), f32),        # pool2 out (63 valid rows)
                pltpu.VMEM((32, E * C3), f32),        # conv3 out (31 valid rows)
                pltpu.VMEM((C3 * H_FC, E * C3), f32), # FC1 partials (512, 256)
            ],
        ),
        compiler_params=pltpu.CompilerParams(
            dimension_semantics=("parallel",),
            vmem_limit_bytes=32 * 1024 * 1024),
    )(xp, w1bd, b1row, w2bd, b2row, w3bd, b3row,
      wl, mask, csum, bfc_mat, wout_pad, bout_mat)

    # out[g, o, e] -> (B, 3)
    res = jnp.transpose(out[:, 0:N_OUT, 0:E], (0, 2, 1)).reshape(Bp, N_OUT)
    return res[:B]


def gait_forward_reference(x_ncl, params):
    """Pure-JAX reference mirroring the PyTorch forward (NCL layout)."""
    (w1, b1, w2, b2, w3, b3, wfc, bfc, wout, bout) = params
    dn = ('NCH', 'OIH', 'NCH')
    hi = lax.Precision.HIGHEST

    def conv(x, w, b, stride):
        y = lax.conv_general_dilated(x, w, (stride,), 'VALID',
                                     dimension_numbers=dn, precision=hi)
        return y + b[None, :, None]

    def maxpool(x, k, s):
        init = jnp.array(-jnp.inf, dtype=x.dtype)
        return lax.reduce_window(x, init, lax.max, (1, 1, k), (1, 1, s), 'VALID')

    y = conv(x_ncl.astype(jnp.float32), w1, b1, 1)
    y = maxpool(y, 2, 2)
    y = conv(y, w2, b2, 2)
    y = maxpool(y, 3, 2)
    y = conv(y, w3, b3, 2)
    y = maxpool(y, 2, 1)
    flat = y.reshape(y.shape[0], -1)                  # (B, 960), PyTorch order
    hidden = jnp.dot(flat, wfc.T, precision=hi) + bfc
    return jnp.dot(hidden, wout.T, precision=hi) + bout


def make_params(key):
    ks = jax.random.split(key, 10)

    def init(k, shape, fan_in):
        return jax.random.normal(k, shape, jnp.float32) / np.sqrt(fan_in)

    w1 = init(ks[0], (C1, C_IN, 3), 18)
    b1 = init(ks[1], (C1,), 18)
    w2 = init(ks[2], (C2, C1, 3), 48)
    b2 = init(ks[3], (C2,), 48)
    w3 = init(ks[4], (C3, C2, 3), 48)
    b3 = init(ks[5], (C3,), 48)
    wfc = init(ks[6], (H_FC, C3 * L6), C3 * L6)
    bfc = init(ks[7], (H_FC,), C3 * L6)
    wout = init(ks[8], (N_OUT, H_FC), H_FC)
    bout = init(ks[9], (N_OUT,), H_FC)
    return (w1, b1, w2, b2, w3, b3, wfc, bfc, wout, bout)


if __name__ == "__main__":
    key = jax.random.PRNGKey(0)
    pkey, xkey = jax.random.split(key)
    params = make_params(pkey)
    # batch=12 (pads to 16 -> 2 grid steps so the "parallel" axis keeps both
    # v7x TensorCores busy), 6 channels, sequence length 514
    x = jax.random.normal(xkey, (12, C_IN, L_IN), jnp.float32)

    out = jax.block_until_ready(jax.jit(gait_forward_pallas)(x, params))

    ref = jax.block_until_ready(gait_forward_reference(x, params))
    np.testing.assert_allclose(np.asarray(out), np.asarray(ref),
                               rtol=1e-3, atol=1e-3)
    print("KERNEL_OK")
</pallas_src>

<mosaic_0001>
module attributes {stable_mosaic.version = 11 : i64} {
  func.func @_gait_kernel(%arg0: i32, %arg1: memref<1x514x48xf32, #tpu.memory_space<vmem>>, %arg2: memref<144x128xf32, #tpu.memory_space<vmem>>, %arg3: memref<1x128xf32, #tpu.memory_space<vmem>>, %arg4: memref<384x128xf32, #tpu.memory_space<vmem>>, %arg5: memref<1x128xf32, #tpu.memory_space<vmem>>, %arg6: memref<384x256xf32, #tpu.memory_space<vmem>>, %arg7: memref<1x256xf32, #tpu.memory_space<vmem>>, %arg8: memref<512x30xf32, #tpu.memory_space<vmem>>, %arg9: memref<512x256xf32, #tpu.memory_space<vmem>>, %arg10: memref<256x128xf32, #tpu.memory_space<vmem>>, %arg11: memref<16x128xf32, #tpu.memory_space<vmem>>, %arg12: memref<8x16xf32, #tpu.memory_space<vmem>>, %arg13: memref<8x128xf32, #tpu.memory_space<vmem>>, %arg14: memref<1x8x128xf32, #tpu.memory_space<vmem>>, %arg15: memref<512x128xf32, #tpu.memory_space<vmem>>, %arg16: memref<256x128xf32, #tpu.memory_space<vmem>>, %arg17: memref<128x128xf32, #tpu.memory_space<vmem>>, %arg18: memref<64x128xf32, #tpu.memory_space<vmem>>, %arg19: memref<32x256xf32, #tpu.memory_space<vmem>>, %arg20: memref<512x256xf32, #tpu.memory_space<vmem>>) attributes {dimension_semantics = [#tpu.dimension_semantics<parallel>], iteration_bounds = array<i64: 2>, scalar_prefetch = 0 : i64, scratch_operands = 6 : i64, tpu.core_type = #tpu.core_type<tc>, window_params = [{transform_indices = @transform_0, window_bounds = array<i64: 1, 514, 48>}, {pipeline_mode = #tpu.pipeline_mode<synchronous>, transform_indices = @transform_1, window_bounds = array<i64: 144, 128>}, {pipeline_mode = #tpu.pipeline_mode<synchronous>, transform_indices = @transform_2, window_bounds = array<i64: 1, 128>}, {pipeline_mode = #tpu.pipeline_mode<synchronous>, transform_indices = @transform_3, window_bounds = array<i64: 384, 128>}, {pipeline_mode = #tpu.pipeline_mode<synchronous>, transform_indices = @transform_4, window_bounds = array<i64: 1, 128>}, {pipeline_mode = #tpu.pipeline_mode<synchronous>, transform_indices = @transform_5, window_bounds = array<i64: 384, 256>}, {pipeline_mode = #tpu.pipeline_mode<synchronous>, transform_indices = @transform_6, window_bounds = array<i64: 1, 256>}, {pipeline_mode = #tpu.pipeline_mode<synchronous>, transform_indices = @transform_7, window_bounds = array<i64: 512, 30>}, {pipeline_mode = #tpu.pipeline_mode<synchronous>, transform_indices = @transform_8, window_bounds = array<i64: 512, 256>}, {pipeline_mode = #tpu.pipeline_mode<synchronous>, transform_indices = @transform_9, window_bounds = array<i64: 256, 128>}, {pipeline_mode = #tpu.pipeline_mode<synchronous>, transform_indices = @transform_10, window_bounds = array<i64: 16, 128>}, {pipeline_mode = #tpu.pipeline_mode<synchronous>, transform_indices = @transform_11, window_bounds = array<i64: 8, 16>}, {pipeline_mode = #tpu.pipeline_mode<synchronous>, transform_indices = @transform_12, window_bounds = array<i64: 8, 128>}, {transform_indices = @transform_13, window_bounds = array<i64: 1, 8, 128>}]} {
    %c0 = arith.constant 0 : index
    %c0_0 = arith.constant 0 : index
    %c0_1 = arith.constant 0 : index
    %0 = vector.load %arg1[%c0, %c0_0, %c0_1] : memref<1x514x48xf32, #tpu.memory_space<vmem>>, vector<1x512x48xf32>
    %1 = vector.shape_cast %0 : vector<1x512x48xf32> to vector<512x48xf32>
    %c0_2 = arith.constant 0 : index
    %c1 = arith.constant 1 : index
    %c0_3 = arith.constant 0 : index
    %2 = vector.load %arg1[%c0_2, %c1, %c0_3] : memref<1x514x48xf32, #tpu.memory_space<vmem>>, vector<1x512x48xf32>
    %3 = vector.shape_cast %2 : vector<1x512x48xf32> to vector<512x48xf32>
    %c0_4 = arith.constant 0 : index
    %c2 = arith.constant 2 : index
    %c0_5 = arith.constant 0 : index
    %4 = vector.load %arg1[%c0_4, %c2, %c0_5] : memref<1x514x48xf32, #tpu.memory_space<vmem>>, vector<1x512x48xf32>
    %5 = vector.shape_cast %4 : vector<1x512x48xf32> to vector<512x48xf32>
    %6 = tpu.concatenate %1, %3, %5 in 1 : vector<512x48xf32>, vector<512x48xf32>, vector<512x48xf32> -> vector<512x144xf32>
    %c0_6 = arith.constant 0 : index
    %c0_7 = arith.constant 0 : index
    %7 = vector.load %arg2[%c0_6, %c0_7] : memref<144x128xf32, #tpu.memory_space<vmem>>, vector<144x128xf32>
    %cst = arith.constant dense<0.000000e+00> : vector<512x128xf32>
    %8 = tpu.matmul %6, %7, %cst {dimension_numbers = #tpu.dot_dimension_numbers<[1], [0], [0], [1], [0, 0, 1, 1], [], []>} : vector<512x144xf32>, vector<144x128xf32>, vector<512x128xf32> -> vector<512x128xf32>
    %c0_8 = arith.constant 0 : index
    %c0_9 = arith.constant 0 : index
    %9 = vector.load %arg3[%c0_8, %c0_9] : memref<1x128xf32, #tpu.memory_space<vmem>>, vector<1x128xf32>
    %10 = vector.broadcast %9 : vector<1x128xf32> to vector<512x128xf32>
    %11 = arith.addf %8, %10 : vector<512x128xf32>
    %c0_10 = arith.constant 0 : index
    %c0_11 = arith.constant 0 : index
    %12 = vector.load %arg15[%c0_10, %c0_11] : memref<512x128xf32, #tpu.memory_space<vmem>>, vector<512x128xf32>
    tpu.vector_store %arg15[%c0_10, %c0_11], %11 {strides = array<i32>} : memref<512x128xf32, #tpu.memory_space<vmem>>, vector<512x128xf32>,
    %c0_12 = arith.constant 0 : index
    %c0_13 = arith.constant 0 : index
    %13 = tpu.strided_load %arg15[%c0_12, %c0_13] {strides = array<i32: 2, 1>} : memref<512x128xf32, #tpu.memory_space<vmem>>, vector<256x128xf32>
    %c1_14 = arith.constant 1 : index
    %c0_15 = arith.constant 0 : index
    %14 = tpu.strided_load %arg15[%c1_14, %c0_15] {strides = array<i32: 2, 1>} : memref<512x128xf32, #tpu.memory_space<vmem>>, vector<256x128xf32>
    %15 = arith.maximumf %13, %14 : vector<256x128xf32>
    %c0_16 = arith.constant 0 : index
    %c0_17 = arith.constant 0 : index
    %16 = vector.load %arg16[%c0_16, %c0_17] : memref<256x128xf32, #tpu.memory_space<vmem>>, vector<256x128xf32>
    tpu.vector_store %arg16[%c0_16, %c0_17], %15 {strides = array<i32>} : memref<256x128xf32, #tpu.memory_space<vmem>>, vector<256x128xf32>,
    %c0_18 = arith.constant 0 : index
    %c0_19 = arith.constant 0 : index
    %17 = tpu.strided_load %arg16[%c0_18, %c0_19] {strides = array<i32: 2, 1>} : memref<256x128xf32, #tpu.memory_space<vmem>>, vector<127x128xf32>
    %c1_20 = arith.constant 1 : index
    %c0_21 = arith.constant 0 : index
    %18 = tpu.strided_load %arg16[%c1_20, %c0_21] {strides = array<i32: 2, 1>} : memref<256x128xf32, #tpu.memory_space<vmem>>, vector<127x128xf32>
    %c2_22 = arith.constant 2 : index
    %c0_23 = arith.constant 0 : index
    %19 = tpu.strided_load %arg16[%c2_22, %c0_23] {strides = array<i32: 2, 1>} : memref<256x128xf32, #tpu.memory_space<vmem>>, vector<127x128xf32>
    %20 = tpu.concatenate %17, %18, %19 in 1 : vector<127x128xf32>, vector<127x128xf32>, vector<127x128xf32> -> vector<127x384xf32>
    %c0_24 = arith.constant 0 : index
    %c0_25 = arith.constant 0 : index
    %21 = vector.load %arg4[%c0_24, %c0_25] : memref<384x128xf32, #tpu.memory_space<vmem>>, vector<384x128xf32>
    %cst_26 = arith.constant dense<0.000000e+00> : vector<127x128xf32>
    %22 = tpu.matmul %20, %21, %cst_26 {dimension_numbers = #tpu.dot_dimension_numbers<[1], [0], [0], [1], [0, 0, 1, 1], [], []>} : vector<127x384xf32>, vector<384x128xf32>, vector<127x128xf32> -> vector<127x128xf32>
    %c0_27 = arith.constant 0 : index
    %c0_28 = arith.constant 0 : index
    %23 = vector.load %arg5[%c0_27, %c0_28] : memref<1x128xf32, #tpu.memory_space<vmem>>, vector<1x128xf32>
    %24 = vector.broadcast %23 : vector<1x128xf32> to vector<127x128xf32>
    %25 = arith.addf %22, %24 : vector<127x128xf32>
    %c0_29 = arith.constant 0 : index
    %c0_30 = arith.constant 0 : index
    %26 = vector.load %arg17[%c0_29, %c0_30] : memref<128x128xf32, #tpu.memory_space<vmem>>, vector<127x128xf32>
    tpu.vector_store %arg17[%c0_29, %c0_30], %25 {strides = array<i32>} : memref<128x128xf32, #tpu.memory_space<vmem>>, vector<127x128xf32>,
    %c0_31 = arith.constant 0 : index
    %c0_32 = arith.constant 0 : index
    %27 = tpu.strided_load %arg17[%c0_31, %c0_32] {strides = array<i32: 2, 1>} : memref<128x128xf32, #tpu.memory_space<vmem>>, vector<63x128xf32>
    %c1_33 = arith.constant 1 : index
    %c0_34 = arith.constant 0 : index
    %28 = tpu.strided_load %arg17[%c1_33, %c0_34] {strides = array<i32: 2, 1>} : memref<128x128xf32, #tpu.memory_space<vmem>>, vector<63x128xf32>
    %29 = arith.maximumf %27, %28 : vector<63x128xf32>
    %c2_35 = arith.constant 2 : index
    %c0_36 = arith.constant 0 : index
    %30 = tpu.strided_load %arg17[%c2_35, %c0_36] {strides = array<i32: 2, 1>} : memref<128x128xf32, #tpu.memory_space<vmem>>, vector<63x128xf32>
    %31 = arith.maximumf %29, %30 : vector<63x128xf32>
    %c0_37 = arith.constant 0 : index
    %c0_38 = arith.constant 0 : index
    %32 = vector.load %arg18[%c0_37, %c0_38] : memref<64x128xf32, #tpu.memory_space<vmem>>, vector<63x128xf32>
    tpu.vector_store %arg18[%c0_37, %c0_38], %31 {strides = array<i32>} : memref<64x128xf32, #tpu.memory_space<vmem>>, vector<63x128xf32>,
    %c0_39 = arith.constant 0 : index
    %c0_40 = arith.constant 0 : index
    %33 = tpu.strided_load %arg18[%c0_39, %c0_40] {strides = array<i32: 2, 1>} : memref<64x128xf32, #tpu.memory_space<vmem>>, vector<31x128xf32>
    %c1_41 = arith.constant 1 : index
    %c0_42 = arith.constant 0 : index
    %34 = tpu.strided_load %arg18[%c1_41, %c0_42] {strides = array<i32: 2, 1>} : memref<64x128xf32, #tpu.memory_space<vmem>>, vector<31x128xf32>
    %c2_43 = arith.constant 2 : index
    %c0_44 = arith.constant 0 : index
    %35 = tpu.strided_load %arg18[%c2_43, %c0_44] {strides = array<i32: 2, 1>} : memref<64x128xf32, #tpu.memory_space<vmem>>, vector<31x128xf32>
    %36 = tpu.concatenate %33, %34, %35 in 1 : vector<31x128xf32>, vector<31x128xf32>, vector<31x128xf32> -> vector<31x384xf32>
    %c0_45 = arith.constant 0 : index
    %c0_46 = arith.constant 0 : index
    %37 = vector.load %arg6[%c0_45, %c0_46] : memref<384x256xf32, #tpu.memory_space<vmem>>, vector<384x256xf32>
    %cst_47 = arith.constant dense<0.000000e+00> : vector<31x256xf32>
    %38 = tpu.matmul %36, %37, %cst_47 {dimension_numbers = #tpu.dot_dimension_numbers<[1], [0], [0], [1], [0, 0, 1, 1], [], []>} : vector<31x384xf32>, vector<384x256xf32>, vector<31x256xf32> -> vector<31x256xf32>
    %c0_48 = arith.constant 0 : index
    %c0_49 = arith.constant 0 : index
    %39 = vector.load %arg7[%c0_48, %c0_49] : memref<1x256xf32, #tpu.memory_space<vmem>>, vector<1x256xf32>
    %40 = vector.broadcast %39 : vector<1x256xf32> to vector<31x256xf32>
    %41 = arith.addf %38, %40 : vector<31x256xf32>
    %c0_50 = arith.constant 0 : index
    %c0_51 = arith.constant 0 : index
    %42 = vector.load %arg19[%c0_50, %c0_51] : memref<32x256xf32, #tpu.memory_space<vmem>>, vector<31x256xf32>
    tpu.vector_store %arg19[%c0_50, %c0_51], %41 {strides = array<i32>} : memref<32x256xf32, #tpu.memory_space<vmem>>, vector<31x256xf32>,
    %c0_52 = arith.constant 0 : index
    %c0_53 = arith.constant 0 : index
    %43 = vector.load %arg19[%c0_52, %c0_53] : memref<32x256xf32, #tpu.memory_space<vmem>>, vector<30x256xf32>
    %c1_54 = arith.constant 1 : index
    %c0_55 = arith.constant 0 : index
    %44 = vector.load %arg19[%c1_54, %c0_55] : memref<32x256xf32, #tpu.memory_space<vmem>>, vector<30x256xf32>
    %45 = arith.maximumf %43, %44 : vector<30x256xf32>
    %c0_56 = arith.constant 0 : index
    %c0_57 = arith.constant 0 : index
    %46 = vector.load %arg8[%c0_56, %c0_57] : memref<512x30xf32, #tpu.memory_space<vmem>>, vector<512x30xf32>
    %cst_58 = arith.constant dense<0.000000e+00> : vector<512x256xf32>
    %47 = tpu.matmul %46, %45, %cst_58 {dimension_numbers = #tpu.dot_dimension_numbers<[1], [0], [0], [1], [0, 0, 1, 1], [], []>} : vector<512x30xf32>, vector<30x256xf32>, vector<512x256xf32> -> vector<512x256xf32>
    %c0_59 = arith.constant 0 : index
    %c0_60 = arith.constant 0 : index
    %48 = vector.load %arg20[%c0_59, %c0_60] : memref<512x256xf32, #tpu.memory_space<vmem>>, vector<512x256xf32>
    tpu.vector_store %arg20[%c0_59, %c0_60], %47 {strides = array<i32>} : memref<512x256xf32, #tpu.memory_space<vmem>>, vector<512x256xf32>,
    %c0_61 = arith.constant 0 : index
    %c0_62 = arith.constant 0 : index
    %49 = vector.load %arg20[%c0_61, %c0_62] : memref<512x256xf32, #tpu.memory_space<vmem>>, vector<16x256xf32>
    %c0_63 = arith.constant 0 : index
    %c0_64 = arith.constant 0 : index
    %50 = vector.load %arg9[%c0_63, %c0_64] : memref<512x256xf32, #tpu.memory_space<vmem>>, vector<16x256xf32>
    %51 = arith.mulf %49, %50 : vector<16x256xf32>
    %c16 = arith.constant 16 : index
    %c0_65 = arith.constant 0 : index
    %52 = vector.load %arg20[%c16, %c0_65] : memref<512x256xf32, #tpu.memory_space<vmem>>, vector<16x256xf32>
    %c16_66 = arith.constant 16 : index
    %c0_67 = arith.constant 0 : index
    %53 = vector.load %arg9[%c16_66, %c0_67] : memref<512x256xf32, #tpu.memory_space<vmem>>, vector<16x256xf32>
    %54 = arith.mulf %52, %53 : vector<16x256xf32>
    %55 = arith.addf %51, %54 : vector<16x256xf32>
    %c32 = arith.constant 32 : index
    %c0_68 = arith.constant 0 : index
    %56 = vector.load %arg20[%c32, %c0_68] : memref<512x256xf32, #tpu.memory_space<vmem>>, vector<16x256xf32>
    %c32_69 = arith.constant 32 : index
    %c0_70 = arith.constant 0 : index
    %57 = vector.load %arg9[%c32_69, %c0_70] : memref<512x256xf32, #tpu.memory_space<vmem>>, vector<16x256xf32>
    %58 = arith.mulf %56, %57 : vector<16x256xf32>
    %59 = arith.addf %55, %58 : vector<16x256xf32>
    %c48 = arith.constant 48 : index
    %c0_71 = arith.constant 0 : index
    %60 = vector.load %arg20[%c48, %c0_71] : memref<512x256xf32, #tpu.memory_space<vmem>>, vector<16x256xf32>
    %c48_72 = arith.constant 48 : index
    %c0_73 = arith.constant 0 : index
    %61 = vector.load %arg9[%c48_72, %c0_73] : memref<512x256xf32, #tpu.memory_space<vmem>>, vector<16x256xf32>
    %62 = arith.mulf %60, %61 : vector<16x256xf32>
    %63 = arith.addf %59, %62 : vector<16x256xf32>
    %c64 = arith.constant 64 : index
    %c0_74 = arith.constant 0 : index
    %64 = vector.load %arg20[%c64, %c0_74] : memref<512x256xf32, #tpu.memory_space<vmem>>, vector<16x256xf32>
    %c64_75 = arith.constant 64 : index
    %c0_76 = arith.constant 0 : index
    %65 = vector.load %arg9[%c64_75, %c0_76] : memref<512x256xf32, #tpu.memory_space<vmem>>, vector<16x256xf32>
    %66 = arith.mulf %64, %65 : vector<16x256xf32>
    %67 = arith.addf %63, %66 : vector<16x256xf32>
    %c80 = arith.constant 80 : index
    %c0_77 = arith.constant 0 : index
    %68 = vector.load %arg20[%c80, %c0_77] : memref<512x256xf32, #tpu.memory_space<vmem>>, vector<16x256xf32>
    %c80_78 = arith.constant 80 : index
    %c0_79 = arith.constant 0 : index
    %69 = vector.load %arg9[%c80_78, %c0_79] : memref<512x256xf32, #tpu.memory_space<vmem>>, vector<16x256xf32>
    %70 = arith.mulf %68, %69 : vector<16x256xf32>
    %71 = arith.addf %67, %70 : vector<16x256xf32>
    %c96 = arith.constant 96 : index
    %c0_80 = arith.constant 0 : index
    %72 = vector.load %arg20[%c96, %c0_80] : memref<512x256xf32, #tpu.memory_space<vmem>>, vector<16x256xf32>
    %c96_81 = arith.constant 96 : index
    %c0_82 = arith.constant 0 : index
    %73 = vector.load %arg9[%c96_81, %c0_82] : memref<512x256xf32, #tpu.memory_space<vmem>>, vector<16x256xf32>
    %74 = arith.mulf %72, %73 : vector<16x256xf32>
    %75 = arith.addf %71, %74 : vector<16x256xf32>
    %c112 = arith.constant 112 : index
    %c0_83 = arith.constant 0 : index
    %76 = vector.load %arg20[%c112, %c0_83] : memref<512x256xf32, #tpu.memory_space<vmem>>, vector<16x256xf32>
    %c112_84 = arith.constant 112 : index
    %c0_85 = arith.constant 0 : index
    %77 = vector.load %arg9[%c112_84, %c0_85] : memref<512x256xf32, #tpu.memory_space<vmem>>, vector<16x256xf32>
    %78 = arith.mulf %76, %77 : vector<16x256xf32>
    %79 = arith.addf %75, %78 : vector<16x256xf32>
    %c128 = arith.constant 128 : index
    %c0_86 = arith.constant 0 : index
    %80 = vector.load %arg20[%c128, %c0_86] : memref<512x256xf32, #tpu.memory_space<vmem>>, vector<16x256xf32>
    %c128_87 = arith.constant 128 : index
    %c0_88 = arith.constant 0 : index
    %81 = vector.load %arg9[%c128_87, %c0_88] : memref<512x256xf32, #tpu.memory_space<vmem>>, vector<16x256xf32>
    %82 = arith.mulf %80, %81 : vector<16x256xf32>
    %83 = arith.addf %79, %82 : vector<16x256xf32>
    %c144 = arith.constant 144 : index
    %c0_89 = arith.constant 0 : index
    %84 = vector.load %arg20[%c144, %c0_89] : memref<512x256xf32, #tpu.memory_space<vmem>>, vector<16x256xf32>
    %c144_90 = arith.constant 144 : index
    %c0_91 = arith.constant 0 : index
    %85 = vector.load %arg9[%c144_90, %c0_91] : memref<512x256xf32, #tpu.memory_space<vmem>>, vector<16x256xf32>
    %86 = arith.mulf %84, %85 : vector<16x256xf32>
    %87 = arith.addf %83, %86 : vector<16x256xf32>
    %c160 = arith.constant 160 : index
    %c0_92 = arith.constant 0 : index
    %88 = vector.load %arg20[%c160, %c0_92] : memref<512x256xf32, #tpu.memory_space<vmem>>, vector<16x256xf32>
    %c160_93 = arith.constant 160 : index
    %c0_94 = arith.constant 0 : index
    %89 = vector.load %arg9[%c160_93, %c0_94] : memref<512x256xf32, #tpu.memory_space<vmem>>, vector<16x256xf32>
    %90 = arith.mulf %88, %89 : vector<16x256xf32>
    %91 = arith.addf %87, %90 : vector<16x256xf32>
    %c176 = arith.constant 176 : index
    %c0_95 = arith.constant 0 : index
    %92 = vector.load %arg20[%c176, %c0_95] : memref<512x256xf32, #tpu.memory_space<vmem>>, vector<16x256xf32>
    %c176_96 = arith.constant 176 : index
    %c0_97 = arith.constant 0 : index
    %93 = vector.load %arg9[%c176_96, %c0_97] : memref<512x256xf32, #tpu.memory_space<vmem>>, vector<16x256xf32>
    %94 = arith.mulf %92, %93 : vector<16x256xf32>
    %95 = arith.addf %91, %94 : vector<16x256xf32>
    %c192 = arith.constant 192 : index
    %c0_98 = arith.constant 0 : index
    %96 = vector.load %arg20[%c192, %c0_98] : memref<512x256xf32, #tpu.memory_space<vmem>>, vector<16x256xf32>
    %c192_99 = arith.constant 192 : index
    %c0_100 = arith.constant 0 : index
    %97 = vector.load %arg9[%c192_99, %c0_100] : memref<512x256xf32, #tpu.memory_space<vmem>>, vector<16x256xf32>
    %98 = arith.mulf %96, %97 : vector<16x256xf32>
    %99 = arith.addf %95, %98 : vector<16x256xf32>
    %c208 = arith.constant 208 : index
    %c0_101 = arith.constant 0 : index
    %100 = vector.load %arg20[%c208, %c0_101] : memref<512x256xf32, #tpu.memory_space<vmem>>, vector<16x256xf32>
    %c208_102 = arith.constant 208 : index
    %c0_103 = arith.constant 0 : index
    %101 = vector.load %arg9[%c208_102, %c0_103] : memref<512x256xf32, #tpu.memory_space<vmem>>, vector<16x256xf32>
    %102 = arith.mulf %100, %101 : vector<16x256xf32>
    %103 = arith.addf %99, %102 : vector<16x256xf32>
    %c224 = arith.constant 224 : index
    %c0_104 = arith.constant 0 : index
    %104 = vector.load %arg20[%c224, %c0_104] : memref<512x256xf32, #tpu.memory_space<vmem>>, vector<16x256xf32>
    %c224_105 = arith.constant 224 : index
    %c0_106 = arith.constant 0 : index
    %105 = vector.load %arg9[%c224_105, %c0_106] : memref<512x256xf32, #tpu.memory_space<vmem>>, vector<16x256xf32>
    %106 = arith.mulf %104, %105 : vector<16x256xf32>
    %107 = arith.addf %103, %106 : vector<16x256xf32>
    %c240 = arith.constant 240 : index
    %c0_107 = arith.constant 0 : index
    %108 = vector.load %arg20[%c240, %c0_107] : memref<512x256xf32, #tpu.memory_space<vmem>>, vector<16x256xf32>
    %c240_108 = arith.constant 240 : index
    %c0_109 = arith.constant 0 : index
    %109 = vector.load %arg9[%c240_108, %c0_109] : memref<512x256xf32, #tpu.memory_space<vmem>>, vector<16x256xf32>
    %110 = arith.mulf %108, %109 : vector<16x256xf32>
    %111 = arith.addf %107, %110 : vector<16x256xf32>
    %c256 = arith.constant 256 : index
    %c0_110 = arith.constant 0 : index
    %112 = vector.load %arg20[%c256, %c0_110] : memref<512x256xf32, #tpu.memory_space<vmem>>, vector<16x256xf32>
    %c256_111 = arith.constant 256 : index
    %c0_112 = arith.constant 0 : index
    %113 = vector.load %arg9[%c256_111, %c0_112] : memref<512x256xf32, #tpu.memory_space<vmem>>, vector<16x256xf32>
    %114 = arith.mulf %112, %113 : vector<16x256xf32>
    %115 = arith.addf %111, %114 : vector<16x256xf32>
    %c272 = arith.constant 272 : index
    %c0_113 = arith.constant 0 : index
    %116 = vector.load %arg20[%c272, %c0_113] : memref<512x256xf32, #tpu.memory_space<vmem>>, vector<16x256xf32>
    %c272_114 = arith.constant 272 : index
    %c0_115 = arith.constant 0 : index
    %117 = vector.load %arg9[%c272_114, %c0_115] : memref<512x256xf32, #tpu.memory_space<vmem>>, vector<16x256xf32>
    %118 = arith.mulf %116, %117 : vector<16x256xf32>
    %119 = arith.addf %115, %118 : vector<16x256xf32>
    %c288 = arith.constant 288 : index
    %c0_116 = arith.constant 0 : index
    %120 = vector.load %arg20[%c288, %c0_116] : memref<512x256xf32, #tpu.memory_space<vmem>>, vector<16x256xf32>
    %c288_117 = arith.constant 288 : index
    %c0_118 = arith.constant 0 : index
    %121 = vector.load %arg9[%c288_117, %c0_118] : memref<512x256xf32, #tpu.memory_space<vmem>>, vector<16x256xf32>
    %122 = arith.mulf %120, %121 : vector<16x256xf32>
    %123 = arith.addf %119, %122 : vector<16x256xf32>
    %c304 = arith.constant 304 : index
    %c0_119 = arith.constant 0 : index
    %124 = vector.load %arg20[%c304, %c0_119] : memref<512x256xf32, #tpu.memory_space<vmem>>, vector<16x256xf32>
    %c304_120 = arith.constant 304 : index
    %c0_121 = arith.constant 0 : index
    %125 = vector.load %arg9[%c304_120, %c0_121] : memref<512x256xf32, #tpu.memory_space<vmem>>, vector<16x256xf32>
    %126 = arith.mulf %124, %125 : vector<16x256xf32>
    %127 = arith.addf %123, %126 : vector<16x256xf32>
    %c320 = arith.constant 320 : index
    %c0_122 = arith.constant 0 : index
    %128 = vector.load %arg20[%c320, %c0_122] : memref<512x256xf32, #tpu.memory_space<vmem>>, vector<16x256xf32>
    %c320_123 = arith.constant 320 : index
    %c0_124 = arith.constant 0 : index
    %129 = vector.load %arg9[%c320_123, %c0_124] : memref<512x256xf32, #tpu.memory_space<vmem>>, vector<16x256xf32>
    %130 = arith.mulf %128, %129 : vector<16x256xf32>
    %131 = arith.addf %127, %130 : vector<16x256xf32>
    %c336 = arith.constant 336 : index
    %c0_125 = arith.constant 0 : index
    %132 = vector.load %arg20[%c336, %c0_125] : memref<512x256xf32, #tpu.memory_space<vmem>>, vector<16x256xf32>
    %c336_126 = arith.constant 336 : index
    %c0_127 = arith.constant 0 : index
    %133 = vector.load %arg9[%c336_126, %c0_127] : memref<512x256xf32, #tpu.memory_space<vmem>>, vector<16x256xf32>
    %134 = arith.mulf %132, %133 : vector<16x256xf32>
    %135 = arith.addf %131, %134 : vector<16x256xf32>
    %c352 = arith.constant 352 : index
    %c0_128 = arith.constant 0 : index
    %136 = vector.load %arg20[%c352, %c0_128] : memref<512x256xf32, #tpu.memory_space<vmem>>, vector<16x256xf32>
    %c352_129 = arith.constant 352 : index
    %c0_130 = arith.constant 0 : index
    %137 = vector.load %arg9[%c352_129, %c0_130] : memref<512x256xf32, #tpu.memory_space<vmem>>, vector<16x256xf32>
    %138 = arith.mulf %136, %137 : vector<16x256xf32>
    %139 = arith.addf %135, %138 : vector<16x256xf32>
    %c368 = arith.constant 368 : index
    %c0_131 = arith.constant 0 : index
    %140 = vector.load %arg20[%c368, %c0_131] : memref<512x256xf32, #tpu.memory_space<vmem>>, vector<16x256xf32>
    %c368_132 = arith.constant 368 : index
    %c0_133 = arith.constant 0 : index
    %141 = vector.load %arg9[%c368_132, %c0_133] : memref<512x256xf32, #tpu.memory_space<vmem>>, vector<16x256xf32>
    %142 = arith.mulf %140, %141 : vector<16x256xf32>
    %143 = arith.addf %139, %142 : vector<16x256xf32>
    %c384 = arith.constant 384 : index
    %c0_134 = arith.constant 0 : index
    %144 = vector.load %arg20[%c384, %c0_134] : memref<512x256xf32, #tpu.memory_space<vmem>>, vector<16x256xf32>
    %c384_135 = arith.constant 384 : index
    %c0_136 = arith.constant 0 : index
    %145 = vector.load %arg9[%c384_135, %c0_136] : memref<512x256xf32, #tpu.memory_space<vmem>>, vector<16x256xf32>
    %146 = arith.mulf %144, %145 : vector<16x256xf32>
    %147 = arith.addf %143, %146 : vector<16x256xf32>
    %c400 = arith.constant 400 : index
    %c0_137 = arith.constant 0 : index
    %148 = vector.load %arg20[%c400, %c0_137] : memref<512x256xf32, #tpu.memory_space<vmem>>, vector<16x256xf32>
    %c400_138 = arith.constant 400 : index
    %c0_139 = arith.constant 0 : index
    %149 = vector.load %arg9[%c400_138, %c0_139] : memref<512x256xf32, #tpu.memory_space<vmem>>, vector<16x256xf32>
    %150 = arith.mulf %148, %149 : vector<16x256xf32>
    %151 = arith.addf %147, %150 : vector<16x256xf32>
    %c416 = arith.constant 416 : index
    %c0_140 = arith.constant 0 : index
    %152 = vector.load %arg20[%c416, %c0_140] : memref<512x256xf32, #tpu.memory_space<vmem>>, vector<16x256xf32>
    %c416_141 = arith.constant 416 : index
    %c0_142 = arith.constant 0 : index
    %153 = vector.load %arg9[%c416_141, %c0_142] : memref<512x256xf32, #tpu.memory_space<vmem>>, vector<16x256xf32>
    %154 = arith.mulf %152, %153 : vector<16x256xf32>
    %155 = arith.addf %151, %154 : vector<16x256xf32>
    %c432 = arith.constant 432 : index
    %c0_143 = arith.constant 0 : index
    %156 = vector.load %arg20[%c432, %c0_143] : memref<512x256xf32, #tpu.memory_space<vmem>>, vector<16x256xf32>
    %c432_144 = arith.constant 432 : index
    %c0_145 = arith.constant 0 : index
    %157 = vector.load %arg9[%c432_144, %c0_145] : memref<512x256xf32, #tpu.memory_space<vmem>>, vector<16x256xf32>
    %158 = arith.mulf %156, %157 : vector<16x256xf32>
    %159 = arith.addf %155, %158 : vector<16x256xf32>
    %c448 = arith.constant 448 : index
    %c0_146 = arith.constant 0 : index
    %160 = vector.load %arg20[%c448, %c0_146] : memref<512x256xf32, #tpu.memory_space<vmem>>, vector<16x256xf32>
    %c448_147 = arith.constant 448 : index
    %c0_148 = arith.constant 0 : index
    %161 = vector.load %arg9[%c448_147, %c0_148] : memref<512x256xf32, #tpu.memory_space<vmem>>, vector<16x256xf32>
    %162 = arith.mulf %160, %161 : vector<16x256xf32>
    %163 = arith.addf %159, %162 : vector<16x256xf32>
    %c464 = arith.constant 464 : index
    %c0_149 = arith.constant 0 : index
    %164 = vector.load %arg20[%c464, %c0_149] : memref<512x256xf32, #tpu.memory_space<vmem>>, vector<16x256xf32>
    %c464_150 = arith.constant 464 : index
    %c0_151 = arith.constant 0 : index
    %165 = vector.load %arg9[%c464_150, %c0_151] : memref<512x256xf32, #tpu.memory_space<vmem>>, vector<16x256xf32>
    %166 = arith.mulf %164, %165 : vector<16x256xf32>
    %167 = arith.addf %163, %166 : vector<16x256xf32>
    %c480 = arith.constant 480 : index
    %c0_152 = arith.constant 0 : index
    %168 = vector.load %arg20[%c480, %c0_152] : memref<512x256xf32, #tpu.memory_space<vmem>>, vector<16x256xf32>
    %c480_153 = arith.constant 480 : index
    %c0_154 = arith.constant 0 : index
    %169 = vector.load %arg9[%c480_153, %c0_154] : memref<512x256xf32, #tpu.memory_space<vmem>>, vector<16x256xf32>
    %170 = arith.mulf %168, %169 : vector<16x256xf32>
    %171 = arith.addf %167, %170 : vector<16x256xf32>
    %c496 = arith.constant 496 : index
    %c0_155 = arith.constant 0 : index
    %172 = vector.load %arg20[%c496, %c0_155] : memref<512x256xf32, #tpu.memory_space<vmem>>, vector<16x256xf32>
    %c496_156 = arith.constant 496 : index
    %c0_157 = arith.constant 0 : index
    %173 = vector.load %arg9[%c496_156, %c0_157] : memref<512x256xf32, #tpu.memory_space<vmem>>, vector<16x256xf32>
    %174 = arith.mulf %172, %173 : vector<16x256xf32>
    %175 = arith.addf %171, %174 : vector<16x256xf32>
    %c0_158 = arith.constant 0 : index
    %c0_159 = arith.constant 0 : index
    %176 = vector.load %arg10[%c0_158, %c0_159] : memref<256x128xf32, #tpu.memory_space<vmem>>, vector<256x128xf32>
    %cst_160 = arith.constant dense<0.000000e+00> : vector<16x128xf32>
    %177 = tpu.matmul %175, %176, %cst_160 {dimension_numbers = #tpu.dot_dimension_numbers<[1], [0], [0], [1], [0, 0, 1, 1], [], []>} : vector<16x256xf32>, vector<256x128xf32>, vector<16x128xf32> -> vector<16x128xf32>
    %c0_161 = arith.constant 0 : index
    %c0_162 = arith.constant 0 : index
    %178 = vector.load %arg11[%c0_161, %c0_162] : memref<16x128xf32, #tpu.memory_space<vmem>>, vector<16x128xf32>
    %179 = arith.addf %177, %178 : vector<16x128xf32>
    %c0_163 = arith.constant 0 : index
    %c0_164 = arith.constant 0 : index
    %180 = vector.load %arg12[%c0_163, %c0_164] : memref<8x16xf32, #tpu.memory_space<vmem>>, vector<8x16xf32>
    %cst_165 = arith.constant dense<0.000000e+00> : vector<8x128xf32>
    %181 = tpu.matmul %180, %179, %cst_165 {dimension_numbers = #tpu.dot_dimension_numbers<[1], [0], [0], [1], [0, 0, 1, 1], [], []>} : vector<8x16xf32>, vector<16x128xf32>, vector<8x128xf32> -> vector<8x128xf32>
    %c0_166 = arith.constant 0 : index
    %c0_167 = arith.constant 0 : index
    %182 = vector.load %arg13[%c0_166, %c0_167] : memref<8x128xf32, #tpu.memory_space<vmem>>, vector<8x128xf32>
    %183 = arith.addf %181, %182 : vector<8x128xf32>
    %c0_168 = arith.constant 0 : index
    %c0_169 = arith.constant 0 : index
    %c0_170 = arith.constant 0 : index
    %184 = vector.load %arg14[%c0_168, %c0_169, %c0_170] : memref<1x8x128xf32, #tpu.memory_space<vmem>>, vector<1x8x128xf32>
    %185 = vector.shape_cast %184 : vector<1x8x128xf32> to vector<8x128xf32>
    %186 = vector.shape_cast %183 : vector<8x128xf32> to vector<1x8x128xf32>
    tpu.vector_store %arg14[%c0_168, %c0_169, %c0_170], %186 {strides = array<i32>} : memref<1x8x128xf32, #tpu.memory_space<vmem>>, vector<1x8x128xf32>,
    return
  }
  func.func @transform_0(%arg0: i32) -> (i32, i32, i32) {
    %c0_i32 = arith.constant 0 : i32
    %c0_i32_0 = arith.constant 0 : i32
    %c0_i32_1 = arith.constant 0 : i32
    return %arg0, %c0_i32, %c0_i32_0 : i32, i32, i32
  }
  func.func @transform_1(%arg0: i32) -> (i32, i32) {
    %c0_i32 = arith.constant 0 : i32
    %c0_i32_0 = arith.constant 0 : i32
    %c0_i32_1 = arith.constant 0 : i32
    return %c0_i32, %c0_i32_0 : i32, i32
  }
  func.func @transform_2(%arg0: i32) -> (i32, i32) {
    %c0_i32 = arith.constant 0 : i32
    %c0_i32_0 = arith.constant 0 : i32
    %c0_i32_1 = arith.constant 0 : i32
    return %c0_i32, %c0_i32_0 : i32, i32
  }
  func.func @transform_3(%arg0: i32) -> (i32, i32) {
    %c0_i32 = arith.constant 0 : i32
    %c0_i32_0 = arith.constant 0 : i32
    %c0_i32_1 = arith.constant 0 : i32
    return %c0_i32, %c0_i32_0 : i32, i32
  }
  func.func @transform_4(%arg0: i32) -> (i32, i32) {
    %c0_i32 = arith.constant 0 : i32
    %c0_i32_0 = arith.constant 0 : i32
    %c0_i32_1 = arith.constant 0 : i32
    return %c0_i32, %c0_i32_0 : i32, i32
  }
  func.func @transform_5(%arg0: i32) -> (i32, i32) {
    %c0_i32 = arith.constant 0 : i32
    %c0_i32_0 = arith.constant 0 : i32
    %c0_i32_1 = arith.constant 0 : i32
    return %c0_i32, %c0_i32_0 : i32, i32
  }
  func.func @transform_6(%arg0: i32) -> (i32, i32) {
    %c0_i32 = arith.constant 0 : i32
    %c0_i32_0 = arith.constant 0 : i32
    %c0_i32_1 = arith.constant 0 : i32
    return %c0_i32, %c0_i32_0 : i32, i32
  }
  func.func @transform_7(%arg0: i32) -> (i32, i32) {
    %c0_i32 = arith.constant 0 : i32
    %c0_i32_0 = arith.constant 0 : i32
    %c0_i32_1 = arith.constant 0 : i32
    return %c0_i32, %c0_i32_0 : i32, i32
  }
  func.func @transform_8(%arg0: i32) -> (i32, i32) {
    %c0_i32 = arith.constant 0 : i32
    %c0_i32_0 = arith.constant 0 : i32
    %c0_i32_1 = arith.constant 0 : i32
    return %c0_i32, %c0_i32_0 : i32, i32
  }
  func.func @transform_9(%arg0: i32) -> (i32, i32) {
    %c0_i32 = arith.constant 0 : i32
    %c0_i32_0 = arith.constant 0 : i32
    %c0_i32_1 = arith.constant 0 : i32
    return %c0_i32, %c0_i32_0 : i32, i32
  }
  func.func @transform_10(%arg0: i32) -> (i32, i32) {
    %c0_i32 = arith.constant 0 : i32
    %c0_i32_0 = arith.constant 0 : i32
    %c0_i32_1 = arith.constant 0 : i32
    return %c0_i32, %c0_i32_0 : i32, i32
  }
  func.func @transform_11(%arg0: i32) -> (i32, i32) {
    %c0_i32 = arith.constant 0 : i32
    %c0_i32_0 = arith.constant 0 : i32
    %c0_i32_1 = arith.constant 0 : i32
    return %c0_i32, %c0_i32_0 : i32, i32
  }
  func.func @transform_12(%arg0: i32) -> (i32, i32) {
    %c0_i32 = arith.constant 0 : i32
    %c0_i32_0 = arith.constant 0 : i32
    %c0_i32_1 = arith.constant 0 : i32
    return %c0_i32, %c0_i32_0 : i32, i32
  }
  func.func @transform_13(%arg0: i32) -> (i32, i32, i32) {
    %c0_i32 = arith.constant 0 : i32
    %c0_i32_0 = arith.constant 0 : i32
    %c0_i32_1 = arith.constant 0 : i32
    return %arg0, %c0_i32, %c0_i32_0 : i32, i32, i32
  }
}

</mosaic_0001>

<llo_original>
// kernel: tile.28
$region0: #{tile.28}
  #allocation0 [shape = 's32[1]{0}', space=sflag, size = 0x4, scoped, tag = 'scoped memory for tile.28']
  %s0 = inlined_call_operand.vmem [shape: f32[32], index: 0, kind: input, shape index: {}]
  %s1 = inlined_call_operand.vmem [shape: f32[8,32], index: 1, kind: output, shape index: {}]
  // Predicated region
  $region2: #{tile.28} parent=0 // pred_check
    _
  $region3: #{tile.28} parent=0 // pred_check_branch
    %3 = sbr.rel (0) target = $region5
  $region4: #{tile.28} parent=0 // pred_region
    _
  $region5: #{tile.28} parent=0 // pred_fallthru
    _
  %v4 = vld [vmem:[%s0] ss:$0 sm:$0xff]
  %5 = vst [vmem:[%s1] sm:$0xff] %v4

// kernel: tile.29
$region0: #{tile.29}
  %s0 = inlined_call_operand.vmem [shape: f32[8,32], index: 0, kind: input, shape index: {}]
  %s1 = inlined_call_operand.vmem [shape: f32[1,256], index: 1, kind: output, shape index: {}]
  $region1: #{tile.29} parent=0
    #allocation0 [shape = 'u8[8192]{0}', space=vmem, size = 0x2000, scoped, tag = 'scoped mem for output reshape']
    %s2 = smov 3
    %v3 = vld [vmem:[%s0] ss:$4 sm:%s2]
    %vm4 = vcmask 261120
    %5 = vst.msk [vmem:[#allocation0] ss:$8 sm:$0x3] %vm4, %v3
    %s6 = scalar_lea.vmem %s0, 3
    %s7 = smov 3
    %v8 = vld [vmem:[%s6] ss:$4 sm:%s7]
    %9 = vrot.lane.b32.xlu0 %v8, 96
    %v10 = vpop.permute.xlu0 %9
    %vm11 = vcmask 1048320
    %12 = vst.msk [vmem:[#allocation0] ss:$8 sm:$0x3] %vm11, %v10
    %s13 = scalar_lea.vmem %s0, 2
    %s14 = smov 3
    %v15 = vld [vmem:[%s13] ss:$4 sm:%s14]
    %16 = vrot.lane.b32.xlu0 %v15, 64
    %v17 = vpop.permute.xlu0 %16
    %vm18 = vcmask 785920
    %19 = vst.msk [vmem:[#allocation0] ss:$8 sm:$0x3] %vm18, %v17
    %s20 = scalar_lea.vmem %s0, 1
    %s21 = smov 3
    %v22 = vld [vmem:[%s20] ss:$4 sm:%s21]
    %23 = vrot.lane.b32.xlu0 %v22, 32
    %v24 = vpop.permute.xlu0 %23
    %vm25 = vcmask 523520
    %26 = vst.msk [vmem:[#allocation0] ss:$8 sm:$0x3] %vm25, %v24
    %s28 = sshllo.u32 0, 1
    %v30 = vld [vmem:[#allocation0] sm:%s28]
    %s31 = sshllo.u32 0, 1
    %32 = vst [vmem:[%s1] sm:%s31] %v30
    %s33 = scalar_lea.vmem [#allocation0], 8
    %v34 = vld [vmem:[%s33] sm:%s28]
    %s35 = sshllo.u32 0, 1
    %s36 = scalar_lea.vmem %s1, 1
    %37 = vst [vmem:[%s36] sm:%s35] %v34

// kernel: tile.18
$region0: #{tile.18}
  #allocation0 [shape = 's32[1]{0}', space=sflag, size = 0x4, scoped, tag = 'scoped memory for tile.18']
  %s0 = inlined_call_operand.vmem [shape: f32[16], index: 0, kind: input, shape index: {}]
  %s1 = inlined_call_operand.vmem [shape: f32[8,16], index: 1, kind: output, shape index: {}]
  // Predicated region
  $region2: #{tile.18} parent=0 // pred_check
    _
  $region3: #{tile.18} parent=0 // pred_check_branch
    %3 = sbr.rel (0) target = $region5
  $region4: #{tile.18} parent=0 // pred_region
    _
  $region5: #{tile.18} parent=0 // pred_fallthru
    _
  %v4 = vld [vmem:[%s0] ss:$0 sm:$0xff]
  %5 = vst [vmem:[%s1] sm:$0xff] %v4

// kernel: tile.19
$region0: #{tile.19}
  %s0 = inlined_call_operand.vmem [shape: f32[8,16], index: 0, kind: input, shape index: {}]
  %s1 = inlined_call_operand.vmem [shape: f32[1,128], index: 1, kind: output, shape index: {}]
  $region1: #{tile.19} parent=0
    #allocation0 [shape = 'u8[4096]{0}', space=vmem, size = 0x1000, scoped, tag = 'scoped mem for output reshape']
    %v2 = vld [vmem:[%s0] sm:$0x1]
    %vm3 = vcmask 130048
    %4 = vst.msk [vmem:[#allocation0] sm:$0x1] %vm3, %v2
    %s5 = scalar_lea.vmem %s0, 7
    %v6 = vld [vmem:[%s5] sm:$0x1]
    %7 = vrot.lane.b32.xlu0 %v6, 112
    %v8 = vpop.permute.xlu0 %7
    %vm9 = vcmask 1048448
    %10 = vst.msk [vmem:[#allocation0] sm:$0x1] %vm9, %v8
    %s11 = scalar_lea.vmem %s0, 6
    %v12 = vld [vmem:[%s11] sm:$0x1]
    %13 = vrot.lane.b32.xlu0 %v12, 96
    %v14 = vpop.permute.xlu0 %13
    %vm15 = vcmask 917248
    %16 = vst.msk [vmem:[#allocation0] sm:$0x1] %vm15, %v14
    %s17 = scalar_lea.vmem %s0, 5
    %v18 = vld [vmem:[%s17] sm:$0x1]
    %19 = vrot.lane.b32.xlu0 %v18, 80
    %v20 = vpop.permute.xlu0 %19
    %vm21 = vcmask 786048
    %22 = vst.msk [vmem:[#allocation0] sm:$0x1] %vm21, %v20
    %s23 = scalar_lea.vmem %s0, 4
    %v24 = vld [vmem:[%s23] sm:$0x1]
    %25 = vrot.lane.b32.xlu0 %v24, 64
    %v26 = vpop.permute.xlu0 %25
    %vm27 = vcmask 654848
    %28 = vst.msk [vmem:[#allocation0] sm:$0x1] %vm27, %v26
    %s29 = scalar_lea.vmem %s0, 3
    %v30 = vld [vmem:[%s29] sm:$0x1]
    %31 = vrot.lane.b32.xlu0 %v30, 48
    %v32 = vpop.permute.xlu0 %31
    %vm33 = vcmask 523648
    %34 = vst.msk [vmem:[#allocation0] sm:$0x1] %vm33, %v32
    %s35 = scalar_lea.vmem %s0, 2
    %v36 = vld [vmem:[%s35] sm:$0x1]
    %37 = vrot.lane.b32.xlu0 %v36, 32
    %v38 = vpop.permute.xlu0 %37
    %vm39 = vcmask 392448
    %40 = vst.msk [vmem:[#allocation0] sm:$0x1] %vm39, %v38
    %s41 = scalar_lea.vmem %s0, 1
    %v42 = vld [vmem:[%s41] sm:$0x1]
    %43 = vrot.lane.b32.xlu0 %v42, 16
    %v44 = vpop.permute.xlu0 %43
    %vm45 = vcmask 261248
    %46 = vst.msk [vmem:[#allocation0] sm:$0x1] %vm45, %v44
    %s48 = sshllo.u32 0, 1
    %v50 = vld [vmem:[#allocation0] sm:%s48]
    %s51 = sshllo.u32 0, 1
    %52 = vst [vmem:[%s1] sm:%s51] %v50

// kernel: gait_forward_pallas.1
$region0: #{gait_forward_pallas.1}
  #allocation0 [shape = 'u32[]', space=smem, size = 0x4, offset = 0x4, fixed_abs, tag = 'smem constant byte address 0x4 - core index']
  #allocation1 [shape = 'u32[144,128]{1,0:T(1,128)}', space=vmem, size = 0x12000, scoped, tag = 'internal scratch']
  #allocation2 [shape = 'f32[512,128]{1,0:T(8,128)}', space=vmem, size = 0x40000, scoped, tag = 'scratch operand']
  #allocation3 [shape = 'f32[256,128]{1,0:T(8,128)}', space=vmem, size = 0x20000, scoped, tag = 'scratch operand']
  #allocation4 [shape = 'f32[128,128]{1,0:T(8,128)}', space=vmem, size = 0x10000, scoped, tag = 'scratch operand']
  #allocation5 [shape = 'f32[64,128]{1,0:T(8,128)}', space=vmem, size = 0x8000, scoped, tag = 'scratch operand']
  #allocation6 [shape = 'f32[32,256]{1,0:T(8,128)}', space=vmem, size = 0x8000, scoped, tag = 'scratch operand']
  #allocation7 [shape = 'f32[512,256]{1,0:T(8,128)}', space=vmem, size = 0x80000, scoped, tag = 'scratch operand']
  %s0 = inlined_call_operand.vmem [shape: f32[2,514,48], index: 0, kind: input, shape index: {}]
  %s1 = inlined_call_operand.vmem [shape: f32[144,128], index: 1, kind: input, shape index: {}]
  %s2 = inlined_call_operand.vmem [shape: f32[1,128], index: 2, kind: input, shape index: {}]
  %s3 = inlined_call_operand.vmem [shape: f32[384,128], index: 3, kind: input, shape index: {}]
  %s4 = inlined_call_operand.vmem [shape: f32[1,128], index: 4, kind: input, shape index: {}]
  %s5 = inlined_call_operand.vmem [shape: f32[384,256], index: 5, kind: input, shape index: {}]
  %s6 = inlined_call_operand.vmem [shape: f32[1,256], index: 6, kind: input, shape index: {}]
  %s7 = inlined_call_operand.vmem [shape: f32[512,30], index: 7, kind: input, shape index: {}]
  %s8 = inlined_call_operand.vmem [shape: f32[512,256], index: 8, kind: input, shape index: {}]
  %s9 = inlined_call_operand.vmem [shape: f32[256,128], index: 9, kind: input, shape index: {}]
  %s10 = inlined_call_operand.vmem [shape: f32[16,128], index: 10, kind: input, shape index: {}]
  %s11 = inlined_call_operand.vmem [shape: f32[8,16], index: 11, kind: input, shape index: {}]
  %s12 = inlined_call_operand.vmem [shape: f32[8,128], index: 12, kind: input, shape index: {}]
  %s13 = inlined_call_operand.vmem [shape: f32[2,8,128], index: 13, kind: output, shape index: {}]
  %s14 = sld [smem:[#allocation0]]
  $region85: #{gait_forward_pallas.1} parent=0
    _
  %s16 = ssub.s32 1, %s14
  %s17 = scalar_select 0, %s16, %s14
  loop: start=0, step=1, limit=4
  $region2: #{gait_forward_pallas.1} parent=0 // loop_pre_header
    _
  $region3: #{gait_forward_pallas.1} parent=0 // loop_header
    %s19 = sphi 0, %s23
    %p20 = scmp.ge.s32.totalorder %s19, 4
    %s29 = sphi 0, %s31
    %s32 = sphi 0, %s29
    %s33 = sphi 0, %s32
    %s49 = sphi 0, %s33
    %s53 = sphi 0, %s53
    %s55 = sphi 0, %s53
    %s56 = sphi 0, %s55
    %s70 = sphi 0, %s56
    %s74 = sphi 0, %s74
    %s76 = sphi 0, %s74
    %s77 = sphi 0, %s76
    %s91 = sphi 0, %s77
    %s95 = sphi 0, %s95
    %s97 = sphi 0, %s95
    %s98 = sphi 0, %s97
    %s112 = sphi 0, %s98
    %s116 = sphi 0, %s116
    %s118 = sphi 0, %s116
    %s119 = sphi 0, %s118
    %s133 = sphi 0, %s119
    %s137 = sphi 0, %s137
    %s139 = sphi 0, %s137
    %s140 = sphi 0, %s139
    %s154 = sphi 0, %s140
    %s158 = sphi 0, %s158
    %s160 = sphi 0, %s158
    %s161 = sphi 0, %s160
    %s175 = sphi 0, %s161
    %s179 = sphi 0, %s179
    %s181 = sphi 0, %s179
    %s182 = sphi 0, %s181
    %s196 = sphi 0, %s182
    %s200 = sphi 0, %s200
    %s202 = sphi 0, %s200
    %s203 = sphi 0, %s202
    %s217 = sphi 0, %s203
    %s221 = sphi 0, %s221
    %s223 = sphi 0, %s221
    %s224 = sphi 0, %s223
    %s238 = sphi 0, %s224
    %s242 = sphi 0, %s242
    %s244 = sphi 0, %s242
    %s245 = sphi 0, %s244
    %s259 = sphi 0, %s245
    %s263 = sphi 0, %s263
    %s265 = sphi 0, %s263
    %s266 = sphi 0, %s265
    %s280 = sphi 0, %s266
    %s284 = sphi 0, %s284
    %s286 = sphi 0, %s284
    %s287 = sphi 0, %s286
    %s301 = sphi 0, %s287
    %s307 = sphi 0, %s309
    %s310 = sphi 0, %s307
    %s311 = sphi 0, %s310
    %s327 = sphi 0, %s311
  $region4: #{gait_forward_pallas.1} parent=0 // loop_header_branch
    %22 = sbr.rel (%p20) target = $region8
  $region5: #{gait_forward_pallas.1} parent=0 // loop_body
    %s24 = ssub.s32 %s19, 1
    %s25 = ssub.s32 %s19, 2
    %s26 = sadd.s32 %s19, 1
    %s27 = ssub.s32 %s19, %s26
    %p28 = scmp.eq.s32.totalorder %s27, 0
    %s30 = sadd.s32 %s29, 1
    %s31 = scalar_select %p28, %s29, %s30
    %p34 = pneg %p28
    %p35 = scmp.eq.s32.totalorder %s19, 1
    %p36 = por %p34, %p35
    %p37 = scmp.ne.s32.totalorder %s29, %s32
    %p38 = scmp.eq.s32.totalorder %s19, 0
    %p39 = por %p37, %p38
    %p40 = scmp.ne.s32.totalorder %s29, %s32
    %p41 = scmp.eq.s32.totalorder %s24, 1
    %p42 = por %p40, %p41
    %p43 = scmp.ne.s32.totalorder %s32, %s33
    %p44 = scmp.eq.s32.totalorder %s24, 0
    %p45 = por %p43, %p44
    %p46 = scmp.ne.s32.totalorder %s32, %s33
    %p47 = scmp.eq.s32.totalorder %s25, 1
    %p48 = por %p46, %p47
    %p50 = scmp.ne.s32.totalorder %s33, %s49
    %p51 = scmp.eq.s32.totalorder %s25, 0
    %p52 = por %p50, %p51
    %s54 = sadd.s32 %s53, 1
    %p57 = scmp.eq.s32.totalorder %s19, 1
    %p58 = scmp.ne.s32.totalorder %s53, %s55
    %p59 = scmp.eq.s32.totalorder %s19, 0
    %p60 = por %p58, %p59
    %p61 = scmp.ne.s32.totalorder %s53, %s55
    %p62 = scmp.eq.s32.totalorder %s24, 1
    %p63 = por %p61, %p62
    %p64 = scmp.ne.s32.totalorder %s55, %s56
    %p65 = scmp.eq.s32.totalorder %s24, 0
    %p66 = por %p64, %p65
    %p67 = scmp.ne.s32.totalorder %s55, %s56
    %p68 = scmp.eq.s32.totalorder %s25, 1
    %p69 = por %p67, %p68
    %p71 = scmp.ne.s32.totalorder %s56, %s70
    %p72 = scmp.eq.s32.totalorder %s25, 0
    %p73 = por %p71, %p72
    %s75 = sadd.s32 %s74, 1
    %p78 = scmp.eq.s32.totalorder %s19, 1
    %p79 = scmp.ne.s32.totalorder %s74, %s76
    %p80 = scmp.eq.s32.totalorder %s19, 0
    %p81 = por %p79, %p80
    %p82 = scmp.ne.s32.totalorder %s74, %s76
    %p83 = scmp.eq.s32.totalorder %s24, 1
    %p84 = por %p82, %p83
    %p85 = scmp.ne.s32.totalorder %s76, %s77
    %p86 = scmp.eq.s32.totalorder %s24, 0
    %p87 = por %p85, %p86
    %p88 = scmp.ne.s32.totalorder %s76, %s77
    %p89 = scmp.eq.s32.totalorder %s25, 1
    %p90 = por %p88, %p89
    %p92 = scmp.ne.s32.totalorder %s77, %s91
    %p93 = scmp.eq.s32.totalorder %s25, 0
    %p94 = por %p92, %p93
    %s96 = sadd.s32 %s95, 1
    %p99 = scmp.eq.s32.totalorder %s19, 1
    %p100 = scmp.ne.s32.totalorder %s95, %s97
    %p101 = scmp.eq.s32.totalorder %s19, 0
    %p102 = por %p100, %p101
    %p103 = scmp.ne.s32.totalorder %s95, %s97
    %p104 = scmp.eq.s32.totalorder %s24, 1
    %p105 = por %p103, %p104
    %p106 = scmp.ne.s32.totalorder %s97, %s98
    %p107 = scmp.eq.s32.totalorder %s24, 0
    %p108 = por %p106, %p107
    %p109 = scmp.ne.s32.totalorder %s97, %s98
    %p110 = scmp.eq.s32.totalorder %s25, 1
    %p111 = por %p109, %p110
    %p113 = scmp.ne.s32.totalorder %s98, %s112
    %p114 = scmp.eq.s32.totalorder %s25, 0
    %p115 = por %p113, %p114
    %s117 = sadd.s32 %s116, 1
    %p120 = scmp.eq.s32.totalorder %s19, 1
    %p121 = scmp.ne.s32.totalorder %s116, %s118
    %p122 = scmp.eq.s32.totalorder %s19, 0
    %p123 = por %p121, %p122
    %p124 = scmp.ne.s32.totalorder %s116, %s118
    %p125 = scmp.eq.s32.totalorder %s24, 1
    %p126 = por %p124, %p125
    %p127 = scmp.ne.s32.totalorder %s118, %s119
    %p128 = scmp.eq.s32.totalorder %s24, 0
    %p129 = por %p127, %p128
    %p130 = scmp.ne.s32.totalorder %s118, %s119
    %p131 = scmp.eq.s32.totalorder %s25, 1
    %p132 = por %p130, %p131
    %p134 = scmp.ne.s32.totalorder %s119, %s133
    %p135 = scmp.eq.s32.totalorder %s25, 0
    %p136 = por %p134, %p135
    %s138 = sadd.s32 %s137, 1
    %p141 = scmp.eq.s32.totalorder %s19, 1
    %p142 = scmp.ne.s32.totalorder %s137, %s139
    %p143 = scmp.eq.s32.totalorder %s19, 0
    %p144 = por %p142, %p143
    %p145 = scmp.ne.s32.totalorder %s137, %s139
    %p146 = scmp.eq.s32.totalorder %s24, 1
    %p147 = por %p145, %p146
    %p148 = scmp.ne.s32.totalorder %s139, %s140
    %p149 = scmp.eq.s32.totalorder %s24, 0
    %p150 = por %p148, %p149
    %p151 = scmp.ne.s32.totalorder %s139, %s140
    %p152 = scmp.eq.s32.totalorder %s25, 1
    %p153 = por %p151, %p152
    %p155 = scmp.ne.s32.totalorder %s140, %s154
    %p156 = scmp.eq.s32.totalorder %s25, 0
    %p157 = por %p155, %p156
    %s159 = sadd.s32 %s158, 1
    %p162 = scmp.eq.s32.totalorder %s19, 1
    %p163 = scmp.ne.s32.totalorder %s158, %s160
    %p164 = scmp.eq.s32.totalorder %s19, 0
    %p165 = por %p163, %p164
    %p166 = scmp.ne.s32.totalorder %s158, %s160
    %p167 = scmp.eq.s32.totalorder %s24, 1
    %p168 = por %p166, %p167
    %p169 = scmp.ne.s32.totalorder %s160, %s161
    %p170 = scmp.eq.s32.totalorder %s24, 0
    %p171 = por %p169, %p170
    %p172 = scmp.ne.s32.totalorder %s160, %s161
    %p173 = scmp.eq.s32.totalorder %s25, 1
    %p174 = por %p172, %p173
    %p176 = scmp.ne.s32.totalorder %s161, %s175
    %p177 = scmp.eq.s32.totalorder %s25, 0
    %p178 = por %p176, %p177
    %s180 = sadd.s32 %s179, 1
    %p183 = scmp.eq.s32.totalorder %s19, 1
    %p184 = scmp.ne.s32.totalorder %s179, %s181
    %p185 = scmp.eq.s32.totalorder %s19, 0
    %p186 = por %p184, %p185
    %p187 = scmp.ne.s32.totalorder %s179, %s181
    %p188 = scmp.eq.s32.totalorder %s24, 1
    %p189 = por %p187, %p188
    %p190 = scmp.ne.s32.totalorder %s181, %s182
    %p191 = scmp.eq.s32.totalorder %s24, 0
    %p192 = por %p190, %p191
    %p193 = scmp.ne.s32.totalorder %s181, %s182
    %p194 = scmp.eq.s32.totalorder %s25, 1
    %p195 = por %p193, %p194
    %p197 = scmp.ne.s32.totalorder %s182, %s196
    %p198 = scmp.eq.s32.totalorder %s25, 0
    %p199 = por %p197, %p198
    %s201 = sadd.s32 %s200, 1
    %p204 = scmp.eq.s32.totalorder %s19, 1
    %p205 = scmp.ne.s32.totalorder %s200, %s202
    %p206 = scmp.eq.s32.totalorder %s19, 0
    %p207 = por %p205, %p206
    %p208 = scmp.ne.s32.totalorder %s200, %s202
    %p209 = scmp.eq.s32.totalorder %s24, 1
    %p210 = por %p208, %p209
    %p211 = scmp.ne.s32.totalorder %s202, %s203
    %p212 = scmp.eq.s32.totalorder %s24, 0
    %p213 = por %p211, %p212
    %p214 = scmp.ne.s32.totalorder %s202, %s203
    %p215 = scmp.eq.s32.totalorder %s25, 1
    %p216 = por %p214, %p215
    %p218 = scmp.ne.s32.totalorder %s203, %s217
    %p219 = scmp.eq.s32.totalorder %s25, 0
    %p220 = por %p218, %p219
    %s222 = sadd.s32 %s221, 1
    %p225 = scmp.eq.s32.totalorder %s19, 1
    %p226 = scmp.ne.s32.totalorder %s221, %s223
    %p227 = scmp.eq.s32.totalorder %s19, 0
    %p228 = por %p226, %p227
    %p229 = scmp.ne.s32.totalorder %s221, %s223
    %p230 = scmp.eq.s32.totalorder %s24, 1
    %p231 = por %p229, %p230
    %p232 = scmp.ne.s32.totalorder %s223, %s224
    %p233 = scmp.eq.s32.totalorder %s24, 0
    %p234 = por %p232, %p233
    %p235 = scmp.ne.s32.totalorder %s223, %s224
    %p236 = scmp.eq.s32.totalorder %s25, 1
    %p237 = por %p235, %p236
    %p239 = scmp.ne.s32.totalorder %s224, %s238
    %p240 = scmp.eq.s32.totalorder %s25, 0
    %p241 = por %p239, %p240
    %s243 = sadd.s32 %s242, 1
    %p246 = scmp.eq.s32.totalorder %s19, 1
    %p247 = scmp.ne.s32.totalorder %s242, %s244
    %p248 = scmp.eq.s32.totalorder %s19, 0
    %p249 = por %p247, %p248
    %p250 = scmp.ne.s32.totalorder %s242, %s244
    %p251 = scmp.eq.s32.totalorder %s24, 1
    %p252 = por %p250, %p251
    %p253 = scmp.ne.s32.totalorder %s244, %s245
    %p254 = scmp.eq.s32.totalorder %s24, 0
    %p255 = por %p253, %p254
    %p256 = scmp.ne.s32.totalorder %s244, %s245
    %p257 = scmp.eq.s32.totalorder %s25, 1
    %p258 = por %p256, %p257
    %p260 = scmp.ne.s32.totalorder %s245, %s259
    %p261 = scmp.eq.s32.totalorder %s25, 0
    %p262 = por %p260, %p261
    %s264 = sadd.s32 %s263, 1
    %p267 = scmp.eq.s32.totalorder %s19, 1
    %p268 = scmp.ne.s32.totalorder %s263, %s265
    %p269 = scmp.eq.s32.totalorder %s19, 0
    %p270 = por %p268, %p269
    %p271 = scmp.ne.s32.totalorder %s263, %s265
    %p272 = scmp.eq.s32.totalorder %s24, 1
    %p273 = por %p271, %p272
    %p274 = scmp.ne.s32.totalorder %s265, %s266
    %p275 = scmp.eq.s32.totalorder %s24, 0
    %p276 = por %p274, %p275
    %p277 = scmp.ne.s32.totalorder %s265, %s266
    %p278 = scmp.eq.s32.totalorder %s25, 1
    %p279 = por %p277, %p278
    %p281 = scmp.ne.s32.totalorder %s266, %s280
    %p282 = scmp.eq.s32.totalorder %s25, 0
    %p283 = por %p281, %p282
    %s285 = sadd.s32 %s284, 1
    %p288 = scmp.eq.s32.totalorder %s19, 1
    %p289 = scmp.ne.s32.totalorder %s284, %s286
    %p290 = scmp.eq.s32.totalorder %s19, 0
    %p291 = por %p289, %p290
    %p292 = scmp.ne.s32.totalorder %s284, %s286
    %p293 = scmp.eq.s32.totalorder %s24, 1
    %p294 = por %p292, %p293
    %p295 = scmp.ne.s32.totalorder %s286, %s287
    %p296 = scmp.eq.s32.totalorder %s24, 0
    %p297 = por %p295, %p296
    %p298 = scmp.ne.s32.totalorder %s286, %s287
    %p299 = scmp.eq.s32.totalorder %s25, 1
    %p300 = por %p298, %p299
    %p302 = scmp.ne.s32.totalorder %s287, %s301
    %p303 = scmp.eq.s32.totalorder %s25, 0
    %p304 = por %p302, %p303
    %s305 = ssub.s32 %s19, %s26
    %p306 = scmp.eq.s32.totalorder %s305, 0
    %s308 = sadd.s32 %s307, 1
    %s309 = scalar_select %p306, %s307, %s308
    %p312 = pneg %p306
    %p313 = scmp.eq.s32.totalorder %s19, 1
    %p314 = por %p312, %p313
    %p315 = scmp.ne.s32.totalorder %s307, %s310
    %p316 = scmp.eq.s32.totalorder %s19, 0
    %p317 = por %p315, %p316
    %p318 = scmp.ne.s32.totalorder %s307, %s310
    %p319 = scmp.eq.s32.totalorder %s24, 1
    %p320 = por %p318, %p319
    %p321 = scmp.ne.s32.totalorder %s310, %s311
    %p322 = scmp.eq.s32.totalorder %s24, 0
    %p323 = por %p321, %p322
    %p324 = scmp.ne.s32.totalorder %s310, %s311
    %p325 = scmp.eq.s32.totalorder %s25, 1
    %p326 = por %p324, %p325
    %p328 = scmp.ne.s32.totalorder %s311, %s327
    %p329 = scmp.eq.s32.totalorder %s25, 0
    %p330 = por %p328, %p329
    %p331 = scmp.le.s32.totalorder 1, %s19
    %p332 = scmp.lt.s32.totalorder %s19, 3
    %p333 = pnand %p331, %p332
    %p334 = pneg %p333
    // Predicated region
    $region9: #{gait_forward_pallas.1} parent=5 // pred_check
      _
    $region10: #{gait_forward_pallas.1} parent=5 // pred_check_branch
      %336 = sbr.rel (%p333) target = $region12
    $region11: #{gait_forward_pallas.1} parent=5 // pred_region
      %s337 = ssub.s32 %s19, 1
      // Predicated region
      $region13: #{gait_forward_pallas.1} parent=11 // pred_check
        %p338 = pneg %p66
      $region14: #{gait_forward_pallas.1} parent=11 // pred_check_branch
        %340 = sbr.rel (%p338) target = $region16
      $region15: #{gait_forward_pallas.1} parent=11 // pred_region
        _
      $region16: #{gait_forward_pallas.1} parent=11 // pred_fallthru
        _
      // Predicated region
      $region17: #{gait_forward_pallas.1} parent=11 // pred_check
        %p341 = pneg %p87
      $region18: #{gait_forward_pallas.1} parent=11 // pred_check_branch
        %343 = sbr.rel (%p341) target = $region20
      $region19: #{gait_forward_pallas.1} parent=11 // pred_region
        _
      $region20: #{gait_forward_pallas.1} parent=11 // pred_fallthru
        _
      // Predicated region
      $region21: #{gait_forward_pallas.1} parent=11 // pred_check
        %p344 = pneg %p108
      $region22: #{gait_forward_pallas.1} parent=11 // pred_check_branch
        %346 = sbr.rel (%p344) target = $region24
      $region23: #{gait_forward_pallas.1} parent=11 // pred_region
        _
      $region24: #{gait_forward_pallas.1} parent=11 // pred_fallthru
        _
      // Predicated region
      $region25: #{gait_forward_pallas.1} parent=11 // pred_check
        %p347 = pneg %p129
      $region26: #{gait_forward_pallas.1} parent=11 // pred_check_branch
        %349 = sbr.rel (%p347) target = $region28
      $region27: #{gait_forward_pallas.1} parent=11 // pred_region
        _
      $region28: #{gait_forward_pallas.1} parent=11 // pred_fallthru
        _
      // Predicated region
      $region29: #{gait_forward_pallas.1} parent=11 // pred_check
        %p350 = pneg %p150
      $region30: #{gait_forward_pallas.1} parent=11 // pred_check_branch
        %352 = sbr.rel (%p350) target = $region32
      $region31: #{gait_forward_pallas.1} parent=11 // pred_region
        _
      $region32: #{gait_forward_pallas.1} parent=11 // pred_fallthru
        _
      // Predicated region
      $region33: #{gait_forward_pallas.1} parent=11 // pred_check
        %p353 = pneg %p171
      $region34: #{gait_forward_pallas.1} parent=11 // pred_check_branch
        %355 = sbr.rel (%p353) target = $region36
      $region35: #{gait_forward_pallas.1} parent=11 // pred_region
        _
      $region36: #{gait_forward_pallas.1} parent=11 // pred_fallthru
        _
      // Predicated region
      $region37: #{gait_forward_pallas.1} parent=11 // pred_check
        %p356 = pneg %p192
      $region38: #{gait_forward_pallas.1} parent=11 // pred_check_branch
        %358 = sbr.rel (%p356) target = $region40
      $region39: #{gait_forward_pallas.1} parent=11 // pred_region
        _
      $region40: #{gait_forward_pallas.1} parent=11 // pred_fallthru
        _
      // Predicated region
      $region41: #{gait_forward_pallas.1} parent=11 // pred_check
        %p359 = pneg %p213
      $region42: #{gait_forward_pallas.1} parent=11 // pred_check_branch
        %361 = sbr.rel (%p359) target = $region44
      $region43: #{gait_forward_pallas.1} parent=11 // pred_region
        _
      $region44: #{gait_forward_pallas.1} parent=11 // pred_fallthru
        _
      // Predicated region
      $region45: #{gait_forward_pallas.1} parent=11 // pred_check
        %p362 = pneg %p234
      $region46: #{gait_forward_pallas.1} parent=11 // pred_check_branch
        %364 = sbr.rel (%p362) target = $region48
      $region47: #{gait_forward_pallas.1} parent=11 // pred_region
        _
      $region48: #{gait_forward_pallas.1} parent=11 // pred_fallthru
        _
      // Predicated region
      $region49: #{gait_forward_pallas.1} parent=11 // pred_check
        %p365 = pneg %p255
      $region50: #{gait_forward_pallas.1} parent=11 // pred_check_branch
        %367 = sbr.rel (%p365) target = $region52
      $region51: #{gait_forward_pallas.1} parent=11 // pred_region
        _
      $region52: #{gait_forward_pallas.1} parent=11 // pred_fallthru
        _
      // Predicated region
      $region53: #{gait_forward_pallas.1} parent=11 // pred_check
        %p368 = pneg %p276
      $region54: #{gait_forward_pallas.1} parent=11 // pred_check_branch
        %370 = sbr.rel (%p368) target = $region56
      $region55: #{gait_forward_pallas.1} parent=11 // pred_region
        _
      $region56: #{gait_forward_pallas.1} parent=11 // pred_fallthru
        _
      // Predicated region
      $region57: #{gait_forward_pallas.1} parent=11 // pred_check
        %p371 = pneg %p297
      $region58: #{gait_forward_pallas.1} parent=11 // pred_check_branch
        %373 = sbr.rel (%p371) target = $region60
      $region59: #{gait_forward_pallas.1} parent=11 // pred_region
        _
      $region60: #{gait_forward_pallas.1} parent=11 // pred_fallthru
        _
    $region12: #{gait_forward_pallas.1} parent=5 // pred_fallthru
      _
    %p374 = scmp.lt.s32.totalorder %s19, 2
    // Predicated region
    $region61: #{gait_forward_pallas.1} parent=5 // pred_check
      %p375 = pneg %p374
    $region62: #{gait_forward_pallas.1} parent=5 // pred_check_branch
      %377 = sbr.rel (%p375) target = $region64
    $region63: #{gait_forward_pallas.1} parent=5 // pred_region
      // Predicated region
      $region65: #{gait_forward_pallas.1} parent=63 // pred_check
        %p378 = pneg %p39
      $region66: #{gait_forward_pallas.1} parent=63 // pred_check_branch
        %380 = sbr.rel (%p378) target = $region68
      $region67: #{gait_forward_pallas.1} parent=63 // pred_region
        %p381 = scmp.lt.s32.totalorder %s19, 1
        %s382 = scalar_select %p381, %s19, 1
        %s383 = smul.addr %s382, 65
        %s384 = smul.addr %s383, 8
        %s385 = scalar_lea.vmem %s0, %s384
      $region68: #{gait_forward_pallas.1} parent=63 // pred_fallthru
        _
    $region64: #{gait_forward_pallas.1} parent=5 // pred_fallthru
      _
    %p386 = scmp.le.s32.totalorder 1, %s19
    %p387 = scmp.lt.s32.totalorder %s19, 3
    %p388 = pnand %p386, %p387
    %p389 = pneg %p388
    // Predicated region
    $region69: #{gait_forward_pallas.1} parent=5 // pred_check
      _
    $region70: #{gait_forward_pallas.1} parent=5 // pred_check_branch
      %391 = sbr.rel (%p388) target = $region72
    $region71: #{gait_forward_pallas.1} parent=5 // pred_region
      %s392 = ssub.s32 %s19, 1
      %p393 = scmp.lt.s32.totalorder %s24, 1
      %s394 = scalar_select %p393, %s24, 1
      %s395 = smul.addr %s394, 65
      %s396 = smul.addr %s395, 8
      %s397 = scalar_lea.vmem %s0, %s396
      %p398 = pneg %p45
      %p399 = pneg %p42
      %p400 = pneg %p66
      %p401 = pneg %p63
      %p402 = pneg %p87
      %p403 = pneg %p84
      %p404 = pneg %p108
      %p405 = pneg %p105
      %p406 = pneg %p129
      %p407 = pneg %p126
      %p408 = pneg %p150
      %p409 = pneg %p147
      %p410 = pneg %p171
      %p411 = pneg %p168
      %p412 = pneg %p192
      %p413 = pneg %p189
      %p414 = pneg %p213
      %p415 = pneg %p210
      %p416 = pneg %p234
      %p417 = pneg %p231
      %p418 = pneg %p255
      %p419 = pneg %p252
      %p420 = pneg %p276
      %p421 = pneg %p273
      %p422 = pneg %p297
      %p423 = pneg %p294
      %p424 = pneg %p323
      %p425 = pneg %p320
      %p426 = scmp.lt.s32.totalorder %s24, 1
      %s427 = scalar_select %p426, %s24, 1
      %s428 = smul.addr %s427, 8
      %s429 = scalar_lea.vmem %s13, %s428
      %p430 = scmp.lt.s32.totalorder %s24, 1
      %s431 = scalar_select %p430, %s24, 1
      %s432 = smul.addr %s431, 65
      %s433 = smul.addr %s432, 8
      %s434 = scalar_lea.vmem %s0, %s433
      %p435 = scmp.lt.s32.totalorder %s24, 1
      %s436 = scalar_select %p435, %s24, 1
      %s437 = smul.addr %s436, 8
      %s438 = scalar_lea.vmem %s13, %s437
      %v439 = vld [vmem:[%s434] sm:$0xff]
      %v440 = vld [vmem:[%s434 + $0x8] sm:$0xff]
      %v441 = vld [vmem:[%s434 + $0x10] sm:$0xff]
      %v442 = vld [vmem:[%s434 + $0x18] sm:$0xff]
      %v443 = vld [vmem:[%s434 + $0x20] sm:$0xff]
      %v444 = vld [vmem:[%s434 + $0x28] sm:$0xff]
      %v445 = vld [vmem:[%s434 + $0x30] sm:$0xff]
      %v446 = vld [vmem:[%s434 + $0x38] sm:$0xff]
      %v447 = vld [vmem:[%s434 + $0x40] sm:$0xff]
      %v448 = vld [vmem:[%s434 + $0x48] sm:$0xff]
      %v449 = vld [vmem:[%s434 + $0x50] sm:$0xff]
      %v450 = vld [vmem:[%s434 + $0x58] sm:$0xff]
      %v451 = vld [vmem:[%s434 + $0x60] sm:$0xff]
      %v452 = vld [vmem:[%s434 + $0x68] sm:$0xff]
      %v453 = vld [vmem:[%s434 + $0x70] sm:$0xff]
      %v454 = vld [vmem:[%s434 + $0x78] sm:$0xff]
      %v455 = vld [vmem:[%s434 + $0x80] sm:$0xff]
      %v456 = vld [vmem:[%s434 + $0x88] sm:$0xff]
      %v457 = vld [vmem:[%s434 + $0x90] sm:$0xff]
      %v458 = vld [vmem:[%s434 + $0x98] sm:$0xff]
      %v459 = vld [vmem:[%s434 + $0xa0] sm:$0xff]
      %v460 = vld [vmem:[%s434 + $0xa8] sm:$0xff]
      %v461 = vld [vmem:[%s434 + $0xb0] sm:$0xff]
      %v462 = vld [vmem:[%s434 + $0xb8] sm:$0xff]
      %v463 = vld [vmem:[%s434 + $0xc0] sm:$0xff]
      %v464 = vld [vmem:[%s434 + $0xc8] sm:$0xff]
      %v465 = vld [vmem:[%s434 + $0xd0] sm:$0xff]
      %v466 = vld [vmem:[%s434 + $0xd8] sm:$0xff]
      %v467 = vld [vmem:[%s434 + $0xe0] sm:$0xff]
      %v468 = vld [vmem:[%s434 + $0xe8] sm:$0xff]
      %v469 = vld [vmem:[%s434 + $0xf0] sm:$0xff]
      %v470 = vld [vmem:[%s434 + $0xf8] sm:$0xff]
      %v471 = vld [vmem:[%s434 + $0x100] sm:$0xff]
      %v472 = vld [vmem:[%s434 + $0x108] sm:$0xff]
      %v473 = vld [vmem:[%s434 + $0x110] sm:$0xff]
      %v474 = vld [vmem:[%s434 + $0x118] sm:$0xff]
      %v475 = vld [vmem:[%s434 + $0x120] sm:$0xff]
      %v476 = vld [vmem:[%s434 + $0x128] sm:$0xff]
      %v477 = vld [vmem:[%s434 + $0x130] sm:$0xff]
      %v478 = vld [vmem:[%s434 + $0x138] sm:$0xff]
      %v479 = vld [vmem:[%s434 + $0x140] sm:$0xff]
      %v480 = vld [vmem:[%s434 + $0x148] sm:$0xff]
      %v481 = vld [vmem:[%s434 + $0x150] sm:$0xff]
      %v482 = vld [vmem:[%s434 + $0x158] sm:$0xff]
      %v483 = vld [vmem:[%s434 + $0x160] sm:$0xff]
      %v484 = vld [vmem:[%s434 + $0x168] sm:$0xff]
      %v485 = vld [vmem:[%s434 + $0x170] sm:$0xff]
      %v486 = vld [vmem:[%s434 + $0x178] sm:$0xff]
      %v487 = vld [vmem:[%s434 + $0x180] sm:$0xff]
      %v488 = vld [vmem:[%s434 + $0x188] sm:$0xff]
      %v489 = vld [vmem:[%s434 + $0x190] sm:$0xff]
      %v490 = vld [vmem:[%s434 + $0x198] sm:$0xff]
      %v491 = vld [vmem:[%s434 + $0x1a0] sm:$0xff]
      %v492 = vld [vmem:[%s434 + $0x1a8] sm:$0xff]
      %v493 = vld [vmem:[%s434 + $0x1b0] sm:$0xff]
      %v494 = vld [vmem:[%s434 + $0x1b8] sm:$0xff]
      %v495 = vld [vmem:[%s434 + $0x1c0] sm:$0xff]
      %v496 = vld [vmem:[%s434 + $0x1c8] sm:$0xff]
      %v497 = vld [vmem:[%s434 + $0x1d0] sm:$0xff]
      %v498 = vld [vmem:[%s434 + $0x1d8] sm:$0xff]
      %v499 = vld [vmem:[%s434 + $0x1e0] sm:$0xff]
      %v500 = vld [vmem:[%s434 + $0x1e8] sm:$0xff]
      %v501 = vld [vmem:[%s434 + $0x1f0] sm:$0xff]
      %v502 = vld [vmem:[%s434 + $0x1f8] sm:$0xff]
      %v503 = vld [vmem:[%s434 + $0x1] sm:$0xff]
      %v504 = vld [vmem:[%s434 + $0x9] sm:$0xff]
      %v505 = vld [vmem:[%s434 + $0x11] sm:$0xff]
      %v506 = vld [vmem:[%s434 + $0x19] sm:$0xff]
      %v507 = vld [vmem:[%s434 + $0x21] sm:$0xff]
      %v508 = vld [vmem:[%s434 + $0x29] sm:$0xff]
      %v509 = vld [vmem:[%s434 + $0x31] sm:$0xff]
      %v510 = vld [vmem:[%s434 + $0x39] sm:$0xff]
      %v511 = vld [vmem:[%s434 + $0x41] sm:$0xff]
      %v512 = vld [vmem:[%s434 + $0x49] sm:$0xff]
      %v513 = vld [vmem:[%s434 + $0x51] sm:$0xff]
      %v514 = vld [vmem:[%s434 + $0x59] sm:$0xff]
      %v515 = vld [vmem:[%s434 + $0x61] sm:$0xff]
      %v516 = vld [vmem:[%s434 + $0x69] sm:$0xff]
      %v517 = vld [vmem:[%s434 + $0x71] sm:$0xff]
      %v518 = vld [vmem:[%s434 + $0x79] sm:$0xff]
      %v519 = vld [vmem:[%s434 + $0x81] sm:$0xff]
      %v520 = vld [vmem:[%s434 + $0x89] sm:$0xff]
      %v521 = vld [vmem:[%s434 + $0x91] sm:$0xff]
      %v522 = vld [vmem:[%s434 + $0x99] sm:$0xff]
      %v523 = vld [vmem:[%s434 + $0xa1] sm:$0xff]
      %v524 = vld [vmem:[%s434 + $0xa9] sm:$0xff]
      %v525 = vld [vmem:[%s434 + $0xb1] sm:$0xff]
      %v526 = vld [vmem:[%s434 + $0xb9] sm:$0xff]
      %v527 = vld [vmem:[%s434 + $0xc1] sm:$0xff]
      %v528 = vld [vmem:[%s434 + $0xc9] sm:$0xff]
      %v529 = vld [vmem:[%s434 + $0xd1] sm:$0xff]
      %v530 = vld [vmem:[%s434 + $0xd9] sm:$0xff]
      %v531 = vld [vmem:[%s434 + $0xe1] sm:$0xff]
      %v532 = vld [vmem:[%s434 + $0xe9] sm:$0xff]
      %v533 = vld [vmem:[%s434 + $0xf1] sm:$0xff]
      %v534 = vld [vmem:[%s434 + $0xf9] sm:$0xff]
      %v535 = vld [vmem:[%s434 + $0x101] sm:$0xff]
      %v536 = vld [vmem:[%s434 + $0x109] sm:$0xff]
      %v537 = vld [vmem:[%s434 + $0x111] sm:$0xff]
      %v538 = vld [vmem:[%s434 + $0x119] sm:$0xff]
      %v539 = vld [vmem:[%s434 + $0x121] sm:$0xff]
      %v540 = vld [vmem:[%s434 + $0x129] sm:$0xff]
      %v541 = vld [vmem:[%s434 + $0x131] sm:$0xff]
      %v542 = vld [vmem:[%s434 + $0x139] sm:$0xff]
      %v543 = vld [vmem:[%s434 + $0x141] sm:$0xff]
      %v544 = vld [vmem:[%s434 + $0x149] sm:$0xff]
      %v545 = vld [vmem:[%s434 + $0x151] sm:$0xff]
      %v546 = vld [vmem:[%s434 + $0x159] sm:$0xff]
      %v547 = vld [vmem:[%s434 + $0x161] sm:$0xff]
      %v548 = vld [vmem:[%s434 + $0x169] sm:$0xff]
      %v549 = vld [vmem:[%s434 + $0x171] sm:$0xff]
      %v550 = vld [vmem:[%s434 + $0x179] sm:$0xff]
      %v551 = vld [vmem:[%s434 + $0x181] sm:$0xff]
      %v552 = vld [vmem:[%s434 + $0x189] sm:$0xff]
      %v553 = vld [vmem:[%s434 + $0x191] sm:$0xff]
      %v554 = vld [vmem:[%s434 + $0x199] sm:$0xff]
      %v555 = vld [vmem:[%s434 + $0x1a1] sm:$0xff]
      %v556 = vld [vmem:[%s434 + $0x1a9] sm:$0xff]
      %v557 = vld [vmem:[%s434 + $0x1b1] sm:$0xff]
      %v558 = vld [vmem:[%s434 + $0x1b9] sm:$0xff]
      %v559 = vld [vmem:[%s434 + $0x1c1] sm:$0xff]
      %v560 = vld [vmem:[%s434 + $0x1c9] sm:$0xff]
      %v561 = vld [vmem:[%s434 + $0x1d1] sm:$0xff]
      %v562 = vld [vmem:[%s434 + $0x1d9] sm:$0xff]
      %v563 = vld [vmem:[%s434 + $0x1e1] sm:$0xff]
      %v564 = vld [vmem:[%s434 + $0x1e9] sm:$0xff]
      %v565 = vld [vmem:[%s434 + $0x1f1] sm:$0xff]
      %v566 = vld [vmem:[%s434 + $0x1f9] sm:$0xff]
      %v567 = vld [vmem:[%s434 + $0x2] sm:$0xff]
      %v568 = vld [vmem:[%s434 + $0xa] sm:$0xff]
      %v569 = vld [vmem:[%s434 + $0x12] sm:$0xff]
      %v570 = vld [vmem:[%s434 + $0x1a] sm:$0xff]
      %v571 = vld [vmem:[%s434 + $0x22] sm:$0xff]
      %v572 = vld [vmem:[%s434 + $0x2a] sm:$0xff]
      %v573 = vld [vmem:[%s434 + $0x32] sm:$0xff]
      %v574 = vld [vmem:[%s434 + $0x3a] sm:$0xff]
      %v575 = vld [vmem:[%s434 + $0x42] sm:$0xff]
      %v576 = vld [vmem:[%s434 + $0x4a] sm:$0xff]
      %v577 = vld [vmem:[%s434 + $0x52] sm:$0xff]
      %v578 = vld [vmem:[%s434 + $0x5a] sm:$0xff]
      %v579 = vld [vmem:[%s434 + $0x62] sm:$0xff]
      %v580 = vld [vmem:[%s434 + $0x6a] sm:$0xff]
      %v581 = vld [vmem:[%s434 + $0x72] sm:$0xff]
      %v582 = vld [vmem:[%s434 + $0x7a] sm:$0xff]
      %v583 = vld [vmem:[%s434 + $0x82] sm:$0xff]
      %v584 = vld [vmem:[%s434 + $0x8a] sm:$0xff]
      %v585 = vld [vmem:[%s434 + $0x92] sm:$0xff]
      %v586 = vld [vmem:[%s434 + $0x9a] sm:$0xff]
      %v587 = vld [vmem:[%s434 + $0xa2] sm:$0xff]
      %v588 = vld [vmem:[%s434 + $0xaa] sm:$0xff]
      %v589 = vld [vmem:[%s434 + $0xb2] sm:$0xff]
      %v590 = vld [vmem:[%s434 + $0xba] sm:$0xff]
      %v591 = vld [vmem:[%s434 + $0xc2] sm:$0xff]
      %v592 = vld [vmem:[%s434 + $0xca] sm:$0xff]
      %v593 = vld [vmem:[%s434 + $0xd2] sm:$0xff]
      %v594 = vld [vmem:[%s434 + $0xda] sm:$0xff]
      %v595 = vld [vmem:[%s434 + $0xe2] sm:$0xff]
      %v596 = vld [vmem:[%s434 + $0xea] sm:$0xff]
      %v597 = vld [vmem:[%s434 + $0xf2] sm:$0xff]
      %v598 = vld [vmem:[%s434 + $0xfa] sm:$0xff]
      %v599 = vld [vmem:[%s434 + $0x102] sm:$0xff]
      %v600 = vld [vmem:[%s434 + $0x10a] sm:$0xff]
      %v601 = vld [vmem:[%s434 + $0x112] sm:$0xff]
      %v602 = vld [vmem:[%s434 + $0x11a] sm:$0xff]
      %v603 = vld [vmem:[%s434 + $0x122] sm:$0xff]
      %v604 = vld [vmem:[%s434 + $0x12a] sm:$0xff]
      %v605 = vld [vmem:[%s434 + $0x132] sm:$0xff]
      %v606 = vld [vmem:[%s434 + $0x13a] sm:$0xff]
      %v607 = vld [vmem:[%s434 + $0x142] sm:$0xff]
      %v608 = vld [vmem:[%s434 + $0x14a] sm:$0xff]
      %v609 = vld [vmem:[%s434 + $0x152] sm:$0xff]
      %v610 = vld [vmem:[%s434 + $0x15a] sm:$0xff]
      %v611 = vld [vmem:[%s434 + $0x162] sm:$0xff]
      %v612 = vld [vmem:[%s434 + $0x16a] sm:$0xff]
      %v613 = vld [vmem:[%s434 + $0x172] sm:$0xff]
      %v614 = vld [vmem:[%s434 + $0x17a] sm:$0xff]
      %v615 = vld [vmem:[%s434 + $0x182] sm:$0xff]
      %v616 = vld [vmem:[%s434 + $0x18a] sm:$0xff]
      %v617 = vld [vmem:[%s434 + $0x192] sm:$0xff]
      %v618 = vld [vmem:[%s434 + $0x19a] sm:$0xff]
      %v619 = vld [vmem:[%s434 + $0x1a2] sm:$0xff]
      %v620 = vld [vmem:[%s434 + $0x1aa] sm:$0xff]
      %v621 = vld [vmem:[%s434 + $0x1b2] sm:$0xff]
      %v622 = vld [vmem:[%s434 + $0x1ba] sm:$0xff]
      %v623 = vld [vmem:[%s434 + $0x1c2] sm:$0xff]
      %v624 = vld [vmem:[%s434 + $0x1ca] sm:$0xff]
      %v625 = vld [vmem:[%s434 + $0x1d2] sm:$0xff]
      %v626 = vld [vmem:[%s434 + $0x1da] sm:$0xff]
      %v627 = vld [vmem:[%s434 + $0x1e2] sm:$0xff]
      %v628 = vld [vmem:[%s434 + $0x1ea] sm:$0xff]
      %v629 = vld [vmem:[%s434 + $0x1f2] sm:$0xff]
      %v630 = vld [vmem:[%s434 + $0x1fa] sm:$0xff]
      %695 = vrot.lane.b32.xlu0 %v503, 48
      %v696 = vpop.permute.xlu0 %695
      %697 = vrot.lane.b32.xlu0 %v504, 48
      %v698 = vpop.permute.xlu0 %697
      %699 = vrot.lane.b32.xlu0 %v505, 48
      %v700 = vpop.permute.xlu0 %699
      %701 = vrot.lane.b32.xlu0 %v506, 48
      %v702 = vpop.permute.xlu0 %701
      %703 = vrot.lane.b32.xlu0 %v507, 48
      %v704 = vpop.permute.xlu0 %703
      %705 = vrot.lane.b32.xlu0 %v508, 48
      %v706 = vpop.permute.xlu0 %705
      %707 = vrot.lane.b32.xlu0 %v509, 48
      %v708 = vpop.permute.xlu0 %707
      %709 = vrot.lane.b32.xlu0 %v510, 48
      %v710 = vpop.permute.xlu0 %709
      %711 = vrot.lane.b32.xlu0 %v511, 48
      %v712 = vpop.permute.xlu0 %711
      %713 = vrot.lane.b32.xlu0 %v512, 48
      %v714 = vpop.permute.xlu0 %713
      %715 = vrot.lane.b32.xlu0 %v513, 48
      %v716 = vpop.permute.xlu0 %715
      %717 = vrot.lane.b32.xlu0 %v514, 48
      %v718 = vpop.permute.xlu0 %717
      %719 = vrot.lane.b32.xlu0 %v515, 48
      %v720 = vpop.permute.xlu0 %719
      %721 = vrot.lane.b32.xlu0 %v516, 48
      %v722 = vpop.permute.xlu0 %721
      %723 = vrot.lane.b32.xlu0 %v517, 48
      %v724 = vpop.permute.xlu0 %723
      %725 = vrot.lane.b32.xlu0 %v518, 48
      %v726 = vpop.permute.xlu0 %725
      %727 = vrot.lane.b32.xlu0 %v519, 48
      %v728 = vpop.permute.xlu0 %727
      %729 = vrot.lane.b32.xlu0 %v520, 48
      %v730 = vpop.permute.xlu0 %729
      %731 = vrot.lane.b32.xlu0 %v521, 48
      %v732 = vpop.permute.xlu0 %731
      %733 = vrot.lane.b32.xlu0 %v522, 48
      %v734 = vpop.permute.xlu0 %733
      %735 = vrot.lane.b32.xlu0 %v523, 48
      %v736 = vpop.permute.xlu0 %735
      %737 = vrot.lane.b32.xlu0 %v524, 48
      %v738 = vpop.permute.xlu0 %737
      %739 = vrot.lane.b32.xlu0 %v525, 48
      %v740 = vpop.permute.xlu0 %739
      %741 = vrot.lane.b32.xlu0 %v526, 48
      %v742 = vpop.permute.xlu0 %741
      %743 = vrot.lane.b32.xlu0 %v527, 48
      %v744 = vpop.permute.xlu0 %743
      %745 = vrot.lane.b32.xlu0 %v528, 48
      %v746 = vpop.permute.xlu0 %745
      %747 = vrot.lane.b32.xlu0 %v529, 48
      %v748 = vpop.permute.xlu0 %747
      %749 = vrot.lane.b32.xlu0 %v530, 48
      %v750 = vpop.permute.xlu0 %749
      %751 = vrot.lane.b32.xlu0 %v531, 48
      %v752 = vpop.permute.xlu0 %751
      %753 = vrot.lane.b32.xlu0 %v532, 48
      %v754 = vpop.permute.xlu0 %753
      %755 = vrot.lane.b32.xlu0 %v533, 48
      %v756 = vpop.permute.xlu0 %755
      %757 = vrot.lane.b32.xlu0 %v534, 48
      %v758 = vpop.permute.xlu0 %757
      %759 = vrot.lane.b32.xlu0 %v535, 48
      %v760 = vpop.permute.xlu0 %759
      %761 = vrot.lane.b32.xlu0 %v536, 48
      %v762 = vpop.permute.xlu0 %761
      %763 = vrot.lane.b32.xlu0 %v537, 48
      %v764 = vpop.permute.xlu0 %763
      %765 = vrot.lane.b32.xlu0 %v538, 48
      %v766 = vpop.permute.xlu0 %765
      %767 = vrot.lane.b32.xlu0 %v539, 48
      %v768 = vpop.permute.xlu0 %767
      %769 = vrot.lane.b32.xlu0 %v540, 48
      %v770 = vpop.permute.xlu0 %769
      %771 = vrot.lane.b32.xlu0 %v541, 48
      %v772 = vpop.permute.xlu0 %771
      %773 = vrot.lane.b32.xlu0 %v542, 48
      %v774 = vpop.permute.xlu0 %773
      %775 = vrot.lane.b32.xlu0 %v543, 48
      %v776 = vpop.permute.xlu0 %775
      %777 = vrot.lane.b32.xlu0 %v544, 48
      %v778 = vpop.permute.xlu0 %777
      %779 = vrot.lane.b32.xlu0 %v545, 48
      %v780 = vpop.permute.xlu0 %779
      %781 = vrot.lane.b32.xlu0 %v546, 48
      %v782 = vpop.permute.xlu0 %781
      %783 = vrot.lane.b32.xlu0 %v547, 48
      %v784 = vpop.permute.xlu0 %783
      %785 = vrot.lane.b32.xlu0 %v548, 48
      %v786 = vpop.permute.xlu0 %785
      %787 = vrot.lane.b32.xlu0 %v549, 48
      %v788 = vpop.permute.xlu0 %787
      %789 = vrot.lane.b32.xlu0 %v550, 48
      %v790 = vpop.permute.xlu0 %789
      %791 = vrot.lane.b32.xlu0 %v551, 48
      %v792 = vpop.permute.xlu0 %791
      %793 = vrot.lane.b32.xlu0 %v552, 48
      %v794 = vpop.permute.xlu0 %793
      %795 = vrot.lane.b32.xlu0 %v553, 48
      %v796 = vpop.permute.xlu0 %795
      %797 = vrot.lane.b32.xlu0 %v554, 48
      %v798 = vpop.permute.xlu0 %797
      %799 = vrot.lane.b32.xlu0 %v555, 48
      %v800 = vpop.permute.xlu0 %799
      %801 = vrot.lane.b32.xlu0 %v556, 48
      %v802 = vpop.permute.xlu0 %801
      %803 = vrot.lane.b32.xlu0 %v557, 48
      %v804 = vpop.permute.xlu0 %803
      %805 = vrot.lane.b32.xlu0 %v558, 48
      %v806 = vpop.permute.xlu0 %805
      %807 = vrot.lane.b32.xlu0 %v559, 48
      %v808 = vpop.permute.xlu0 %807
      %809 = vrot.lane.b32.xlu0 %v560, 48
      %v810 = vpop.permute.xlu0 %809
      %811 = vrot.lane.b32.xlu0 %v561, 48
      %v812 = vpop.permute.xlu0 %811
      %813 = vrot.lane.b32.xlu0 %v562, 48
      %v814 = vpop.permute.xlu0 %813
      %815 = vrot.lane.b32.xlu0 %v563, 48
      %v816 = vpop.permute.xlu0 %815
      %817 = vrot.lane.b32.xlu0 %v564, 48
      %v818 = vpop.permute.xlu0 %817
      %819 = vrot.lane.b32.xlu0 %v565, 48
      %v820 = vpop.permute.xlu0 %819
      %821 = vrot.lane.b32.xlu0 %v566, 48
      %v822 = vpop.permute.xlu0 %821
      %951 = vrot.lane.b32.xlu0 %v567, 96
      %v952 = vpop.permute.xlu0 %951
      %953 = vrot.lane.b32.xlu0 %v568, 96
      %v954 = vpop.permute.xlu0 %953
      %955 = vrot.lane.b32.xlu0 %v569, 96
      %v956 = vpop.permute.xlu0 %955
      %957 = vrot.lane.b32.xlu0 %v570, 96
      %v958 = vpop.permute.xlu0 %957
      %959 = vrot.lane.b32.xlu0 %v571, 96
      %v960 = vpop.permute.xlu0 %959
      %961 = vrot.lane.b32.xlu0 %v572, 96
      %v962 = vpop.permute.xlu0 %961
      %963 = vrot.lane.b32.xlu0 %v573, 96
      %v964 = vpop.permute.xlu0 %963
      %965 = vrot.lane.b32.xlu0 %v574, 96
      %v966 = vpop.permute.xlu0 %965
      %967 = vrot.lane.b32.xlu0 %v575, 96
      %v968 = vpop.permute.xlu0 %967
      %969 = vrot.lane.b32.xlu0 %v576, 96
      %v970 = vpop.permute.xlu0 %969
      %971 = vrot.lane.b32.xlu0 %v577, 96
      %v972 = vpop.permute.xlu0 %971
      %973 = vrot.lane.b32.xlu0 %v578, 96
      %v974 = vpop.permute.xlu0 %973
      %975 = vrot.lane.b32.xlu0 %v579, 96
      %v976 = vpop.permute.xlu0 %975
      %977 = vrot.lane.b32.xlu0 %v580, 96
      %v978 = vpop.permute.xlu0 %977
      %979 = vrot.lane.b32.xlu0 %v581, 96
      %v980 = vpop.permute.xlu0 %979
      %981 = vrot.lane.b32.xlu0 %v582, 96
      %v982 = vpop.permute.xlu0 %981
      %983 = vrot.lane.b32.xlu0 %v583, 96
      %v984 = vpop.permute.xlu0 %983
      %985 = vrot.lane.b32.xlu0 %v584, 96
      %v986 = vpop.permute.xlu0 %985
      %987 = vrot.lane.b32.xlu0 %v585, 96
      %v988 = vpop.permute.xlu0 %987
      %989 = vrot.lane.b32.xlu0 %v586, 96
      %v990 = vpop.permute.xlu0 %989
      %991 = vrot.lane.b32.xlu0 %v587, 96
      %v992 = vpop.permute.xlu0 %991
      %993 = vrot.lane.b32.xlu0 %v588, 96
      %v994 = vpop.permute.xlu0 %993
      %995 = vrot.lane.b32.xlu0 %v589, 96
      %v996 = vpop.permute.xlu0 %995
      %997 = vrot.lane.b32.xlu0 %v590, 96
      %v998 = vpop.permute.xlu0 %997
      %999 = vrot.lane.b32.xlu0 %v591, 96
      %v1000 = vpop.permute.xlu0 %999
      %1001 = vrot.lane.b32.xlu0 %v592, 96
      %v1002 = vpop.permute.xlu0 %1001
      %1003 = vrot.lane.b32.xlu0 %v593, 96
      %v1004 = vpop.permute.xlu0 %1003
      %1005 = vrot.lane.b32.xlu0 %v594, 96
      %v1006 = vpop.permute.xlu0 %1005
      %1007 = vrot.lane.b32.xlu0 %v595, 96
      %v1008 = vpop.permute.xlu0 %1007
      %1009 = vrot.lane.b32.xlu0 %v596, 96
      %v1010 = vpop.permute.xlu0 %1009
      %1011 = vrot.lane.b32.xlu0 %v597, 96
      %v1012 = vpop.permute.xlu0 %1011
      %1013 = vrot.lane.b32.xlu0 %v598, 96
      %v1014 = vpop.permute.xlu0 %1013
      %1015 = vrot.lane.b32.xlu0 %v599, 96
      %v1016 = vpop.permute.xlu0 %1015
      %1017 = vrot.lane.b32.xlu0 %v600, 96
      %v1018 = vpop.permute.xlu0 %1017
      %1019 = vrot.lane.b32.xlu0 %v601, 96
      %v1020 = vpop.permute.xlu0 %1019
      %1021 = vrot.lane.b32.xlu0 %v602, 96
      %v1022 = vpop.permute.xlu0 %1021
      %1023 = vrot.lane.b32.xlu0 %v603, 96
      %v1024 = vpop.permute.xlu0 %1023
      %1025 = vrot.lane.b32.xlu0 %v604, 96
      %v1026 = vpop.permute.xlu0 %1025
      %1027 = vrot.lane.b32.xlu0 %v605, 96
      %v1028 = vpop.permute.xlu0 %1027
      %1029 = vrot.lane.b32.xlu0 %v606, 96
      %v1030 = vpop.permute.xlu0 %1029
      %1031 = vrot.lane.b32.xlu0 %v607, 96
      %v1032 = vpop.permute.xlu0 %1031
      %1033 = vrot.lane.b32.xlu0 %v608, 96
      %v1034 = vpop.permute.xlu0 %1033
      %1035 = vrot.lane.b32.xlu0 %v609, 96
      %v1036 = vpop.permute.xlu0 %1035
      %1037 = vrot.lane.b32.xlu0 %v610, 96
      %v1038 = vpop.permute.xlu0 %1037
      %1039 = vrot.lane.b32.xlu0 %v611, 96
      %v1040 = vpop.permute.xlu0 %1039
      %1041 = vrot.lane.b32.xlu0 %v612, 96
      %v1042 = vpop.permute.xlu0 %1041
      %1043 = vrot.lane.b32.xlu0 %v613, 96
      %v1044 = vpop.permute.xlu0 %1043
      %1045 = vrot.lane.b32.xlu0 %v614, 96
      %v1046 = vpop.permute.xlu0 %1045
      %1047 = vrot.lane.b32.xlu0 %v615, 96
      %v1048 = vpop.permute.xlu0 %1047
      %1049 = vrot.lane.b32.xlu0 %v616, 96
      %v1050 = vpop.permute.xlu0 %1049
      %1051 = vrot.lane.b32.xlu0 %v617, 96
      %v1052 = vpop.permute.xlu0 %1051
      %1053 = vrot.lane.b32.xlu0 %v618, 96
      %v1054 = vpop.permute.xlu0 %1053
      %1055 = vrot.lane.b32.xlu0 %v619, 96
      %v1056 = vpop.permute.xlu0 %1055
      %1057 = vrot.lane.b32.xlu0 %v620, 96
      %v1058 = vpop.permute.xlu0 %1057
      %1059 = vrot.lane.b32.xlu0 %v621, 96
      %v1060 = vpop.permute.xlu0 %1059
      %1061 = vrot.lane.b32.xlu0 %v622, 96
      %v1062 = vpop.permute.xlu0 %1061
      %1063 = vrot.lane.b32.xlu0 %v623, 96
      %v1064 = vpop.permute.xlu0 %1063
      %1065 = vrot.lane.b32.xlu0 %v624, 96
      %v1066 = vpop.permute.xlu0 %1065
      %1067 = vrot.lane.b32.xlu0 %v625, 96
      %v1068 = vpop.permute.xlu0 %1067
      %1069 = vrot.lane.b32.xlu0 %v626, 96
      %v1070 = vpop.permute.xlu0 %1069
      %1071 = vrot.lane.b32.xlu0 %v627, 96
      %v1072 = vpop.permute.xlu0 %1071
      %1073 = vrot.lane.b32.xlu0 %v628, 96
      %v1074 = vpop.permute.xlu0 %1073
      %1075 = vrot.lane.b32.xlu0 %v629, 96
      %v1076 = vpop.permute.xlu0 %1075
      %1077 = vrot.lane.b32.xlu0 %v630, 96
      %v1078 = vpop.permute.xlu0 %1077
      %vm1143 = vcmask 392192
      %v1144 = vsel %vm1143, %v439, %v696
      %v1145 = vsel %vm1143, %v440, %v698
      %v1146 = vsel %vm1143, %v441, %v700
      %v1147 = vsel %vm1143, %v442, %v702
      %v1148 = vsel %vm1143, %v443, %v704
      %v1149 = vsel %vm1143, %v444, %v706
      %v1150 = vsel %vm1143, %v445, %v708
      %v1151 = vsel %vm1143, %v446, %v710
      %v1152 = vsel %vm1143, %v447, %v712
      %v1153 = vsel %vm1143, %v448, %v714
      %v1154 = vsel %vm1143, %v449, %v716
      %v1155 = vsel %vm1143, %v450, %v718
      %v1156 = vsel %vm1143, %v451, %v720
      %v1157 = vsel %vm1143, %v452, %v722
      %v1158 = vsel %vm1143, %v453, %v724
      %v1159 = vsel %vm1143, %v454, %v726
      %v1160 = vsel %vm1143, %v455, %v728
      %v1161 = vsel %vm1143, %v456, %v730
      %v1162 = vsel %vm1143, %v457, %v732
      %v1163 = vsel %vm1143, %v458, %v734
      %v1164 = vsel %vm1143, %v459, %v736
      %v1165 = vsel %vm1143, %v460, %v738
      %v1166 = vsel %vm1143, %v461, %v740
      %v1167 = vsel %vm1143, %v462, %v742
      %v1168 = vsel %vm1143, %v463, %v744
      %v1169 = vsel %vm1143, %v464, %v746
      %v1170 = vsel %vm1143, %v465, %v748
      %v1171 = vsel %vm1143, %v466, %v750
      %v1172 = vsel %vm1143, %v467, %v752
      %v1173 = vsel %vm1143, %v468, %v754
      %v1174 = vsel %vm1143, %v469, %v756
      %v1175 = vsel %vm1143, %v470, %v758
      %v1176 = vsel %vm1143, %v471, %v760
      %v1177 = vsel %vm1143, %v472, %v762
      %v1178 = vsel %vm1143, %v473, %v764
      %v1179 = vsel %vm1143, %v474, %v766
      %v1180 = vsel %vm1143, %v475, %v768
      %v1181 = vsel %vm1143, %v476, %v770
      %v1182 = vsel %vm1143, %v477, %v772
      %v1183 = vsel %vm1143, %v478, %v774
      %v1184 = vsel %vm1143, %v479, %v776
      %v1185 = vsel %vm1143, %v480, %v778
      %v1186 = vsel %vm1143, %v481, %v780
      %v1187 = vsel %vm1143, %v482, %v782
      %v1188 = vsel %vm1143, %v483, %v784
      %v1189 = vsel %vm1143, %v484, %v786
      %v1190 = vsel %vm1143, %v485, %v788
      %v1191 = vsel %vm1143, %v486, %v790
      %v1192 = vsel %vm1143, %v487, %v792
      %v1193 = vsel %vm1143, %v488, %v794
      %v1194 = vsel %vm1143, %v489, %v796
      %v1195 = vsel %vm1143, %v490, %v798
      %v1196 = vsel %vm1143, %v491, %v800
      %v1197 = vsel %vm1143, %v492, %v802
      %v1198 = vsel %vm1143, %v493, %v804
      %v1199 = vsel %vm1143, %v494, %v806
      %v1200 = vsel %vm1143, %v495, %v808
      %v1201 = vsel %vm1143, %v496, %v810
      %v1202 = vsel %vm1143, %v497, %v812
      %v1203 = vsel %vm1143, %v498, %v814
      %v1204 = vsel %vm1143, %v499, %v816
      %v1205 = vsel %vm1143, %v500, %v818
      %v1206 = vsel %vm1143, %v501, %v820
      %v1207 = vsel %vm1143, %v502, %v822
      %vm1208 = vcmask 785408
      %v1209 = vsel %vm1208, %v1144, %v952
      %v1210 = vsel %vm1208, %v1145, %v954
      %v1211 = vsel %vm1208, %v1146, %v956
      %v1212 = vsel %vm1208, %v1147, %v958
      %v1213 = vsel %vm1208, %v1148, %v960
      %v1214 = vsel %vm1208, %v1149, %v962
      %v1215 = vsel %vm1208, %v1150, %v964
      %v1216 = vsel %vm1208, %v1151, %v966
      %v1217 = vsel %vm1208, %v1152, %v968
      %v1218 = vsel %vm1208, %v1153, %v970
      %v1219 = vsel %vm1208, %v1154, %v972
      %v1220 = vsel %vm1208, %v1155, %v974
      %v1221 = vsel %vm1208, %v1156, %v976
      %v1222 = vsel %vm1208, %v1157, %v978
      %v1223 = vsel %vm1208, %v1158, %v980
      %v1224 = vsel %vm1208, %v1159, %v982
      %v1225 = vsel %vm1208, %v1160, %v984
      %v1226 = vsel %vm1208, %v1161, %v986
      %v1227 = vsel %vm1208, %v1162, %v988
      %v1228 = vsel %vm1208, %v1163, %v990
      %v1229 = vsel %vm1208, %v1164, %v992
      %v1230 = vsel %vm1208, %v1165, %v994
      %v1231 = vsel %vm1208, %v1166, %v996
      %v1232 = vsel %vm1208, %v1167, %v998
      %v1233 = vsel %vm1208, %v1168, %v1000
      %v1234 = vsel %vm1208, %v1169, %v1002
      %v1235 = vsel %vm1208, %v1170, %v1004
      %v1236 = vsel %vm1208, %v1171, %v1006
      %v1237 = vsel %vm1208, %v1172, %v1008
      %v1238 = vsel %vm1208, %v1173, %v1010
      %v1239 = vsel %vm1208, %v1174, %v1012
      %v1240 = vsel %vm1208, %v1175, %v1014
      %v1241 = vsel %vm1208, %v1176, %v1016
      %v1242 = vsel %vm1208, %v1177, %v1018
      %v1243 = vsel %vm1208, %v1178, %v1020
      %v1244 = vsel %vm1208, %v1179, %v1022
      %v1245 = vsel %vm1208, %v1180, %v1024
      %v1246 = vsel %vm1208, %v1181, %v1026
      %v1247 = vsel %vm1208, %v1182, %v1028
      %v1248 = vsel %vm1208, %v1183, %v1030
      %v1249 = vsel %vm1208, %v1184, %v1032
      %v1250 = vsel %vm1208, %v1185, %v1034
      %v1251 = vsel %vm1208, %v1186, %v1036
      %v1252 = vsel %vm1208, %v1187, %v1038
      %v1253 = vsel %vm1208, %v1188, %v1040
      %v1254 = vsel %vm1208, %v1189, %v1042
      %v1255 = vsel %vm1208, %v1190, %v1044
      %v1256 = vsel %vm1208, %v1191, %v1046
      %v1257 = vsel %vm1208, %v1192, %v1048
      %v1258 = vsel %vm1208, %v1193, %v1050
      %v1259 = vsel %vm1208, %v1194, %v1052
      %v1260 = vsel %vm1208, %v1195, %v1054
      %v1261 = vsel %vm1208, %v1196, %v1056
      %v1262 = vsel %vm1208, %v1197, %v1058
      %v1263 = vsel %vm1208, %v1198, %v1060
      %v1264 = vsel %vm1208, %v1199, %v1062
      %v1265 = vsel %vm1208, %v1200, %v1064
      %v1266 = vsel %vm1208, %v1201, %v1066
      %v1267 = vsel %vm1208, %v1202, %v1068
      %v1268 = vsel %vm1208, %v1203, %v1070
      %v1269 = vsel %vm1208, %v1204, %v1072
      %v1270 = vsel %vm1208, %v1205, %v1074
      %v1271 = vsel %vm1208, %v1206, %v1076
      %v1272 = vsel %vm1208, %v1207, %v1078
      %v1273 = vld [vmem:[%s1] sm:$0xff]
      %v1274 = vld [vmem:[%s1 + $0x8] sm:$0xff]
      %v1275 = vld [vmem:[%s1 + $0x10] sm:$0xff]
      %v1276 = vld [vmem:[%s1 + $0x18] sm:$0xff]
      %v1277 = vld [vmem:[%s1 + $0x20] sm:$0xff]
      %v1278 = vld [vmem:[%s1 + $0x28] sm:$0xff]
      %v1279 = vld [vmem:[%s1 + $0x30] sm:$0xff]
      %v1280 = vld [vmem:[%s1 + $0x38] sm:$0xff]
      %v1281 = vld [vmem:[%s1 + $0x40] sm:$0xff]
      %v1282 = vld [vmem:[%s1 + $0x48] sm:$0xff]
      %v1283 = vld [vmem:[%s1 + $0x50] sm:$0xff]
      %v1284 = vld [vmem:[%s1 + $0x58] sm:$0xff]
      %v1285 = vld [vmem:[%s1 + $0x60] sm:$0xff]
      %v1286 = vld [vmem:[%s1 + $0x68] sm:$0xff]
      %v1287 = vld [vmem:[%s1 + $0x70] sm:$0xff]
      %v1288 = vld [vmem:[%s1 + $0x78] sm:$0xff]
      %v1289 = vld [vmem:[%s1 + $0x80] sm:$0xff]
      %v1290 = vld [vmem:[%s1 + $0x88] sm:$0xff]
      %v1291 = vld [vmem:[%s2] sm:$0x1]
      %v1293 = vlaneseq
      %v1294 = vshrl.u32 %v1293, 7
      %v1295 = vsub.s32 0, %v1294
      %v1296 = vrot.slane %v1291, %v1295
      %vm1298 = vcmask 130048
      %v1299 = vsel %vm1298, %v952, 0
      %v1301 = vsel %vm1298, %v954, 0
      %v1303 = vsel %vm1298, %v956, 0
      %v1305 = vsel %vm1298, %v958, 0
      %v1307 = vsel %vm1298, %v960, 0
      %v1309 = vsel %vm1298, %v962, 0
      %v1311 = vsel %vm1298, %v964, 0
      %v1313 = vsel %vm1298, %v966, 0
      %v1315 = vsel %vm1298, %v968, 0
      %v1317 = vsel %vm1298, %v970, 0
      %v1319 = vsel %vm1298, %v972, 0
      %v1321 = vsel %vm1298, %v974, 0
      %v1323 = vsel %vm1298, %v976, 0
      %v1325 = vsel %vm1298, %v978, 0
      %v1327 = vsel %vm1298, %v980, 0
      %v1329 = vsel %vm1298, %v982, 0
      %v1331 = vsel %vm1298, %v984, 0
      %v1333 = vsel %vm1298, %v986, 0
      %v1335 = vsel %vm1298, %v988, 0
      %v1337 = vsel %vm1298, %v990, 0
      %v1339 = vsel %vm1298, %v992, 0
      %v1341 = vsel %vm1298, %v994, 0
      %v1343 = vsel %vm1298, %v996, 0
      %v1345 = vsel %vm1298, %v998, 0
      %v1347 = vsel %vm1298, %v1000, 0
      %v1349 = vsel %vm1298, %v1002, 0
      %v1351 = vsel %vm1298, %v1004, 0
      %v1353 = vsel %vm1298, %v1006, 0
      %v1355 = vsel %vm1298, %v1008, 0
      %v1357 = vsel %vm1298, %v1010, 0
      %v1359 = vsel %vm1298, %v1012, 0
      %v1361 = vsel %vm1298, %v1014, 0
      %v1363 = vsel %vm1298, %v1016, 0
      %v1365 = vsel %vm1298, %v1018, 0
      %v1367 = vsel %vm1298, %v1020, 0
      %v1369 = vsel %vm1298, %v1022, 0
      %v1371 = vsel %vm1298, %v1024, 0
      %v1373 = vsel %vm1298, %v1026, 0
      %v1375 = vsel %vm1298, %v1028, 0
      %v1377 = vsel %vm1298, %v1030, 0
      %v1379 = vsel %vm1298, %v1032, 0
      %v1381 = vsel %vm1298, %v1034, 0
      %v1383 = vsel %vm1298, %v1036, 0
      %v1385 = vsel %vm1298, %v1038, 0
      %v1387 = vsel %vm1298, %v1040, 0
      %v1389 = vsel %vm1298, %v1042, 0
      %v1391 = vsel %vm1298, %v1044, 0
      %v1393 = vsel %vm1298, %v1046, 0
      %v1395 = vsel %vm1298, %v1048, 0
      %v1397 = vsel %vm1298, %v1050, 0
      %v1399 = vsel %vm1298, %v1052, 0
      %v1401 = vsel %vm1298, %v1054, 0
      %v1403 = vsel %vm1298, %v1056, 0
      %v1405 = vsel %vm1298, %v1058, 0
      %v1407 = vsel %vm1298, %v1060, 0
      %v1409 = vsel %vm1298, %v1062, 0
      %v1411 = vsel %vm1298, %v1064, 0
      %v1413 = vsel %vm1298, %v1066, 0
      %v1415 = vsel %vm1298, %v1068, 0
      %v1417 = vsel %vm1298, %v1070, 0
      %v1419 = vsel %vm1298, %v1072, 0
      %v1421 = vsel %vm1298, %v1074, 0
      %v1423 = vsel %vm1298, %v1076, 0
      %v1425 = vsel %vm1298, %v1078, 0
      %1427 = vmatprep.subr.mxu0 0.0
      %1428 = vmatpush1.msra.mxu0 %v1273
      %1429 = vmatprep.subr.mxu0 0.0
      %1430 = vmatpush1.msra.mxu0 %v1274
      %1431 = vmatprep.subr.mxu0 0.0
      %1432 = vmatpush1.msra.mxu0 %v1275
      %1433 = vmatprep.subr.mxu0 0.0
      %1434 = vmatpush1.msra.mxu0 %v1276
      %1435 = vmatprep.subr.mxu0 0.0
      %1436 = vmatpush1.msra.mxu0 %v1277
      %1437 = vmatprep.subr.mxu0 0.0
      %1438 = vmatpush1.msra.mxu0 %v1278
      %1439 = vmatprep.subr.mxu0 0.0
      %1440 = vmatpush1.msra.mxu0 %v1279
      %1441 = vmatprep.subr.mxu0 0.0
      %1442 = vmatpush1.msra.mxu0 %v1280
      %1443 = vmatprep.subr.mxu0 0.0
      %1444 = vmatpush1.msra.mxu0 %v1281
      %1445 = vmatprep.subr.mxu0 0.0
      %1446 = vmatpush1.msra.mxu0 %v1282
      %1447 = vmatprep.subr.mxu0 0.0
      %1448 = vmatpush1.msra.mxu0 %v1283
      %1449 = vmatprep.subr.mxu0 0.0
      %1450 = vmatpush1.msra.mxu0 %v1284
      %1451 = vmatprep.subr.mxu0 0.0
      %1452 = vmatpush1.msra.mxu0 %v1285
      %1453 = vmatprep.subr.mxu0 0.0
      %1454 = vmatpush1.msra.mxu0 %v1286
      %1455 = vmatprep.subr.mxu0 0.0
      %1456 = vmatpush1.msra.mxu0 %v1287
      %1457 = vmatprep.subr.mxu0 0.0
      %1458 = vmatpush1.msra.mxu0 %v1288
      %1459 = vmatprep.subr.mxu0 0.0
      %1460 = vmatpush1.msra.mxu0 %v1289
      %1461 = vmatprep.subr.mxu0 0.0
      %1462 = vmatpush1.msra.mxu0 %v1290
      %1463 = vmatprep.subr.mxu0 0.0
      %1464 = vmatpush1.msra.mxu0 0.0
      %1465 = vmatprep.subr.mxu0 0.0
      %1466 = vmatpush1.msra.mxu0 0.0
      %1467 = vmatprep.subr.mxu0 0.0
      %1468 = vmatpush1.msra.mxu0 0.0
      %1469 = vmatprep.subr.mxu0 0.0
      %1470 = vmatpush1.msra.mxu0 0.0
      %1471 = vmatprep.subr.mxu0 0.0
      %1472 = vmatpush1.msra.mxu0 0.0
      %1473 = vmatprep.subr.mxu0 0.0
      %1474 = vmatpush1.msra.mxu0 0.0
      %1475 = vmatprep.subr.mxu0 0.0
      %1476 = vmatpush1.msra.mxu0 0.0
      %1477 = vmatprep.subr.mxu0 0.0
      %1478 = vmatpush1.msra.mxu0 0.0
      %1479 = vmatprep.subr.mxu0 0.0
      %1480 = vmatpush1.msra.mxu0 0.0
      %1481 = vmatprep.subr.mxu0 0.0
      %1482 = vmatpush1.msra.mxu0 0.0
      %1483 = vmatprep.subr.mxu0 0.0
      %1484 = vmatpush1.msra.mxu0 0.0
      %1485 = vmatprep.subr.mxu0 0.0
      %1486 = vmatpush1.msra.mxu0 0.0
      %1487 = vmatprep.subr.mxu0 0.0
      %1488 = vmatpush1.msra.mxu0 0.0
      %1489 = vmatprep.subr.mxu0 0.0
      %1490 = vmatpush1.msra.mxu0 0.0
      %1491 = vmatprep.mubr.f32.mxu0 %v1299
      %1492 = vmatmul.mubr.f32.gmra.mrb[0].mxu0 %v1209
      %v1493 = vpop.f32.mrb[0].mxu0
      %v1494 = vadd.f32 %v1296, %v1493
      %v1495 = vpop.f32.mrb[0].mxu0
      %1496 = vmatprep.mubr.f32.mxu0 %v1301
      %1497 = vmatmul.mubr.f32.gmra.mrb[0].mxu0 %v1210
      %v1498 = vpop.f32.mrb[0].mxu0
      %v1499 = vadd.f32 %v1296, %v1498
      %v1500 = vpop.f32.mrb[0].mxu0
      %1501 = vmatprep.mubr.f32.mxu0 %v1303
      %1502 = vmatmul.mubr.f32.gmra.mrb[0].mxu0 %v1211
      %v1503 = vpop.f32.mrb[0].mxu0
      %v1504 = vadd.f32 %v1296, %v1503
      %v1505 = vpop.f32.mrb[0].mxu0
      %1506 = vmatprep.mubr.f32.mxu0 %v1305
      %1507 = vmatmul.mubr.f32.gmra.mrb[0].mxu0 %v1212
      %v1508 = vpop.f32.mrb[0].mxu0
      %v1509 = vadd.f32 %v1296, %v1508
      %v1510 = vpop.f32.mrb[0].mxu0
      %1511 = vmatprep.mubr.f32.mxu0 %v1307
      %1512 = vmatmul.mubr.f32.gmra.mrb[0].mxu0 %v1213
      %v1513 = vpop.f32.mrb[0].mxu0
      %v1514 = vadd.f32 %v1296, %v1513
      %v1515 = vpop.f32.mrb[0].mxu0
      %1516 = vmatprep.mubr.f32.mxu0 %v1309
      %1517 = vmatmul.mubr.f32.gmra.mrb[0].mxu0 %v1214
      %v1518 = vpop.f32.mrb[0].mxu0
      %v1519 = vadd.f32 %v1296, %v1518
      %v1520 = vpop.f32.mrb[0].mxu0
      %1521 = vmatprep.mubr.f32.mxu0 %v1311
      %1522 = vmatmul.mubr.f32.gmra.mrb[0].mxu0 %v1215
      %v1523 = vpop.f32.mrb[0].mxu0
      %v1524 = vadd.f32 %v1296, %v1523
      %v1525 = vpop.f32.mrb[0].mxu0
      %1526 = vmatprep.mubr.f32.mxu0 %v1313
      %1527 = vmatmul.mubr.f32.gmra.mrb[0].mxu0 %v1216
      %v1528 = vpop.f32.mrb[0].mxu0
      %v1529 = vadd.f32 %v1296, %v1528
      %v1530 = vpop.f32.mrb[0].mxu0
      %1531 = vmatprep.mubr.f32.mxu0 %v1315
      %1532 = vmatmul.mubr.f32.gmra.mrb[0].mxu0 %v1217
      %v1533 = vpop.f32.mrb[0].mxu0
      %v1534 = vadd.f32 %v1296, %v1533
      %v1535 = vpop.f32.mrb[0].mxu0
      %1536 = vmatprep.mubr.f32.mxu0 %v1317
      %1537 = vmatmul.mubr.f32.gmra.mrb[0].mxu0 %v1218
      %v1538 = vpop.f32.mrb[0].mxu0
      %v1539 = vadd.f32 %v1296, %v1538
      %v1540 = vpop.f32.mrb[0].mxu0
      %1541 = vmatprep.mubr.f32.mxu0 %v1319
      %1542 = vmatmul.mubr.f32.gmra.mrb[0].mxu0 %v1219
      %v1543 = vpop.f32.mrb[0].mxu0
      %v1544 = vadd.f32 %v1296, %v1543
      %v1545 = vpop.f32.mrb[0].mxu0
      %1546 = vmatprep.mubr.f32.mxu0 %v1321
      %1547 = vmatmul.mubr.f32.gmra.mrb[0].mxu0 %v1220
      %v1548 = vpop.f32.mrb[0].mxu0
      %v1549 = vadd.f32 %v1296, %v1548
      %v1550 = vpop.f32.mrb[0].mxu0
      %1551 = vmatprep.mubr.f32.mxu0 %v1323
      %1552 = vmatmul.mubr.f32.gmra.mrb[0].mxu0 %v1221
      %v1553 = vpop.f32.mrb[0].mxu0
      %v1554 = vadd.f32 %v1296, %v1553
      %v1555 = vpop.f32.mrb[0].mxu0
      %1556 = vmatprep.mubr.f32.mxu0 %v1325
      %1557 = vmatmul.mubr.f32.gmra.mrb[0].mxu0 %v1222
      %v1558 = vpop.f32.mrb[0].mxu0
      %v1559 = vadd.f32 %v1296, %v1558
      %v1560 = vpop.f32.mrb[0].mxu0
      %1561 = vmatprep.mubr.f32.mxu0 %v1327
      %1562 = vmatmul.mubr.f32.gmra.mrb[0].mxu0 %v1223
      %v1563 = vpop.f32.mrb[0].mxu0
      %v1564 = vadd.f32 %v1296, %v1563
      %v1565 = vpop.f32.mrb[0].mxu0
      %1566 = vmatprep.mubr.f32.mxu0 %v1329
      %1567 = vmatmul.mubr.f32.gmra.mrb[0].mxu0 %v1224
      %v1568 = vpop.f32.mrb[0].mxu0
      %v1569 = vadd.f32 %v1296, %v1568
      %v1570 = vpop.f32.mrb[0].mxu0
      %1571 = vmatprep.mubr.f32.mxu0 %v1331
      %1572 = vmatmul.mubr.f32.gmra.mrb[0].mxu0 %v1225
      %v1573 = vpop.f32.mrb[0].mxu0
      %v1574 = vadd.f32 %v1296, %v1573
      %v1575 = vpop.f32.mrb[0].mxu0
      %1576 = vmatprep.mubr.f32.mxu0 %v1333
      %1577 = vmatmul.mubr.f32.gmra.mrb[0].mxu0 %v1226
      %v1578 = vpop.f32.mrb[0].mxu0
      %v1579 = vadd.f32 %v1296, %v1578
      %v1580 = vpop.f32.mrb[0].mxu0
      %1581 = vmatprep.mubr.f32.mxu0 %v1335
      %1582 = vmatmul.mubr.f32.gmra.mrb[0].mxu0 %v1227
      %v1583 = vpop.f32.mrb[0].mxu0
      %v1584 = vadd.f32 %v1296, %v1583
      %v1585 = vpop.f32.mrb[0].mxu0
      %1586 = vmatprep.mubr.f32.mxu0 %v1337
      %1587 = vmatmul.mubr.f32.gmra.mrb[0].mxu0 %v1228
      %v1588 = vpop.f32.mrb[0].mxu0
      %v1589 = vadd.f32 %v1296, %v1588
      %v1590 = vpop.f32.mrb[0].mxu0
      %1591 = vmatprep.mubr.f32.mxu0 %v1339
      %1592 = vmatmul.mubr.f32.gmra.mrb[0].mxu0 %v1229
      %v1593 = vpop.f32.mrb[0].mxu0
      %v1594 = vadd.f32 %v1296, %v1593
      %v1595 = vpop.f32.mrb[0].mxu0
      %1596 = vmatprep.mubr.f32.mxu0 %v1341
      %1597 = vmatmul.mubr.f32.gmra.mrb[0].mxu0 %v1230
      %v1598 = vpop.f32.mrb[0].mxu0
      %v1599 = vadd.f32 %v1296, %v1598
      %v1600 = vpop.f32.mrb[0].mxu0
      %1601 = vmatprep.mubr.f32.mxu0 %v1343
      %1602 = vmatmul.mubr.f32.gmra.mrb[0].mxu0 %v1231
      %v1603 = vpop.f32.mrb[0].mxu0
      %v1604 = vadd.f32 %v1296, %v1603
      %v1605 = vpop.f32.mrb[0].mxu0
      %1606 = vmatprep.mubr.f32.mxu0 %v1345
      %1607 = vmatmul.mubr.f32.gmra.mrb[0].mxu0 %v1232
      %v1608 = vpop.f32.mrb[0].mxu0
      %v1609 = vadd.f32 %v1296, %v1608
      %v1610 = vpop.f32.mrb[0].mxu0
      %1611 = vmatprep.mubr.f32.mxu0 %v1347
      %1612 = vmatmul.mubr.f32.gmra.mrb[0].mxu0 %v1233
      %v1613 = vpop.f32.mrb[0].mxu0
      %v1614 = vadd.f32 %v1296, %v1613
      %v1615 = vpop.f32.mrb[0].mxu0
      %1616 = vmatprep.mubr.f32.mxu0 %v1349
      %1617 = vmatmul.mubr.f32.gmra.mrb[0].mxu0 %v1234
      %v1618 = vpop.f32.mrb[0].mxu0
      %v1619 = vadd.f32 %v1296, %v1618
      %v1620 = vpop.f32.mrb[0].mxu0
      %1621 = vmatprep.mubr.f32.mxu0 %v1351
      %1622 = vmatmul.mubr.f32.gmra.mrb[0].mxu0 %v1235
      %v1623 = vpop.f32.mrb[0].mxu0
      %v1624 = vadd.f32 %v1296, %v1623
      %v1625 = vpop.f32.mrb[0].mxu0
      %1626 = vmatprep.mubr.f32.mxu0 %v1353
      %1627 = vmatmul.mubr.f32.gmra.mrb[0].mxu0 %v1236
      %v1628 = vpop.f32.mrb[0].mxu0
      %v1629 = vadd.f32 %v1296, %v1628
      %v1630 = vpop.f32.mrb[0].mxu0
      %1631 = vmatprep.mubr.f32.mxu0 %v1355
      %1632 = vmatmul.mubr.f32.gmra.mrb[0].mxu0 %v1237
      %v1633 = vpop.f32.mrb[0].mxu0
      %v1634 = vadd.f32 %v1296, %v1633
      %v1635 = vpop.f32.mrb[0].mxu0
      %1636 = vmatprep.mubr.f32.mxu0 %v1357
      %1637 = vmatmul.mubr.f32.gmra.mrb[0].mxu0 %v1238
      %v1638 = vpop.f32.mrb[0].mxu0
      %v1639 = vadd.f32 %v1296, %v1638
      %v1640 = vpop.f32.mrb[0].mxu0
      %1641 = vmatprep.mubr.f32.mxu0 %v1359
      %1642 = vmatmul.mubr.f32.gmra.mrb[0].mxu0 %v1239
      %v1643 = vpop.f32.mrb[0].mxu0
      %v1644 = vadd.f32 %v1296, %v1643
      %v1645 = vpop.f32.mrb[0].mxu0
      %1646 = vmatprep.mubr.f32.mxu0 %v1361
      %1647 = vmatmul.mubr.f32.gmra.mrb[0].mxu0 %v1240
      %v1648 = vpop.f32.mrb[0].mxu0
      %v1649 = vadd.f32 %v1296, %v1648
      %v1650 = vpop.f32.mrb[0].mxu0
      %1651 = vmatprep.mubr.f32.mxu0 %v1363
      %1652 = vmatmul.mubr.f32.gmra.mrb[0].mxu0 %v1241
      %v1653 = vpop.f32.mrb[0].mxu0
      %v1654 = vadd.f32 %v1296, %v1653
      %v1655 = vpop.f32.mrb[0].mxu0
      %1656 = vmatprep.mubr.f32.mxu0 %v1365
      %1657 = vmatmul.mubr.f32.gmra.mrb[0].mxu0 %v1242
      %v1658 = vpop.f32.mrb[0].mxu0
      %v1659 = vadd.f32 %v1296, %v1658
      %v1660 = vpop.f32.mrb[0].mxu0
      %1661 = vmatprep.mubr.f32.mxu0 %v1367
      %1662 = vmatmul.mubr.f32.gmra.mrb[0].mxu0 %v1243
      %v1663 = vpop.f32.mrb[0].mxu0
      %v1664 = vadd.f32 %v1296, %v1663
      %v1665 = vpop.f32.mrb[0].mxu0
      %1666 = vmatprep.mubr.f32.mxu0 %v1369
      %1667 = vmatmul.mubr.f32.gmra.mrb[0].mxu0 %v1244
      %v1668 = vpop.f32.mrb[0].mxu0
      %v1669 = vadd.f32 %v1296, %v1668
      %v1670 = vpop.f32.mrb[0].mxu0
      %1671 = vmatprep.mubr.f32.mxu0 %v1371
      %1672 = vmatmul.mubr.f32.gmra.mrb[0].mxu0 %v1245
      %v1673 = vpop.f32.mrb[0].mxu0
      %v1674 = vadd.f32 %v1296, %v1673
      %v1675 = vpop.f32.mrb[0].mxu0
      %1676 = vmatprep.mubr.f32.mxu0 %v1373
      %1677 = vmatmul.mubr.f32.gmra.mrb[0].mxu0 %v1246
      %v1678 = vpop.f32.mrb[0].mxu0
      %v1679 = vadd.f32 %v1296, %v1678
      %v1680 = vpop.f32.mrb[0].mxu0
      %1681 = vmatprep.mubr.f32.mxu0 %v1375
      %1682 = vmatmul.mubr.f32.gmra.mrb[0].mxu0 %v1247
      %v1683 = vpop.f32.mrb[0].mxu0
      %v1684 = vadd.f32 %v1296, %v1683
      %v1685 = vpop.f32.mrb[0].mxu0
      %1686 = vmatprep.mubr.f32.mxu0 %v1377
      %1687 = vmatmul.mubr.f32.gmra.mrb[0].mxu0 %v1248
      %v1688 = vpop.f32.mrb[0].mxu0
      %v1689 = vadd.f32 %v1296, %v1688
      %v1690 = vpop.f32.mrb[0].mxu0
      %1691 = vmatprep.mubr.f32.mxu0 %v1379
      %1692 = vmatmul.mubr.f32.gmra.mrb[0].mxu0 %v1249
      %v1693 = vpop.f32.mrb[0].mxu0
      %v1694 = vadd.f32 %v1296, %v1693
      %v1695 = vpop.f32.mrb[0].mxu0
      %1696 = vmatprep.mubr.f32.mxu0 %v1381
      %1697 = vmatmul.mubr.f32.gmra.mrb[0].mxu0 %v1250
      %v1698 = vpop.f32.mrb[0].mxu0
      %v1699 = vadd.f32 %v1296, %v1698
      %v1700 = vpop.f32.mrb[0].mxu0
      %1701 = vmatprep.mubr.f32.mxu0 %v1383
      %1702 = vmatmul.mubr.f32.gmra.mrb[0].mxu0 %v1251
      %v1703 = vpop.f32.mrb[0].mxu0
      %v1704 = vadd.f32 %v1296, %v1703
      %v1705 = vpop.f32.mrb[0].mxu0
      %1706 = vmatprep.mubr.f32.mxu0 %v1385
      %1707 = vmatmul.mubr.f32.gmra.mrb[0].mxu0 %v1252
      %v1708 = vpop.f32.mrb[0].mxu0
      %v1709 = vadd.f32 %v1296, %v1708
      %v1710 = vpop.f32.mrb[0].mxu0
      %1711 = vmatprep.mubr.f32.mxu0 %v1387
      %1712 = vmatmul.mubr.f32.gmra.mrb[0].mxu0 %v1253
      %v1713 = vpop.f32.mrb[0].mxu0
      %v1714 = vadd.f32 %v1296, %v1713
      %v1715 = vpop.f32.mrb[0].mxu0
      %1716 = vmatprep.mubr.f32.mxu0 %v1389
      %1717 = vmatmul.mubr.f32.gmra.mrb[0].mxu0 %v1254
      %v1718 = vpop.f32.mrb[0].mxu0
      %v1719 = vadd.f32 %v1296, %v1718
      %v1720 = vpop.f32.mrb[0].mxu0
      %1721 = vmatprep.mubr.f32.mxu0 %v1391
      %1722 = vmatmul.mubr.f32.gmra.mrb[0].mxu0 %v1255
      %v1723 = vpop.f32.mrb[0].mxu0
      %v1724 = vadd.f32 %v1296, %v1723
      %v1725 = vpop.f32.mrb[0].mxu0
      %1726 = vmatprep.mubr.f32.mxu0 %v1393
      %1727 = vmatmul.mubr.f32.gmra.mrb[0].mxu0 %v1256
      %v1728 = vpop.f32.mrb[0].mxu0
      %v1729 = vadd.f32 %v1296, %v1728
      %v1730 = vpop.f32.mrb[0].mxu0
      %1731 = vmatprep.mubr.f32.mxu0 %v1395
      %1732 = vmatmul.mubr.f32.gmra.mrb[0].mxu0 %v1257
      %v1733 = vpop.f32.mrb[0].mxu0
      %v1734 = vadd.f32 %v1296, %v1733
      %v1735 = vpop.f32.mrb[0].mxu0
      %1736 = vmatprep.mubr.f32.mxu0 %v1397
      %1737 = vmatmul.mubr.f32.gmra.mrb[0].mxu0 %v1258
      %v1738 = vpop.f32.mrb[0].mxu0
      %v1739 = vadd.f32 %v1296, %v1738
      %v1740 = vpop.f32.mrb[0].mxu0
      %1741 = vmatprep.mubr.f32.mxu0 %v1399
      %1742 = vmatmul.mubr.f32.gmra.mrb[0].mxu0 %v1259
      %v1743 = vpop.f32.mrb[0].mxu0
      %v1744 = vadd.f32 %v1296, %v1743
      %v1745 = vpop.f32.mrb[0].mxu0
      %1746 = vmatprep.mubr.f32.mxu0 %v1401
      %1747 = vmatmul.mubr.f32.gmra.mrb[0].mxu0 %v1260
      %v1748 = vpop.f32.mrb[0].mxu0
      %v1749 = vadd.f32 %v1296, %v1748
      %v1750 = vpop.f32.mrb[0].mxu0
      %1751 = vmatprep.mubr.f32.mxu0 %v1403
      %1752 = vmatmul.mubr.f32.gmra.mrb[0].mxu0 %v1261
      %v1753 = vpop.f32.mrb[0].mxu0
      %v1754 = vadd.f32 %v1296, %v1753
      %v1755 = vpop.f32.mrb[0].mxu0
      %1756 = vmatprep.mubr.f32.mxu0 %v1405
      %1757 = vmatmul.mubr.f32.gmra.mrb[0].mxu0 %v1262
      %v1758 = vpop.f32.mrb[0].mxu0
      %v1759 = vadd.f32 %v1296, %v1758
      %v1760 = vpop.f32.mrb[0].mxu0
      %1761 = vmatprep.mubr.f32.mxu0 %v1407
      %1762 = vmatmul.mubr.f32.gmra.mrb[0].mxu0 %v1263
      %v1763 = vpop.f32.mrb[0].mxu0
      %v1764 = vadd.f32 %v1296, %v1763
      %v1765 = vpop.f32.mrb[0].mxu0
      %1766 = vmatprep.mubr.f32.mxu0 %v1409
      %1767 = vmatmul.mubr.f32.gmra.mrb[0].mxu0 %v1264
      %v1768 = vpop.f32.mrb[0].mxu0
      %v1769 = vadd.f32 %v1296, %v1768
      %v1770 = vpop.f32.mrb[0].mxu0
      %1771 = vmatprep.mubr.f32.mxu0 %v1411
      %1772 = vmatmul.mubr.f32.gmra.mrb[0].mxu0 %v1265
      %v1773 = vpop.f32.mrb[0].mxu0
      %v1774 = vadd.f32 %v1296, %v1773
      %v1775 = vpop.f32.mrb[0].mxu0
      %1776 = vmatprep.mubr.f32.mxu0 %v1413
      %1777 = vmatmul.mubr.f32.gmra.mrb[0].mxu0 %v1266
      %v1778 = vpop.f32.mrb[0].mxu0
      %v1779 = vadd.f32 %v1296, %v1778
      %v1780 = vpop.f32.mrb[0].mxu0
      %1781 = vmatprep.mubr.f32.mxu0 %v1415
      %1782 = vmatmul.mubr.f32.gmra.mrb[0].mxu0 %v1267
      %v1783 = vpop.f32.mrb[0].mxu0
      %v1784 = vadd.f32 %v1296, %v1783
      %v1785 = vpop.f32.mrb[0].mxu0
      %1786 = vmatprep.mubr.f32.mxu0 %v1417
      %1787 = vmatmul.mubr.f32.gmra.mrb[0].mxu0 %v1268
      %v1788 = vpop.f32.mrb[0].mxu0
      %v1789 = vadd.f32 %v1296, %v1788
      %v1790 = vpop.f32.mrb[0].mxu0
      %1791 = vmatprep.mubr.f32.mxu0 %v1419
      %1792 = vmatmul.mubr.f32.gmra.mrb[0].mxu0 %v1269
      %v1793 = vpop.f32.mrb[0].mxu0
      %v1794 = vadd.f32 %v1296, %v1793
      %v1795 = vpop.f32.mrb[0].mxu0
      %1796 = vmatprep.mubr.f32.mxu0 %v1421
      %1797 = vmatmul.mubr.f32.gmra.mrb[0].mxu0 %v1270
      %v1798 = vpop.f32.mrb[0].mxu0
      %v1799 = vadd.f32 %v1296, %v1798
      %v1800 = vpop.f32.mrb[0].mxu0
      %1801 = vmatprep.mubr.f32.mxu0 %v1423
      %1802 = vmatmul.mubr.f32.gmra.mrb[0].mxu0 %v1271
      %v1803 = vpop.f32.mrb[0].mxu0
      %v1804 = vadd.f32 %v1296, %v1803
      %v1805 = vpop.f32.mrb[0].mxu0
      %1806 = vmatprep.mubr.f32.mxu0 %v1425
      %1807 = vmatmul.mubr.f32.gmra.mrb[0].mxu0 %v1272
      %v1808 = vpop.f32.mrb[0].mxu0
      %v1809 = vadd.f32 %v1296, %v1808
      %v1810 = vpop.f32.mrb[0].mxu0
      %1811 = vdwg.mxu0
      %1812 = vst [vmem:[#allocation2] sm:$0xff] %v1494
      %1813 = vst [vmem:[#allocation2 + $0x8] sm:$0xff] %v1499
      %1814 = vst [vmem:[#allocation2 + $0x10] sm:$0xff] %v1504
      %1815 = vst [vmem:[#allocation2 + $0x18] sm:$0xff] %v1509
      %1816 = vst [vmem:[#allocation2 + $0x20] sm:$0xff] %v1514
      %1817 = vst [vmem:[#allocation2 + $0x28] sm:$0xff] %v1519
      %1818 = vst [vmem:[#allocation2 + $0x30] sm:$0xff] %v1524
      %1819 = vst [vmem:[#allocation2 + $0x38] sm:$0xff] %v1529
      %1820 = vst [vmem:[#allocation2 + $0x40] sm:$0xff] %v1534
      %1821 = vst [vmem:[#allocation2 + $0x48] sm:$0xff] %v1539
      %1822 = vst [vmem:[#allocation2 + $0x50] sm:$0xff] %v1544
      %1823 = vst [vmem:[#allocation2 + $0x58] sm:$0xff] %v1549
      %1824 = vst [vmem:[#allocation2 + $0x60] sm:$0xff] %v1554
      %1825 = vst [vmem:[#allocation2 + $0x68] sm:$0xff] %v1559
      %1826 = vst [vmem:[#allocation2 + $0x70] sm:$0xff] %v1564
      %1827 = vst [vmem:[#allocation2 + $0x78] sm:$0xff] %v1569
      %1828 = vst [vmem:[#allocation2 + $0x80] sm:$0xff] %v1574
      %1829 = vst [vmem:[#allocation2 + $0x88] sm:$0xff] %v1579
      %1830 = vst [vmem:[#allocation2 + $0x90] sm:$0xff] %v1584
      %1831 = vst [vmem:[#allocation2 + $0x98] sm:$0xff] %v1589
      %1832 = vst [vmem:[#allocation2 + $0xa0] sm:$0xff] %v1594
      %1833 = vst [vmem:[#allocation2 + $0xa8] sm:$0xff] %v1599
      %1834 = vst [vmem:[#allocation2 + $0xb0] sm:$0xff] %v1604
      %1835 = vst [vmem:[#allocation2 + $0xb8] sm:$0xff] %v1609
      %1836 = vst [vmem:[#allocation2 + $0xc0] sm:$0xff] %v1614
      %1837 = vst [vmem:[#allocation2 + $0xc8] sm:$0xff] %v1619
      %1838 = vst [vmem:[#allocation2 + $0xd0] sm:$0xff] %v1624
      %1839 = vst [vmem:[#allocation2 + $0xd8] sm:$0xff] %v1629
      %1840 = vst [vmem:[#allocation2 + $0xe0] sm:$0xff] %v1634
      %1841 = vst [vmem:[#allocation2 + $0xe8] sm:$0xff] %v1639
      %1842 = vst [vmem:[#allocation2 + $0xf0] sm:$0xff] %v1644
      %1843 = vst [vmem:[#allocation2 + $0xf8] sm:$0xff] %v1649
      %1844 = vst [vmem:[#allocation2 + $0x100] sm:$0xff] %v1654
      %1845 = vst [vmem:[#allocation2 + $0x108] sm:$0xff] %v1659
      %1846 = vst [vmem:[#allocation2 + $0x110] sm:$0xff] %v1664
      %1847 = vst [vmem:[#allocation2 + $0x118] sm:$0xff] %v1669
      %1848 = vst [vmem:[#allocation2 + $0x120] sm:$0xff] %v1674
      %1849 = vst [vmem:[#allocation2 + $0x128] sm:$0xff] %v1679
      %1850 = vst [vmem:[#allocation2 + $0x130] sm:$0xff] %v1684
      %1851 = vst [vmem:[#allocation2 + $0x138] sm:$0xff] %v1689
      %1852 = vst [vmem:[#allocation2 + $0x140] sm:$0xff] %v1694
      %1853 = vst [vmem:[#allocation2 + $0x148] sm:$0xff] %v1699
      %1854 = vst [vmem:[#allocation2 + $0x150] sm:$0xff] %v1704
      %1855 = vst [vmem:[#allocation2 + $0x158] sm:$0xff] %v1709
      %1856 = vst [vmem:[#allocation2 + $0x160] sm:$0xff] %v1714
      %1857 = vst [vmem:[#allocation2 + $0x168] sm:$0xff] %v1719
      %1858 = vst [vmem:[#allocation2 + $0x170] sm:$0xff] %v1724
      %1859 = vst [vmem:[#allocation2 + $0x178] sm:$0xff] %v1729
      %1860 = vst [vmem:[#allocation2 + $0x180] sm:$0xff] %v1734
      %1861 = vst [vmem:[#allocation2 + $0x188] sm:$0xff] %v1739
      %1862 = vst [vmem:[#allocation2 + $0x190] sm:$0xff] %v1744
      %1863 = vst [vmem:[#allocation2 + $0x198] sm:$0xff] %v1749
      %1864 = vst [vmem:[#allocation2 + $0x1a0] sm:$0xff] %v1754
      %1865 = vst [vmem:[#allocation2 + $0x1a8] sm:$0xff] %v1759
      %1866 = vst [vmem:[#allocation2 + $0x1b0] sm:$0xff] %v1764
      %1867 = vst [vmem:[#allocation2 + $0x1b8] sm:$0xff] %v1769
      %1868 = vst [vmem:[#allocation2 + $0x1c0] sm:$0xff] %v1774
      %1869 = vst [vmem:[#allocation2 + $0x1c8] sm:$0xff] %v1779
      %1870 = vst [vmem:[#allocation2 + $0x1d0] sm:$0xff] %v1784
      %1871 = vst [vmem:[#allocation2 + $0x1d8] sm:$0xff] %v1789
      %1872 = vst [vmem:[#allocation2 + $0x1e0] sm:$0xff] %v1794
      %1873 = vst [vmem:[#allocation2 + $0x1e8] sm:$0xff] %v1799
      %1874 = vst [vmem:[#allocation2 + $0x1f0] sm:$0xff] %v1804
      %1875 = vst [vmem:[#allocation2 + $0x1f8] sm:$0xff] %v1809
      %v1876 = vld [vmem:[#allocation2] ss:$2 sm:$0xff]
      %s1877 = scalar_lea.vmem [#allocation2], 16
      %v1878 = vld [vmem:[%s1877] ss:$2 sm:$0xff]
      %s1879 = scalar_lea.vmem [#allocation2], 32
      %v1880 = vld [vmem:[%s1879] ss:$2 sm:$0xff]
      %s1881 = scalar_lea.vmem [#allocation2], 48
      %v1882 = vld [vmem:[%s1881] ss:$2 sm:$0xff]
      %s1883 = scalar_lea.vmem [#allocation2], 64
      %v1884 = vld [vmem:[%s1883] ss:$2 sm:$0xff]
      %s1885 = scalar_lea.vmem [#allocation2], 80
      %v1886 = vld [vmem:[%s1885] ss:$2 sm:$0xff]
      %s1887 = scalar_lea.vmem [#allocation2], 96
      %v1888 = vld [vmem:[%s1887] ss:$2 sm:$0xff]
      %s1889 = scalar_lea.vmem [#allocation2], 112
      %v1890 = vld [vmem:[%s1889] ss:$2 sm:$0xff]
      %s1891 = scalar_lea.vmem [#allocation2], 128
      %v1892 = vld [vmem:[%s1891] ss:$2 sm:$0xff]
      %s1893 = scalar_lea.vmem [#allocation2], 144
      %v1894 = vld [vmem:[%s1893] ss:$2 sm:$0xff]
      %s1895 = scalar_lea.vmem [#allocation2], 160
      %v1896 = vld [vmem:[%s1895] ss:$2 sm:$0xff]
      %s1897 = scalar_lea.vmem [#allocation2], 176
      %v1898 = vld [vmem:[%s1897] ss:$2 sm:$0xff]
      %s1899 = scalar_lea.vmem [#allocation2], 192
      %v1900 = vld [vmem:[%s1899] ss:$2 sm:$0xff]
      %s1901 = scalar_lea.vmem [#allocation2], 208
      %v1902 = vld [vmem:[%s1901] ss:$2 sm:$0xff]
      %s1903 = scalar_lea.vmem [#allocation2], 224
      %v1904 = vld [vmem:[%s1903] ss:$2 sm:$0xff]
      %s1905 = scalar_lea.vmem [#allocation2], 240
      %v1906 = vld [vmem:[%s1905] ss:$2 sm:$0xff]
      %s1907 = scalar_lea.vmem [#allocation2], 256
      %v1908 = vld [vmem:[%s1907] ss:$2 sm:$0xff]
      %s1909 = scalar_lea.vmem [#allocation2], 272
      %v1910 = vld [vmem:[%s1909] ss:$2 sm:$0xff]
      %s1911 = scalar_lea.vmem [#allocation2], 288
      %v1912 = vld [vmem:[%s1911] ss:$2 sm:$0xff]
      %s1913 = scalar_lea.vmem [#allocation2], 304
      %v1914 = vld [vmem:[%s1913] ss:$2 sm:$0xff]
      %s1915 = scalar_lea.vmem [#allocation2], 320
      %v1916 = vld [vmem:[%s1915] ss:$2 sm:$0xff]
      %s1917 = scalar_lea.vmem [#allocation2], 336
      %v1918 = vld [vmem:[%s1917] ss:$2 sm:$0xff]
      %s1919 = scalar_lea.vmem [#allocation2], 352
      %v1920 = vld [vmem:[%s1919] ss:$2 sm:$0xff]
      %s1921 = scalar_lea.vmem [#allocation2], 368
      %v1922 = vld [vmem:[%s1921] ss:$2 sm:$0xff]
      %s1923 = scalar_lea.vmem [#allocation2], 384
      %v1924 = vld [vmem:[%s1923] ss:$2 sm:$0xff]
      %s1925 = scalar_lea.vmem [#allocation2], 400
      %v1926 = vld [vmem:[%s1925] ss:$2 sm:$0xff]
      %s1927 = scalar_lea.vmem [#allocation2], 416
      %v1928 = vld [vmem:[%s1927] ss:$2 sm:$0xff]
      %s1929 = scalar_lea.vmem [#allocation2], 432
      %v1930 = vld [vmem:[%s1929] ss:$2 sm:$0xff]
      %s1931 = scalar_lea.vmem [#allocation2], 448
      %v1932 = vld [vmem:[%s1931] ss:$2 sm:$0xff]
      %s1933 = scalar_lea.vmem [#allocation2], 464
      %v1934 = vld [vmem:[%s1933] ss:$2 sm:$0xff]
      %s1935 = scalar_lea.vmem [#allocation2], 480
      %v1936 = vld [vmem:[%s1935] ss:$2 sm:$0xff]
      %s1937 = scalar_lea.vmem [#allocation2], 496
      %v1938 = vld [vmem:[%s1937] ss:$2 sm:$0xff]
      %s1939 = scalar_lea.vmem [#allocation2], 1
      %v1940 = vld [vmem:[%s1939] ss:$2 sm:$0xff]
      %s1941 = scalar_lea.vmem [#allocation2], 17
      %v1942 = vld [vmem:[%s1941] ss:$2 sm:$0xff]
      %s1943 = scalar_lea.vmem [#allocation2], 33
      %v1944 = vld [vmem:[%s1943] ss:$2 sm:$0xff]
      %s1945 = scalar_lea.vmem [#allocation2], 49
      %v1946 = vld [vmem:[%s1945] ss:$2 sm:$0xff]
      %s1947 = scalar_lea.vmem [#allocation2], 65
      %v1948 = vld [vmem:[%s1947] ss:$2 sm:$0xff]
      %s1949 = scalar_lea.vmem [#allocation2], 81
      %v1950 = vld [vmem:[%s1949] ss:$2 sm:$0xff]
      %s1951 = scalar_lea.vmem [#allocation2], 97
      %v1952 = vld [vmem:[%s1951] ss:$2 sm:$0xff]
      %s1953 = scalar_lea.vmem [#allocation2], 113
      %v1954 = vld [vmem:[%s1953] ss:$2 sm:$0xff]
      %s1955 = scalar_lea.vmem [#allocation2], 129
      %v1956 = vld [vmem:[%s1955] ss:$2 sm:$0xff]
      %s1957 = scalar_lea.vmem [#allocation2], 145
      %v1958 = vld [vmem:[%s1957] ss:$2 sm:$0xff]
      %s1959 = scalar_lea.vmem [#allocation2], 161
      %v1960 = vld [vmem:[%s1959] ss:$2 sm:$0xff]
      %s1961 = scalar_lea.vmem [#allocation2], 177
      %v1962 = vld [vmem:[%s1961] ss:$2 sm:$0xff]
      %s1963 = scalar_lea.vmem [#allocation2], 193
      %v1964 = vld [vmem:[%s1963] ss:$2 sm:$0xff]
      %s1965 = scalar_lea.vmem [#allocation2], 209
      %v1966 = vld [vmem:[%s1965] ss:$2 sm:$0xff]
      %s1967 = scalar_lea.vmem [#allocation2], 225
      %v1968 = vld [vmem:[%s1967] ss:$2 sm:$0xff]
      %s1969 = scalar_lea.vmem [#allocation2], 241
      %v1970 = vld [vmem:[%s1969] ss:$2 sm:$0xff]
      %s1971 = scalar_lea.vmem [#allocation2], 257
      %v1972 = vld [vmem:[%s1971] ss:$2 sm:$0xff]
      %s1973 = scalar_lea.vmem [#allocation2], 273
      %v1974 = vld [vmem:[%s1973] ss:$2 sm:$0xff]
      %s1975 = scalar_lea.vmem [#allocation2], 289
      %v1976 = vld [vmem:[%s1975] ss:$2 sm:$0xff]
      %s1977 = scalar_lea.vmem [#allocation2], 305
      %v1978 = vld [vmem:[%s1977] ss:$2 sm:$0xff]
      %s1979 = scalar_lea.vmem [#allocation2], 321
      %v1980 = vld [vmem:[%s1979] ss:$2 sm:$0xff]
      %s1981 = scalar_lea.vmem [#allocation2], 337
      %v1982 = vld [vmem:[%s1981] ss:$2 sm:$0xff]
      %s1983 = scalar_lea.vmem [#allocation2], 353
      %v1984 = vld [vmem:[%s1983] ss:$2 sm:$0xff]
      %s1985 = scalar_lea.vmem [#allocation2], 369
      %v1986 = vld [vmem:[%s1985] ss:$2 sm:$0xff]
      %s1987 = scalar_lea.vmem [#allocation2], 385
      %v1988 = vld [vmem:[%s1987] ss:$2 sm:$0xff]
      %s1989 = scalar_lea.vmem [#allocation2], 401
      %v1990 = vld [vmem:[%s1989] ss:$2 sm:$0xff]
      %s1991 = scalar_lea.vmem [#allocation2], 417
      %v1992 = vld [vmem:[%s1991] ss:$2 sm:$0xff]
      %s1993 = scalar_lea.vmem [#allocation2], 433
      %v1994 = vld [vmem:[%s1993] ss:$2 sm:$0xff]
      %s1995 = scalar_lea.vmem [#allocation2], 449
      %v1996 = vld [vmem:[%s1995] ss:$2 sm:$0xff]
      %s1997 = scalar_lea.vmem [#allocation2], 465
      %v1998 = vld [vmem:[%s1997] ss:$2 sm:$0xff]
      %s1999 = scalar_lea.vmem [#allocation2], 481
      %v2000 = vld [vmem:[%s1999] ss:$2 sm:$0xff]
      %s2001 = scalar_lea.vmem [#allocation2], 497
      %v2002 = vld [vmem:[%s2001] ss:$2 sm:$0xff]
      %v2003 = vmax.f32 %v1876, %v1940
      %v2004 = vmax.f32 %v1878, %v1942
      %v2005 = vmax.f32 %v1880, %v1944
      %v2006 = vmax.f32 %v1882, %v1946
      %v2007 = vmax.f32 %v1884, %v1948
      %v2008 = vmax.f32 %v1886, %v1950
      %v2009 = vmax.f32 %v1888, %v1952
      %v2010 = vmax.f32 %v1890, %v1954
      %v2011 = vmax.f32 %v1892, %v1956
      %v2012 = vmax.f32 %v1894, %v1958
      %v2013 = vmax.f32 %v1896, %v1960
      %v2014 = vmax.f32 %v1898, %v1962
      %v2015 = vmax.f32 %v1900, %v1964
      %v2016 = vmax.f32 %v1902, %v1966
      %v2017 = vmax.f32 %v1904, %v1968
      %v2018 = vmax.f32 %v1906, %v1970
      %v2019 = vmax.f32 %v1908, %v1972
      %v2020 = vmax.f32 %v1910, %v1974
      %v2021 = vmax.f32 %v1912, %v1976
      %v2022 = vmax.f32 %v1914, %v1978
      %v2023 = vmax.f32 %v1916, %v1980
      %v2024 = vmax.f32 %v1918, %v1982
      %v2025 = vmax.f32 %v1920, %v1984
      %v2026 = vmax.f32 %v1922, %v1986
      %v2027 = vmax.f32 %v1924, %v1988
      %v2028 = vmax.f32 %v1926, %v1990
      %v2029 = vmax.f32 %v1928, %v1992
      %v2030 = vmax.f32 %v1930, %v1994
      %v2031 = vmax.f32 %v1932, %v1996
      %v2032 = vmax.f32 %v1934, %v1998
      %v2033 = vmax.f32 %v1936, %v2000
      %v2034 = vmax.f32 %v1938, %v2002
      %2035 = vst [vmem:[#allocation3] sm:$0xff] %v2003
      %2036 = vst [vmem:[#allocation3 + $0x8] sm:$0xff] %v2004
      %2037 = vst [vmem:[#allocation3 + $0x10] sm:$0xff] %v2005
      %2038 = vst [vmem:[#allocation3 + $0x18] sm:$0xff] %v2006
      %2039 = vst [vmem:[#allocation3 + $0x20] sm:$0xff] %v2007
      %2040 = vst [vmem:[#allocation3 + $0x28] sm:$0xff] %v2008
      %2041 = vst [vmem:[#allocation3 + $0x30] sm:$0xff] %v2009
      %2042 = vst [vmem:[#allocation3 + $0x38] sm:$0xff] %v2010
      %2043 = vst [vmem:[#allocation3 + $0x40] sm:$0xff] %v2011
      %2044 = vst [vmem:[#allocation3 + $0x48] sm:$0xff] %v2012
      %2045 = vst [vmem:[#allocation3 + $0x50] sm:$0xff] %v2013
      %2046 = vst [vmem:[#allocation3 + $0x58] sm:$0xff] %v2014
      %2047 = vst [vmem:[#allocation3 + $0x60] sm:$0xff] %v2015
      %2048 = vst [vmem:[#allocation3 + $0x68] sm:$0xff] %v2016
      %2049 = vst [vmem:[#allocation3 + $0x70] sm:$0xff] %v2017
      %2050 = vst [vmem:[#allocation3 + $0x78] sm:$0xff] %v2018
      %2051 = vst [vmem:[#allocation3 + $0x80] sm:$0xff] %v2019
      %2052 = vst [vmem:[#allocation3 + $0x88] sm:$0xff] %v2020
      %2053 = vst [vmem:[#allocation3 + $0x90] sm:$0xff] %v2021
      %2054 = vst [vmem:[#allocation3 + $0x98] sm:$0xff] %v2022
      %2055 = vst [vmem:[#allocation3 + $0xa0] sm:$0xff] %v2023
      %2056 = vst [vmem:[#allocation3 + $0xa8] sm:$0xff] %v2024
      %2057 = vst [vmem:[#allocation3 + $0xb0] sm:$0xff] %v2025
      %2058 = vst [vmem:[#allocation3 + $0xb8] sm:$0xff] %v2026
      %2059 = vst [vmem:[#allocation3 + $0xc0] sm:$0xff] %v2027
      %2060 = vst [vmem:[#allocation3 + $0xc8] sm:$0xff] %v2028
      %2061 = vst [vmem:[#allocation3 + $0xd0] sm:$0xff] %v2029
      %2062 = vst [vmem:[#allocation3 + $0xd8] sm:$0xff] %v2030
      %2063 = vst [vmem:[#allocation3 + $0xe0] sm:$0xff] %v2031
      %2064 = vst [vmem:[#allocation3 + $0xe8] sm:$0xff] %v2032
      %2065 = vst [vmem:[#allocation3 + $0xf0] sm:$0xff] %v2033
      %2066 = vst [vmem:[#allocation3 + $0xf8] sm:$0xff] %v2034
      %v2067 = vld [vmem:[#allocation3] ss:$2 sm:$0xff]
      %s2068 = scalar_lea.vmem [#allocation3], 16
      %v2069 = vld [vmem:[%s2068] ss:$2 sm:$0xff]
      %s2070 = scalar_lea.vmem [#allocation3], 32
      %v2071 = vld [vmem:[%s2070] ss:$2 sm:$0xff]
      %s2072 = scalar_lea.vmem [#allocation3], 48
      %v2073 = vld [vmem:[%s2072] ss:$2 sm:$0xff]
      %s2074 = scalar_lea.vmem [#allocation3], 64
      %v2075 = vld [vmem:[%s2074] ss:$2 sm:$0xff]
      %s2076 = scalar_lea.vmem [#allocation3], 80
      %v2077 = vld [vmem:[%s2076] ss:$2 sm:$0xff]
      %s2078 = scalar_lea.vmem [#allocation3], 96
      %v2079 = vld [vmem:[%s2078] ss:$2 sm:$0xff]
      %s2080 = scalar_lea.vmem [#allocation3], 112
      %v2081 = vld [vmem:[%s2080] ss:$2 sm:$0xff]
      %s2082 = scalar_lea.vmem [#allocation3], 128
      %v2083 = vld [vmem:[%s2082] ss:$2 sm:$0xff]
      %s2084 = scalar_lea.vmem [#allocation3], 144
      %v2085 = vld [vmem:[%s2084] ss:$2 sm:$0xff]
      %s2086 = scalar_lea.vmem [#allocation3], 160
      %v2087 = vld [vmem:[%s2086] ss:$2 sm:$0xff]
      %s2088 = scalar_lea.vmem [#allocation3], 176
      %v2089 = vld [vmem:[%s2088] ss:$2 sm:$0xff]
      %s2090 = scalar_lea.vmem [#allocation3], 192
      %v2091 = vld [vmem:[%s2090] ss:$2 sm:$0xff]
      %s2092 = scalar_lea.vmem [#allocation3], 208
      %v2093 = vld [vmem:[%s2092] ss:$2 sm:$0xff]
      %s2094 = scalar_lea.vmem [#allocation3], 224
      %v2095 = vld [vmem:[%s2094] ss:$2 sm:$0xff]
      %s2096 = scalar_lea.vmem [#allocation3], 240
      %v2097 = vld [vmem:[%s2096] ss:$2 sm:$0x7f]
      %s2098 = scalar_lea.vmem [#allocation3], 1
      %v2099 = vld [vmem:[%s2098] ss:$2 sm:$0xff]
      %s2100 = scalar_lea.vmem [#allocation3], 17
      %v2101 = vld [vmem:[%s2100] ss:$2 sm:$0xff]
      %s2102 = scalar_lea.vmem [#allocation3], 33
      %v2103 = vld [vmem:[%s2102] ss:$2 sm:$0xff]
      %s2104 = scalar_lea.vmem [#allocation3], 49
      %v2105 = vld [vmem:[%s2104] ss:$2 sm:$0xff]
      %s2106 = scalar_lea.vmem [#allocation3], 65
      %v2107 = vld [vmem:[%s2106] ss:$2 sm:$0xff]
      %s2108 = scalar_lea.vmem [#allocation3], 81
      %v2109 = vld [vmem:[%s2108] ss:$2 sm:$0xff]
      %s2110 = scalar_lea.vmem [#allocation3], 97
      %v2111 = vld [vmem:[%s2110] ss:$2 sm:$0xff]
      %s2112 = scalar_lea.vmem [#allocation3], 113
      %v2113 = vld [vmem:[%s2112] ss:$2 sm:$0xff]
      %s2114 = scalar_lea.vmem [#allocation3], 129
      %v2115 = vld [vmem:[%s2114] ss:$2 sm:$0xff]
      %s2116 = scalar_lea.vmem [#allocation3], 145
      %v2117 = vld [vmem:[%s2116] ss:$2 sm:$0xff]
      %s2118 = scalar_lea.vmem [#allocation3], 161
      %v2119 = vld [vmem:[%s2118] ss:$2 sm:$0xff]
      %s2120 = scalar_lea.vmem [#allocation3], 177
      %v2121 = vld [vmem:[%s2120] ss:$2 sm:$0xff]
      %s2122 = scalar_lea.vmem [#allocation3], 193
      %v2123 = vld [vmem:[%s2122] ss:$2 sm:$0xff]
      %s2124 = scalar_lea.vmem [#allocation3], 209
      %v2125 = vld [vmem:[%s2124] ss:$2 sm:$0xff]
      %s2126 = scalar_lea.vmem [#allocation3], 225
      %v2127 = vld [vmem:[%s2126] ss:$2 sm:$0xff]
      %s2128 = scalar_lea.vmem [#allocation3], 241
      %v2129 = vld [vmem:[%s2128] ss:$2 sm:$0x7f]
      %s2130 = scalar_lea.vmem [#allocation3], 2
      %v2131 = vld [vmem:[%s2130] ss:$2 sm:$0xff]
      %s2132 = scalar_lea.vmem [#allocation3], 18
      %v2133 = vld [vmem:[%s2132] ss:$2 sm:$0xff]
      %s2134 = scalar_lea.vmem [#allocation3], 34
      %v2135 = vld [vmem:[%s2134] ss:$2 sm:$0xff]
      %s2136 = scalar_lea.vmem [#allocation3], 50
      %v2137 = vld [vmem:[%s2136] ss:$2 sm:$0xff]
      %s2138 = scalar_lea.vmem [#allocation3], 66
      %v2139 = vld [vmem:[%s2138] ss:$2 sm:$0xff]
      %s2140 = scalar_lea.vmem [#allocation3], 82
      %v2141 = vld [vmem:[%s2140] ss:$2 sm:$0xff]
      %s2142 = scalar_lea.vmem [#allocation3], 98
      %v2143 = vld [vmem:[%s2142] ss:$2 sm:$0xff]
      %s2144 = scalar_lea.vmem [#allocation3], 114
      %v2145 = vld [vmem:[%s2144] ss:$2 sm:$0xff]
      %s2146 = scalar_lea.vmem [#allocation3], 130
      %v2147 = vld [vmem:[%s2146] ss:$2 sm:$0xff]
      %s2148 = scalar_lea.vmem [#allocation3], 146
      %v2149 = vld [vmem:[%s2148] ss:$2 sm:$0xff]
      %s2150 = scalar_lea.vmem [#allocation3], 162
      %v2151 = vld [vmem:[%s2150] ss:$2 sm:$0xff]
      %s2152 = scalar_lea.vmem [#allocation3], 178
      %v2153 = vld [vmem:[%s2152] ss:$2 sm:$0xff]
      %s2154 = scalar_lea.vmem [#allocation3], 194
      %v2155 = vld [vmem:[%s2154] ss:$2 sm:$0xff]
      %s2156 = scalar_lea.vmem [#allocation3], 210
      %v2157 = vld [vmem:[%s2156] ss:$2 sm:$0xff]
      %s2158 = scalar_lea.vmem [#allocation3], 226
      %v2159 = vld [vmem:[%s2158] ss:$2 sm:$0xff]
      %s2160 = scalar_lea.vmem [#allocation3], 242
      %v2161 = vld [vmem:[%s2160] ss:$2 sm:$0x7f]
      %v2162 = vld [vmem:[%s3] sm:$0xff]
      %v2163 = vld [vmem:[%s3 + $0x8] sm:$0xff]
      %v2164 = vld [vmem:[%s3 + $0x10] sm:$0xff]
      %v2165 = vld [vmem:[%s3 + $0x18] sm:$0xff]
      %v2166 = vld [vmem:[%s3 + $0x20] sm:$0xff]
      %v2167 = vld [vmem:[%s3 + $0x28] sm:$0xff]
      %v2168 = vld [vmem:[%s3 + $0x30] sm:$0xff]
      %v2169 = vld [vmem:[%s3 + $0x38] sm:$0xff]
      %v2170 = vld [vmem:[%s3 + $0x40] sm:$0xff]
      %v2171 = vld [vmem:[%s3 + $0x48] sm:$0xff]
      %v2172 = vld [vmem:[%s3 + $0x50] sm:$0xff]
      %v2173 = vld [vmem:[%s3 + $0x58] sm:$0xff]
      %v2174 = vld [vmem:[%s3 + $0x60] sm:$0xff]
      %v2175 = vld [vmem:[%s3 + $0x68] sm:$0xff]
      %v2176 = vld [vmem:[%s3 + $0x70] sm:$0xff]
      %v2177 = vld [vmem:[%s3 + $0x78] sm:$0xff]
      %v2178 = vld [vmem:[%s3 + $0x80] sm:$0xff]
      %v2179 = vld [vmem:[%s3 + $0x88] sm:$0xff]
      %v2180 = vld [vmem:[%s3 + $0x90] sm:$0xff]
      %v2181 = vld [vmem:[%s3 + $0x98] sm:$0xff]
      %v2182 = vld [vmem:[%s3 + $0xa0] sm:$0xff]
      %v2183 = vld [vmem:[%s3 + $0xa8] sm:$0xff]
      %v2184 = vld [vmem:[%s3 + $0xb0] sm:$0xff]
      %v2185 = vld [vmem:[%s3 + $0xb8] sm:$0xff]
      %v2186 = vld [vmem:[%s3 + $0xc0] sm:$0xff]
      %v2187 = vld [vmem:[%s3 + $0xc8] sm:$0xff]
      %v2188 = vld [vmem:[%s3 + $0xd0] sm:$0xff]
      %v2189 = vld [vmem:[%s3 + $0xd8] sm:$0xff]
      %v2190 = vld [vmem:[%s3 + $0xe0] sm:$0xff]
      %v2191 = vld [vmem:[%s3 + $0xe8] sm:$0xff]
      %v2192 = vld [vmem:[%s3 + $0xf0] sm:$0xff]
      %v2193 = vld [vmem:[%s3 + $0xf8] sm:$0xff]
      %v2194 = vld [vmem:[%s3 + $0x100] sm:$0xff]
      %v2195 = vld [vmem:[%s3 + $0x108] sm:$0xff]
      %v2196 = vld [vmem:[%s3 + $0x110] sm:$0xff]
      %v2197 = vld [vmem:[%s3 + $0x118] sm:$0xff]
      %v2198 = vld [vmem:[%s3 + $0x120] sm:$0xff]
      %v2199 = vld [vmem:[%s3 + $0x128] sm:$0xff]
      %v2200 = vld [vmem:[%s3 + $0x130] sm:$0xff]
      %v2201 = vld [vmem:[%s3 + $0x138] sm:$0xff]
      %v2202 = vld [vmem:[%s3 + $0x140] sm:$0xff]
      %v2203 = vld [vmem:[%s3 + $0x148] sm:$0xff]
      %v2204 = vld [vmem:[%s3 + $0x150] sm:$0xff]
      %v2205 = vld [vmem:[%s3 + $0x158] sm:$0xff]
      %v2206 = vld [vmem:[%s3 + $0x160] sm:$0xff]
      %v2207 = vld [vmem:[%s3 + $0x168] sm:$0xff]
      %v2208 = vld [vmem:[%s3 + $0x170] sm:$0xff]
      %v2209 = vld [vmem:[%s3 + $0x178] sm:$0xff]
      %v2210 = vld [vmem:[%s4] sm:$0x1]
      %v2212 = vlaneseq
      %v2213 = vshrl.u32 %v2212, 7
      %v2214 = vsub.s32 0, %v2213
      %v2215 = vrot.slane %v2210, %v2214
      %2217 = vmatprep.subr.mxu0 0.0
      %2218 = vmatpush1.msra.mxu0 %v2162
      %2219 = vmatprep.subr.mxu0 0.0
      %2220 = vmatpush1.msra.mxu0 %v2163
      %2221 = vmatprep.subr.mxu0 0.0
      %2222 = vmatpush1.msra.mxu0 %v2164
      %2223 = vmatprep.subr.mxu0 0.0
      %2224 = vmatpush1.msra.mxu0 %v2165
      %2225 = vmatprep.subr.mxu0 0.0
      %2226 = vmatpush1.msra.mxu0 %v2166
      %2227 = vmatprep.subr.mxu0 0.0
      %2228 = vmatpush1.msra.mxu0 %v2167
      %2229 = vmatprep.subr.mxu0 0.0
      %2230 = vmatpush1.msra.mxu0 %v2168
      %2231 = vmatprep.subr.mxu0 0.0
      %2232 = vmatpush1.msra.mxu0 %v2169
      %2233 = vmatprep.subr.mxu0 0.0
      %2234 = vmatpush1.msra.mxu0 %v2170
      %2235 = vmatprep.subr.mxu0 0.0
      %2236 = vmatpush1.msra.mxu0 %v2171
      %2237 = vmatprep.subr.mxu0 0.0
      %2238 = vmatpush1.msra.mxu0 %v2172
      %2239 = vmatprep.subr.mxu0 0.0
      %2240 = vmatpush1.msra.mxu0 %v2173
      %2241 = vmatprep.subr.mxu0 0.0
      %2242 = vmatpush1.msra.mxu0 %v2174
      %2243 = vmatprep.subr.mxu0 0.0
      %2244 = vmatpush1.msra.mxu0 %v2175
      %2245 = vmatprep.subr.mxu0 0.0
      %2246 = vmatpush1.msra.mxu0 %v2176
      %2247 = vmatprep.subr.mxu0 0.0
      %2248 = vmatpush1.msra.mxu0 %v2177
      %2249 = vmatprep.subr.mxu0 0.0
      %2250 = vmatpush1.msra.mxu0 %v2178
      %2251 = vmatprep.subr.mxu0 0.0
      %2252 = vmatpush1.msra.mxu0 %v2179
      %2253 = vmatprep.subr.mxu0 0.0
      %2254 = vmatpush1.msra.mxu0 %v2180
      %2255 = vmatprep.subr.mxu0 0.0
      %2256 = vmatpush1.msra.mxu0 %v2181
      %2257 = vmatprep.subr.mxu0 0.0
      %2258 = vmatpush1.msra.mxu0 %v2182
      %2259 = vmatprep.subr.mxu0 0.0
      %2260 = vmatpush1.msra.mxu0 %v2183
      %2261 = vmatprep.subr.mxu0 0.0
      %2262 = vmatpush1.msra.mxu0 %v2184
      %2263 = vmatprep.subr.mxu0 0.0
      %2264 = vmatpush1.msra.mxu0 %v2185
      %2265 = vmatprep.subr.mxu0 0.0
      %2266 = vmatpush1.msra.mxu0 %v2186
      %2267 = vmatprep.subr.mxu0 0.0
      %2268 = vmatpush1.msra.mxu0 %v2187
      %2269 = vmatprep.subr.mxu0 0.0
      %2270 = vmatpush1.msra.mxu0 %v2188
      %2271 = vmatprep.subr.mxu0 0.0
      %2272 = vmatpush1.msra.mxu0 %v2189
      %2273 = vmatprep.subr.mxu0 0.0
      %2274 = vmatpush1.msra.mxu0 %v2190
      %2275 = vmatprep.subr.mxu0 0.0
      %2276 = vmatpush1.msra.mxu0 %v2191
      %2277 = vmatprep.subr.mxu0 0.0
      %2278 = vmatpush1.msra.mxu0 %v2192
      %2279 = vmatprep.subr.mxu0 0.0
      %2280 = vmatpush1.msra.mxu0 %v2193
      %2281 = vmatprep.mubr.f32.mxu0 %v2099
      %2282 = vmatmul.mubr.f32.gmra.mrb[0].mxu0 %v2067
      %v2283 = vpop.f32.mrb[0].mxu0
      %v2284 = vadd.f32 %v2215, %v2283
      %v2285 = vpop.f32.mrb[0].mxu0
      %2286 = vmatprep.mubr.f32.mxu0 %v2101
      %2287 = vmatmul.mubr.f32.gmra.mrb[0].mxu0 %v2069
      %v2288 = vpop.f32.mrb[0].mxu0
      %v2289 = vadd.f32 %v2215, %v2288
      %v2290 = vpop.f32.mrb[0].mxu0
      %2291 = vmatprep.mubr.f32.mxu0 %v2103
      %2292 = vmatmul.mubr.f32.gmra.mrb[0].mxu0 %v2071
      %v2293 = vpop.f32.mrb[0].mxu0
      %v2294 = vadd.f32 %v2215, %v2293
      %v2295 = vpop.f32.mrb[0].mxu0
      %2296 = vmatprep.mubr.f32.mxu0 %v2105
      %2297 = vmatmul.mubr.f32.gmra.mrb[0].mxu0 %v2073
      %v2298 = vpop.f32.mrb[0].mxu0
      %v2299 = vadd.f32 %v2215, %v2298
      %v2300 = vpop.f32.mrb[0].mxu0
      %2301 = vmatprep.mubr.f32.mxu0 %v2107
      %2302 = vmatmul.mubr.f32.gmra.mrb[0].mxu0 %v2075
      %v2303 = vpop.f32.mrb[0].mxu0
      %v2304 = vadd.f32 %v2215, %v2303
      %v2305 = vpop.f32.mrb[0].mxu0
      %2306 = vmatprep.mubr.f32.mxu0 %v2109
      %2307 = vmatmul.mubr.f32.gmra.mrb[0].mxu0 %v2077
      %v2308 = vpop.f32.mrb[0].mxu0
      %v2309 = vadd.f32 %v2215, %v2308
      %v2310 = vpop.f32.mrb[0].mxu0
      %2311 = vmatprep.mubr.f32.mxu0 %v2111
      %2312 = vmatmul.mubr.f32.gmra.mrb[0].mxu0 %v2079
      %v2313 = vpop.f32.mrb[0].mxu0
      %v2314 = vadd.f32 %v2215, %v2313
      %v2315 = vpop.f32.mrb[0].mxu0
      %2316 = vmatprep.mubr.f32.mxu0 %v2113
      %2317 = vmatmul.mubr.f32.gmra.mrb[0].mxu0 %v2081
      %v2318 = vpop.f32.mrb[0].mxu0
      %v2319 = vadd.f32 %v2215, %v2318
      %v2320 = vpop.f32.mrb[0].mxu0
      %2321 = vmatprep.mubr.f32.mxu0 %v2115
      %2322 = vmatmul.mubr.f32.gmra.mrb[0].mxu0 %v2083
      %v2323 = vpop.f32.mrb[0].mxu0
      %v2324 = vadd.f32 %v2215, %v2323
      %v2325 = vpop.f32.mrb[0].mxu0
      %2326 = vmatprep.mubr.f32.mxu0 %v2117
      %2327 = vmatmul.mubr.f32.gmra.mrb[0].mxu0 %v2085
      %v2328 = vpop.f32.mrb[0].mxu0
      %v2329 = vadd.f32 %v2215, %v2328
      %v2330 = vpop.f32.mrb[0].mxu0
      %2331 = vmatprep.mubr.f32.mxu0 %v2119
      %2332 = vmatmul.mubr.f32.gmra.mrb[0].mxu0 %v2087
      %v2333 = vpop.f32.mrb[0].mxu0
      %v2334 = vadd.f32 %v2215, %v2333
      %v2335 = vpop.f32.mrb[0].mxu0
      %2336 = vmatprep.mubr.f32.mxu0 %v2121
      %2337 = vmatmul.mubr.f32.gmra.mrb[0].mxu0 %v2089
      %v2338 = vpop.f32.mrb[0].mxu0
      %v2339 = vadd.f32 %v2215, %v2338
      %v2340 = vpop.f32.mrb[0].mxu0
      %2341 = vmatprep.mubr.f32.mxu0 %v2123
      %2342 = vmatmul.mubr.f32.gmra.mrb[0].mxu0 %v2091
      %v2343 = vpop.f32.mrb[0].mxu0
      %v2344 = vadd.f32 %v2215, %v2343
      %v2345 = vpop.f32.mrb[0].mxu0
      %2346 = vmatprep.mubr.f32.mxu0 %v2125
      %2347 = vmatmul.mubr.f32.gmra.mrb[0].mxu0 %v2093
      %v2348 = vpop.f32.mrb[0].mxu0
      %v2349 = vadd.f32 %v2215, %v2348
      %v2350 = vpop.f32.mrb[0].mxu0
      %2351 = vmatprep.mubr.f32.mxu0 %v2127
      %2352 = vmatmul.mubr.f32.gmra.mrb[0].mxu0 %v2095
      %v2353 = vpop.f32.mrb[0].mxu0
      %v2354 = vadd.f32 %v2215, %v2353
      %v2355 = vpop.f32.mrb[0].mxu0
      %2356 = vmatprep.mubr.f32.mxu0 %v2129
      %2357 = vmatmul.mubr.f32.gmra.mrb[0].mxu0 %v2097
      %v2358 = vpop.f32.mrb[0].mxu0
      %v2359 = vadd.f32 %v2215, %v2358
      %v2360 = vpop.f32.mrb[0].mxu0
      %2361 = vdwg.mxu0
      %2362 = vmatprep.subr.mxu0 0.0
      %2363 = vmatpush1.msra.mxu0 %v2194
      %2364 = vmatprep.subr.mxu0 0.0
      %2365 = vmatpush1.msra.mxu0 %v2195
      %2366 = vmatprep.subr.mxu0 0.0
      %2367 = vmatpush1.msra.mxu0 %v2196
      %2368 = vmatprep.subr.mxu0 0.0
      %2369 = vmatpush1.msra.mxu0 %v2197
      %2370 = vmatprep.subr.mxu0 0.0
      %2371 = vmatpush1.msra.mxu0 %v2198
      %2372 = vmatprep.subr.mxu0 0.0
      %2373 = vmatpush1.msra.mxu0 %v2199
      %2374 = vmatprep.subr.mxu0 0.0
      %2375 = vmatpush1.msra.mxu0 %v2200
      %2376 = vmatprep.subr.mxu0 0.0
      %2377 = vmatpush1.msra.mxu0 %v2201
      %2378 = vmatprep.subr.mxu0 0.0
      %2379 = vmatpush1.msra.mxu0 %v2202
      %2380 = vmatprep.subr.mxu0 0.0
      %2381 = vmatpush1.msra.mxu0 %v2203
      %2382 = vmatprep.subr.mxu0 0.0
      %2383 = vmatpush1.msra.mxu0 %v2204
      %2384 = vmatprep.subr.mxu0 0.0
      %2385 = vmatpush1.msra.mxu0 %v2205
      %2386 = vmatprep.subr.mxu0 0.0
      %2387 = vmatpush1.msra.mxu0 %v2206
      %2388 = vmatprep.subr.mxu0 0.0
      %2389 = vmatpush1.msra.mxu0 %v2207
      %2390 = vmatprep.subr.mxu0 0.0
      %2391 = vmatpush1.msra.mxu0 %v2208
      %2392 = vmatprep.subr.mxu0 0.0
      %2393 = vmatpush1.msra.mxu0 %v2209
      %2394 = vmatprep.subr.mxu0 0.0
      %2395 = vmatpush1.msra.mxu0 0.0
      %2396 = vmatprep.subr.mxu0 0.0
      %2397 = vmatpush1.msra.mxu0 0.0
      %2398 = vmatprep.subr.mxu0 0.0
      %2399 = vmatpush1.msra.mxu0 0.0
      %2400 = vmatprep.subr.mxu0 0.0
      %2401 = vmatpush1.msra.mxu0 0.0
      %2402 = vmatprep.subr.mxu0 0.0
      %2403 = vmatpush1.msra.mxu0 0.0
      %2404 = vmatprep.subr.mxu0 0.0
      %2405 = vmatpush1.msra.mxu0 0.0
      %2406 = vmatprep.subr.mxu0 0.0
      %2407 = vmatpush1.msra.mxu0 0.0
      %2408 = vmatprep.subr.mxu0 0.0
      %2409 = vmatpush1.msra.mxu0 0.0
      %2410 = vmatprep.subr.mxu0 0.0
      %2411 = vmatpush1.msra.mxu0 0.0
      %2412 = vmatprep.subr.mxu0 0.0
      %2413 = vmatpush1.msra.mxu0 0.0
      %2414 = vmatprep.subr.mxu0 0.0
      %2415 = vmatpush1.msra.mxu0 0.0
      %2416 = vmatprep.subr.mxu0 0.0
      %2417 = vmatpush1.msra.mxu0 0.0
      %2418 = vmatprep.subr.mxu0 0.0
      %2419 = vmatpush1.msra.mxu0 0.0
      %2420 = vmatprep.subr.mxu0 0.0
      %2421 = vmatpush1.msra.mxu0 0.0
      %2422 = vmatprep.subr.mxu0 0.0
      %2423 = vmatpush1.msra.mxu0 0.0
      %2424 = vmatprep.subr.mxu0 0.0
      %2425 = vmatpush1.msra.mxu0 0.0
      %2426 = vmatprep.mubr.f32.mxu0 0.0
      %2427 = vmatmul.mubr.f32.gmra.mrb[0].mxu0 %v2131
      %v2428 = vpop.f32.mrb[0].mxu0
      %v2429 = vadd.f32 %v2284, %v2428
      %v2430 = vpop.f32.mrb[0].mxu0
      %2431 = vmatprep.mubr.f32.mxu0 0.0
      %2432 = vmatmul.mubr.f32.gmra.mrb[0].mxu0 %v2133
      %v2433 = vpop.f32.mrb[0].mxu0
      %v2434 = vadd.f32 %v2289, %v2433
      %v2435 = vpop.f32.mrb[0].mxu0
      %2436 = vmatprep.mubr.f32.mxu0 0.0
      %2437 = vmatmul.mubr.f32.gmra.mrb[0].mxu0 %v2135
      %v2438 = vpop.f32.mrb[0].mxu0
      %v2439 = vadd.f32 %v2294, %v2438
      %v2440 = vpop.f32.mrb[0].mxu0
      %2441 = vmatprep.mubr.f32.mxu0 0.0
      %2442 = vmatmul.mubr.f32.gmra.mrb[0].mxu0 %v2137
      %v2443 = vpop.f32.mrb[0].mxu0
      %v2444 = vadd.f32 %v2299, %v2443
      %v2445 = vpop.f32.mrb[0].mxu0
      %2446 = vmatprep.mubr.f32.mxu0 0.0
      %2447 = vmatmul.mubr.f32.gmra.mrb[0].mxu0 %v2139
      %v2448 = vpop.f32.mrb[0].mxu0
      %v2449 = vadd.f32 %v2304, %v2448
      %v2450 = vpop.f32.mrb[0].mxu0
      %2451 = vmatprep.mubr.f32.mxu0 0.0
      %2452 = vmatmul.mubr.f32.gmra.mrb[0].mxu0 %v2141
      %v2453 = vpop.f32.mrb[0].mxu0
      %v2454 = vadd.f32 %v2309, %v2453
      %v2455 = vpop.f32.mrb[0].mxu0
      %2456 = vmatprep.mubr.f32.mxu0 0.0
      %2457 = vmatmul.mubr.f32.gmra.mrb[0].mxu0 %v2143
      %v2458 = vpop.f32.mrb[0].mxu0
      %v2459 = vadd.f32 %v2314, %v2458
      %v2460 = vpop.f32.mrb[0].mxu0
      %2461 = vmatprep.mubr.f32.mxu0 0.0
      %2462 = vmatmul.mubr.f32.gmra.mrb[0].mxu0 %v2145
      %v2463 = vpop.f32.mrb[0].mxu0
      %v2464 = vadd.f32 %v2319, %v2463
      %v2465 = vpop.f32.mrb[0].mxu0
      %2466 = vmatprep.mubr.f32.mxu0 0.0
      %2467 = vmatmul.mubr.f32.gmra.mrb[0].mxu0 %v2147
      %v2468 = vpop.f32.mrb[0].mxu0
      %v2469 = vadd.f32 %v2324, %v2468
      %v2470 = vpop.f32.mrb[0].mxu0
      %2471 = vmatprep.mubr.f32.mxu0 0.0
      %2472 = vmatmul.mubr.f32.gmra.mrb[0].mxu0 %v2149
      %v2473 = vpop.f32.mrb[0].mxu0
      %v2474 = vadd.f32 %v2329, %v2473
      %v2475 = vpop.f32.mrb[0].mxu0
      %2476 = vmatprep.mubr.f32.mxu0 0.0
      %2477 = vmatmul.mubr.f32.gmra.mrb[0].mxu0 %v2151
      %v2478 = vpop.f32.mrb[0].mxu0
      %v2479 = vadd.f32 %v2334, %v2478
      %v2480 = vpop.f32.mrb[0].mxu0
      %2481 = vmatprep.mubr.f32.mxu0 0.0
      %2482 = vmatmul.mubr.f32.gmra.mrb[0].mxu0 %v2153
      %v2483 = vpop.f32.mrb[0].mxu0
      %v2484 = vadd.f32 %v2339, %v2483
      %v2485 = vpop.f32.mrb[0].mxu0
      %2486 = vmatprep.mubr.f32.mxu0 0.0
      %2487 = vmatmul.mubr.f32.gmra.mrb[0].mxu0 %v2155
      %v2488 = vpop.f32.mrb[0].mxu0
      %v2489 = vadd.f32 %v2344, %v2488
      %v2490 = vpop.f32.mrb[0].mxu0
      %2491 = vmatprep.mubr.f32.mxu0 0.0
      %2492 = vmatmul.mubr.f32.gmra.mrb[0].mxu0 %v2157
      %v2493 = vpop.f32.mrb[0].mxu0
      %v2494 = vadd.f32 %v2349, %v2493
      %v2495 = vpop.f32.mrb[0].mxu0
      %2496 = vmatprep.mubr.f32.mxu0 0.0
      %2497 = vmatmul.mubr.f32.gmra.mrb[0].mxu0 %v2159
      %v2498 = vpop.f32.mrb[0].mxu0
      %v2499 = vadd.f32 %v2354, %v2498
      %v2500 = vpop.f32.mrb[0].mxu0
      %2501 = vmatprep.mubr.f32.mxu0 0.0
      %2502 = vmatmul.mubr.f32.gmra.mrb[0].mxu0 %v2161
      %v2503 = vpop.f32.mrb[0].mxu0
      %v2504 = vadd.f32 %v2359, %v2503
      %v2505 = vpop.f32.mrb[0].mxu0
      %2506 = vdwg.mxu0
      %2507 = vst [vmem:[#allocation4] sm:$0xff] %v2429
      %2508 = vst [vmem:[#allocation4 + $0x8] sm:$0xff] %v2434
      %2509 = vst [vmem:[#allocation4 + $0x10] sm:$0xff] %v2439
      %2510 = vst [vmem:[#allocation4 + $0x18] sm:$0xff] %v2444
      %2511 = vst [vmem:[#allocation4 + $0x20] sm:$0xff] %v2449
      %2512 = vst [vmem:[#allocation4 + $0x28] sm:$0xff] %v2454
      %2513 = vst [vmem:[#allocation4 + $0x30] sm:$0xff] %v2459
      %2514 = vst [vmem:[#allocation4 + $0x38] sm:$0xff] %v2464
      %2515 = vst [vmem:[#allocation4 + $0x40] sm:$0xff] %v2469
      %2516 = vst [vmem:[#allocation4 + $0x48] sm:$0xff] %v2474
      %2517 = vst [vmem:[#allocation4 + $0x50] sm:$0xff] %v2479
      %2518 = vst [vmem:[#allocation4 + $0x58] sm:$0xff] %v2484
      %2519 = vst [vmem:[#allocation4 + $0x60] sm:$0xff] %v2489
      %2520 = vst [vmem:[#allocation4 + $0x68] sm:$0xff] %v2494
      %2521 = vst [vmem:[#allocation4 + $0x70] sm:$0xff] %v2499
      %2522 = vst [vmem:[#allocation4 + $0x78] sm:$0x7f] %v2504
      %v2523 = vld [vmem:[#allocation4] ss:$2 sm:$0xff]
      %s2524 = scalar_lea.vmem [#allocation4], 16
      %v2525 = vld [vmem:[%s2524] ss:$2 sm:$0xff]
      %s2526 = scalar_lea.vmem [#allocation4], 32
      %v2527 = vld [vmem:[%s2526] ss:$2 sm:$0xff]
      %s2528 = scalar_lea.vmem [#allocation4], 48
      %v2529 = vld [vmem:[%s2528] ss:$2 sm:$0xff]
      %s2530 = scalar_lea.vmem [#allocation4], 64
      %v2531 = vld [vmem:[%s2530] ss:$2 sm:$0xff]
      %s2532 = scalar_lea.vmem [#allocation4], 80
      %v2533 = vld [vmem:[%s2532] ss:$2 sm:$0xff]
      %s2534 = scalar_lea.vmem [#allocation4], 96
      %v2535 = vld [vmem:[%s2534] ss:$2 sm:$0xff]
      %s2536 = scalar_lea.vmem [#allocation4], 112
      %v2537 = vld [vmem:[%s2536] ss:$2 sm:$0x7f]
      %s2538 = scalar_lea.vmem [#allocation4], 1
      %v2539 = vld [vmem:[%s2538] ss:$2 sm:$0xff]
      %s2540 = scalar_lea.vmem [#allocation4], 17
      %v2541 = vld [vmem:[%s2540] ss:$2 sm:$0xff]
      %s2542 = scalar_lea.vmem [#allocation4], 33
      %v2543 = vld [vmem:[%s2542] ss:$2 sm:$0xff]
      %s2544 = scalar_lea.vmem [#allocation4], 49
      %v2545 = vld [vmem:[%s2544] ss:$2 sm:$0xff]
      %s2546 = scalar_lea.vmem [#allocation4], 65
      %v2547 = vld [vmem:[%s2546] ss:$2 sm:$0xff]
      %s2548 = scalar_lea.vmem [#allocation4], 81
      %v2549 = vld [vmem:[%s2548] ss:$2 sm:$0xff]
      %s2550 = scalar_lea.vmem [#allocation4], 97
      %v2551 = vld [vmem:[%s2550] ss:$2 sm:$0xff]
      %s2552 = scalar_lea.vmem [#allocation4], 113
      %v2553 = vld [vmem:[%s2552] ss:$2 sm:$0x7f]
      %v2554 = vmax.f32 %v2523, %v2539
      %v2555 = vmax.f32 %v2525, %v2541
      %v2556 = vmax.f32 %v2527, %v2543
      %v2557 = vmax.f32 %v2529, %v2545
      %v2558 = vmax.f32 %v2531, %v2547
      %v2559 = vmax.f32 %v2533, %v2549
      %v2560 = vmax.f32 %v2535, %v2551
      %v2561 = vmax.f32 %v2537, %v2553
      %s2562 = scalar_lea.vmem [#allocation4], 2
      %v2563 = vld [vmem:[%s2562] ss:$2 sm:$0xff]
      %s2564 = scalar_lea.vmem [#allocation4], 18
      %v2565 = vld [vmem:[%s2564] ss:$2 sm:$0xff]
      %s2566 = scalar_lea.vmem [#allocation4], 34
      %v2567 = vld [vmem:[%s2566] ss:$2 sm:$0xff]
      %s2568 = scalar_lea.vmem [#allocation4], 50
      %v2569 = vld [vmem:[%s2568] ss:$2 sm:$0xff]
      %s2570 = scalar_lea.vmem [#allocation4], 66
      %v2571 = vld [vmem:[%s2570] ss:$2 sm:$0xff]
      %s2572 = scalar_lea.vmem [#allocation4], 82
      %v2573 = vld [vmem:[%s2572] ss:$2 sm:$0xff]
      %s2574 = scalar_lea.vmem [#allocation4], 98
      %v2575 = vld [vmem:[%s2574] ss:$2 sm:$0xff]
      %s2576 = scalar_lea.vmem [#allocation4], 114
      %v2577 = vld [vmem:[%s2576] ss:$2 sm:$0x7f]
      %v2578 = vmax.f32 %v2554, %v2563
      %v2579 = vmax.f32 %v2555, %v2565
      %v2580 = vmax.f32 %v2556, %v2567
      %v2581 = vmax.f32 %v2557, %v2569
      %v2582 = vmax.f32 %v2558, %v2571
      %v2583 = vmax.f32 %v2559, %v2573
      %v2584 = vmax.f32 %v2560, %v2575
      %v2585 = vmax.f32 %v2561, %v2577
      %2586 = vst [vmem:[#allocation5] sm:$0xff] %v2578
      %2587 = vst [vmem:[#allocation5 + $0x8] sm:$0xff] %v2579
      %2588 = vst [vmem:[#allocation5 + $0x10] sm:$0xff] %v2580
      %2589 = vst [vmem:[#allocation5 + $0x18] sm:$0xff] %v2581
      %2590 = vst [vmem:[#allocation5 + $0x20] sm:$0xff] %v2582
      %2591 = vst [vmem:[#allocation5 + $0x28] sm:$0xff] %v2583
      %2592 = vst [vmem:[#allocation5 + $0x30] sm:$0xff] %v2584
      %2593 = vst [vmem:[#allocation5 + $0x38] sm:$0x7f] %v2585
      %v2594 = vld [vmem:[#allocation5] ss:$2 sm:$0xff]
      %s2595 = scalar_lea.vmem [#allocation5], 16
      %v2596 = vld [vmem:[%s2595] ss:$2 sm:$0xff]
      %s2597 = scalar_lea.vmem [#allocation5], 32
      %v2598 = vld [vmem:[%s2597] ss:$2 sm:$0xff]
      %s2599 = scalar_lea.vmem [#allocation5], 48
      %v2600 = vld [vmem:[%s2599] ss:$2 sm:$0x7f]
      %s2601 = scalar_lea.vmem [#allocation5], 1
      %v2602 = vld [vmem:[%s2601] ss:$2 sm:$0xff]
      %s2603 = scalar_lea.vmem [#allocation5], 17
      %v2604 = vld [vmem:[%s2603] ss:$2 sm:$0xff]
      %s2605 = scalar_lea.vmem [#allocation5], 33
      %v2606 = vld [vmem:[%s2605] ss:$2 sm:$0xff]
      %s2607 = scalar_lea.vmem [#allocation5], 49
      %v2608 = vld [vmem:[%s2607] ss:$2 sm:$0x7f]
      %s2609 = scalar_lea.vmem [#allocation5], 2
      %v2610 = vld [vmem:[%s2609] ss:$2 sm:$0xff]
      %s2611 = scalar_lea.vmem [#allocation5], 18
      %v2612 = vld [vmem:[%s2611] ss:$2 sm:$0xff]
      %s2613 = scalar_lea.vmem [#allocation5], 34
      %v2614 = vld [vmem:[%s2613] ss:$2 sm:$0xff]
      %s2615 = scalar_lea.vmem [#allocation5], 50
      %v2616 = vld [vmem:[%s2615] ss:$2 sm:$0x7f]
      %v2617 = vld [vmem:[%s5] sm:$0xff]
      %v2618 = vld [vmem:[%s5 + $0x8] sm:$0xff]
      %v2619 = vld [vmem:[%s5 + $0x10] sm:$0xff]
      %v2620 = vld [vmem:[%s5 + $0x18] sm:$0xff]
      %v2621 = vld [vmem:[%s5 + $0x20] sm:$0xff]
      %v2622 = vld [vmem:[%s5 + $0x28] sm:$0xff]
      %v2623 = vld [vmem:[%s5 + $0x30] sm:$0xff]
      %v2624 = vld [vmem:[%s5 + $0x38] sm:$0xff]
      %v2625 = vld [vmem:[%s5 + $0x40] sm:$0xff]
      %v2626 = vld [vmem:[%s5 + $0x48] sm:$0xff]
      %v2627 = vld [vmem:[%s5 + $0x50] sm:$0xff]
      %v2628 = vld [vmem:[%s5 + $0x58] sm:$0xff]
      %v2629 = vld [vmem:[%s5 + $0x60] sm:$0xff]
      %v2630 = vld [vmem:[%s5 + $0x68] sm:$0xff]
      %v2631 = vld [vmem:[%s5 + $0x70] sm:$0xff]
      %v2632 = vld [vmem:[%s5 + $0x78] sm:$0xff]
      %v2633 = vld [vmem:[%s5 + $0x80] sm:$0xff]
      %v2634 = vld [vmem:[%s5 + $0x88] sm:$0xff]
      %v2635 = vld [vmem:[%s5 + $0x90] sm:$0xff]
      %v2636 = vld [vmem:[%s5 + $0x98] sm:$0xff]
      %v2637 = vld [vmem:[%s5 + $0xa0] sm:$0xff]
      %v2638 = vld [vmem:[%s5 + $0xa8] sm:$0xff]
      %v2639 = vld [vmem:[%s5 + $0xb0] sm:$0xff]
      %v2640 = vld [vmem:[%s5 + $0xb8] sm:$0xff]
      %v2641 = vld [vmem:[%s5 + $0xc0] sm:$0xff]
      %v2642 = vld [vmem:[%s5 + $0xc8] sm:$0xff]
      %v2643 = vld [vmem:[%s5 + $0xd0] sm:$0xff]
      %v2644 = vld [vmem:[%s5 + $0xd8] sm:$0xff]
      %v2645 = vld [vmem:[%s5 + $0xe0] sm:$0xff]
      %v2646 = vld [vmem:[%s5 + $0xe8] sm:$0xff]
      %v2647 = vld [vmem:[%s5 + $0xf0] sm:$0xff]
      %v2648 = vld [vmem:[%s5 + $0xf8] sm:$0xff]
      %v2649 = vld [vmem:[%s5 + $0x100] sm:$0xff]
      %v2650 = vld [vmem:[%s5 + $0x108] sm:$0xff]
      %v2651 = vld [vmem:[%s5 + $0x110] sm:$0xff]
      %v2652 = vld [vmem:[%s5 + $0x118] sm:$0xff]
      %v2653 = vld [vmem:[%s5 + $0x120] sm:$0xff]
      %v2654 = vld [vmem:[%s5 + $0x128] sm:$0xff]
      %v2655 = vld [vmem:[%s5 + $0x130] sm:$0xff]
      %v2656 = vld [vmem:[%s5 + $0x138] sm:$0xff]
      %v2657 = vld [vmem:[%s5 + $0x140] sm:$0xff]
      %v2658 = vld [vmem:[%s5 + $0x148] sm:$0xff]
      %v2659 = vld [vmem:[%s5 + $0x150] sm:$0xff]
      %v2660 = vld [vmem:[%s5 + $0x158] sm:$0xff]
      %v2661 = vld [vmem:[%s5 + $0x160] sm:$0xff]
      %v2662 = vld [vmem:[%s5 + $0x168] sm:$0xff]
      %v2663 = vld [vmem:[%s5 + $0x170] sm:$0xff]
      %v2664 = vld [vmem:[%s5 + $0x178] sm:$0xff]
      %v2665 = vld [vmem:[%s5 + $0x180] sm:$0xff]
      %v2666 = vld [vmem:[%s5 + $0x188] sm:$0xff]
      %v2667 = vld [vmem:[%s5 + $0x190] sm:$0xff]
      %v2668 = vld [vmem:[%s5 + $0x198] sm:$0xff]
      %v2669 = vld [vmem:[%s5 + $0x1a0] sm:$0xff]
      %v2670 = vld [vmem:[%s5 + $0x1a8] sm:$0xff]
      %v2671 = vld [vmem:[%s5 + $0x1b0] sm:$0xff]
      %v2672 = vld [vmem:[%s5 + $0x1b8] sm:$0xff]
      %v2673 = vld [vmem:[%s5 + $0x1c0] sm:$0xff]
      %v2674 = vld [vmem:[%s5 + $0x1c8] sm:$0xff]
      %v2675 = vld [vmem:[%s5 + $0x1d0] sm:$0xff]
      %v2676 = vld [vmem:[%s5 + $0x1d8] sm:$0xff]
      %v2677 = vld [vmem:[%s5 + $0x1e0] sm:$0xff]
      %v2678 = vld [vmem:[%s5 + $0x1e8] sm:$0xff]
      %v2679 = vld [vmem:[%s5 + $0x1f0] sm:$0xff]
      %v2680 = vld [vmem:[%s5 + $0x1f8] sm:$0xff]
      %v2681 = vld [vmem:[%s5 + $0x200] sm:$0xff]
      %v2682 = vld [vmem:[%s5 + $0x208] sm:$0xff]
      %v2683 = vld [vmem:[%s5 + $0x210] sm:$0xff]
      %v2684 = vld [vmem:[%s5 + $0x218] sm:$0xff]
      %v2685 = vld [vmem:[%s5 + $0x220] sm:$0xff]
      %v2686 = vld [vmem:[%s5 + $0x228] sm:$0xff]
      %v2687 = vld [vmem:[%s5 + $0x230] sm:$0xff]
      %v2688 = vld [vmem:[%s5 + $0x238] sm:$0xff]
      %v2689 = vld [vmem:[%s5 + $0x240] sm:$0xff]
      %v2690 = vld [vmem:[%s5 + $0x248] sm:$0xff]
      %v2691 = vld [vmem:[%s5 + $0x250] sm:$0xff]
      %v2692 = vld [vmem:[%s5 + $0x258] sm:$0xff]
      %v2693 = vld [vmem:[%s5 + $0x260] sm:$0xff]
      %v2694 = vld [vmem:[%s5 + $0x268] sm:$0xff]
      %v2695 = vld [vmem:[%s5 + $0x270] sm:$0xff]
      %v2696 = vld [vmem:[%s5 + $0x278] sm:$0xff]
      %v2697 = vld [vmem:[%s5 + $0x280] sm:$0xff]
      %v2698 = vld [vmem:[%s5 + $0x288] sm:$0xff]
      %v2699 = vld [vmem:[%s5 + $0x290] sm:$0xff]
      %v2700 = vld [vmem:[%s5 + $0x298] sm:$0xff]
      %v2701 = vld [vmem:[%s5 + $0x2a0] sm:$0xff]
      %v2702 = vld [vmem:[%s5 + $0x2a8] sm:$0xff]
      %v2703 = vld [vmem:[%s5 + $0x2b0] sm:$0xff]
      %v2704 = vld [vmem:[%s5 + $0x2b8] sm:$0xff]
      %v2705 = vld [vmem:[%s5 + $0x2c0] sm:$0xff]
      %v2706 = vld [vmem:[%s5 + $0x2c8] sm:$0xff]
      %v2707 = vld [vmem:[%s5 + $0x2d0] sm:$0xff]
      %v2708 = vld [vmem:[%s5 + $0x2d8] sm:$0xff]
      %v2709 = vld [vmem:[%s5 + $0x2e0] sm:$0xff]
      %v2710 = vld [vmem:[%s5 + $0x2e8] sm:$0xff]
      %v2711 = vld [vmem:[%s5 + $0x2f0] sm:$0xff]
      %v2712 = vld [vmem:[%s5 + $0x2f8] sm:$0xff]
      %v2713 = vld [vmem:[%s6] sm:$0x3]
      %v2715 = vlaneseq
      %v2716 = vshrl.u32 %v2715, 7
      %v2717 = vsub.s32 0, %v2716
      %v2718 = vrot.slane %v2713, %v2717
      %v2719 = vlaneseq
      %v2720 = vshrl.u32 %v2719, 7
      %v2721 = vsub.s32 1, %v2720
      %v2722 = vrot.slane %v2713, %v2721
      %2725 = vmatprep.subr.mxu0 %v2618
      %2726 = vmatpush1.msra.mxu0 %v2617
      %2727 = vmatprep.subr.mxu0 %v2620
      %2728 = vmatpush1.msra.mxu0 %v2619
      %2729 = vmatprep.subr.mxu0 %v2622
      %2730 = vmatpush1.msra.mxu0 %v2621
      %2731 = vmatprep.subr.mxu0 %v2624
      %2732 = vmatpush1.msra.mxu0 %v2623
      %2733 = vmatprep.subr.mxu0 %v2626
      %2734 = vmatpush1.msra.mxu0 %v2625
      %2735 = vmatprep.subr.mxu0 %v2628
      %2736 = vmatpush1.msra.mxu0 %v2627
      %2737 = vmatprep.subr.mxu0 %v2630
      %2738 = vmatpush1.msra.mxu0 %v2629
      %2739 = vmatprep.subr.mxu0 %v2632
      %2740 = vmatpush1.msra.mxu0 %v2631
      %2741 = vmatprep.subr.mxu0 %v2634
      %2742 = vmatpush1.msra.mxu0 %v2633
      %2743 = vmatprep.subr.mxu0 %v2636
      %2744 = vmatpush1.msra.mxu0 %v2635
      %2745 = vmatprep.subr.mxu0 %v2638
      %2746 = vmatpush1.msra.mxu0 %v2637
      %2747 = vmatprep.subr.mxu0 %v2640
      %2748 = vmatpush1.msra.mxu0 %v2639
      %2749 = vmatprep.subr.mxu0 %v2642
      %2750 = vmatpush1.msra.mxu0 %v2641
      %2751 = vmatprep.subr.mxu0 %v2644
      %2752 = vmatpush1.msra.mxu0 %v2643
      %2753 = vmatprep.subr.mxu0 %v2646
      %2754 = vmatpush1.msra.mxu0 %v2645
      %2755 = vmatprep.subr.mxu0 %v2648
      %2756 = vmatpush1.msra.mxu0 %v2647
      %2757 = vmatprep.subr.mxu0 %v2650
      %2758 = vmatpush1.msra.mxu0 %v2649
      %2759 = vmatprep.subr.mxu0 %v2652
      %2760 = vmatpush1.msra.mxu0 %v2651
      %2761 = vmatprep.subr.mxu0 %v2654
      %2762 = vmatpush1.msra.mxu0 %v2653
      %2763 = vmatprep.subr.mxu0 %v2656
      %2764 = vmatpush1.msra.mxu0 %v2655
      %2765 = vmatprep.subr.mxu0 %v2658
      %2766 = vmatpush1.msra.mxu0 %v2657
      %2767 = vmatprep.subr.mxu0 %v2660
      %2768 = vmatpush1.msra.mxu0 %v2659
      %2769 = vmatprep.subr.mxu0 %v2662
      %2770 = vmatpush1.msra.mxu0 %v2661
      %2771 = vmatprep.subr.mxu0 %v2664
      %2772 = vmatpush1.msra.mxu0 %v2663
      %2773 = vmatprep.subr.mxu0 %v2666
      %2774 = vmatpush1.msra.mxu0 %v2665
      %2775 = vmatprep.subr.mxu0 %v2668
      %2776 = vmatpush1.msra.mxu0 %v2667
      %2777 = vmatprep.subr.mxu0 %v2670
      %2778 = vmatpush1.msra.mxu0 %v2669
      %2779 = vmatprep.subr.mxu0 %v2672
      %2780 = vmatpush1.msra.mxu0 %v2671
      %2781 = vmatprep.subr.mxu0 %v2674
      %2782 = vmatpush1.msra.mxu0 %v2673
      %2783 = vmatprep.subr.mxu0 %v2676
      %2784 = vmatpush1.msra.mxu0 %v2675
      %2785 = vmatprep.subr.mxu0 %v2678
      %2786 = vmatpush1.msra.mxu0 %v2677
      %2787 = vmatprep.subr.mxu0 %v2680
      %2788 = vmatpush1.msra.mxu0 %v2679
      %2789 = vmatprep.mubr.f32.mxu0 %v2602
      %2790 = vmatmul.mubr.f32.gmra.mrb[0].mxu0 %v2594
      %v2791 = vpop.f32.mrb[0].mxu0
      %v2792 = vadd.f32 %v2718, %v2791
      %v2793 = vpop.f32.mrb[0].mxu0
      %v2794 = vadd.f32 %v2722, %v2793
      %2795 = vmatprep.mubr.f32.mxu0 %v2604
      %2796 = vmatmul.mubr.f32.gmra.mrb[0].mxu0 %v2596
      %v2797 = vpop.f32.mrb[0].mxu0
      %v2798 = vadd.f32 %v2718, %v2797
      %v2799 = vpop.f32.mrb[0].mxu0
      %v2800 = vadd.f32 %v2722, %v2799
      %2801 = vmatprep.mubr.f32.mxu0 %v2606
      %2802 = vmatmul.mubr.f32.gmra.mrb[0].mxu0 %v2598
      %v2803 = vpop.f32.mrb[0].mxu0
      %v2804 = vadd.f32 %v2718, %v2803
      %v2805 = vpop.f32.mrb[0].mxu0
      %v2806 = vadd.f32 %v2722, %v2805
      %2807 = vmatprep.mubr.f32.mxu0 %v2608
      %2808 = vmatmul.mubr.f32.gmra.mrb[0].mxu0 %v2600
      %v2809 = vpop.f32.mrb[0].mxu0
      %v2810 = vadd.f32 %v2718, %v2809
      %v2811 = vpop.f32.mrb[0].mxu0
      %v2812 = vadd.f32 %v2722, %v2811
      %2813 = vdwg.mxu0
      %2814 = vmatprep.subr.mxu0 %v2682
      %2815 = vmatpush1.msra.mxu0 %v2681
      %2816 = vmatprep.subr.mxu0 %v2684
      %2817 = vmatpush1.msra.mxu0 %v2683
      %2818 = vmatprep.subr.mxu0 %v2686
      %2819 = vmatpush1.msra.mxu0 %v2685
      %2820 = vmatprep.subr.mxu0 %v2688
      %2821 = vmatpush1.msra.mxu0 %v2687
      %2822 = vmatprep.subr.mxu0 %v2690
      %2823 = vmatpush1.msra.mxu0 %v2689
      %2824 = vmatprep.subr.mxu0 %v2692
      %2825 = vmatpush1.msra.mxu0 %v2691
      %2826 = vmatprep.subr.mxu0 %v2694
      %2827 = vmatpush1.msra.mxu0 %v2693
      %2828 = vmatprep.subr.mxu0 %v2696
      %2829 = vmatpush1.msra.mxu0 %v2695
      %2830 = vmatprep.subr.mxu0 %v2698
      %2831 = vmatpush1.msra.mxu0 %v2697
      %2832 = vmatprep.subr.mxu0 %v2700
      %2833 = vmatpush1.msra.mxu0 %v2699
      %2834 = vmatprep.subr.mxu0 %v2702
      %2835 = vmatpush1.msra.mxu0 %v2701
      %2836 = vmatprep.subr.mxu0 %v2704
      %2837 = vmatpush1.msra.mxu0 %v2703
      %2838 = vmatprep.subr.mxu0 %v2706
      %2839 = vmatpush1.msra.mxu0 %v2705
      %2840 = vmatprep.subr.mxu0 %v2708
      %2841 = vmatpush1.msra.mxu0 %v2707
      %2842 = vmatprep.subr.mxu0 %v2710
      %2843 = vmatpush1.msra.mxu0 %v2709
      %2844 = vmatprep.subr.mxu0 %v2712
      %2845 = vmatpush1.msra.mxu0 %v2711
      %2846 = vmatprep.subr.mxu0 0.0
      %2847 = vmatpush1.msra.mxu0 0.0
      %2848 = vmatprep.subr.mxu0 0.0
      %2849 = vmatpush1.msra.mxu0 0.0
      %2850 = vmatprep.subr.mxu0 0.0
      %2851 = vmatpush1.msra.mxu0 0.0
      %2852 = vmatprep.subr.mxu0 0.0
      %2853 = vmatpush1.msra.mxu0 0.0
      %2854 = vmatprep.subr.mxu0 0.0
      %2855 = vmatpush1.msra.mxu0 0.0
      %2856 = vmatprep.subr.mxu0 0.0
      %2857 = vmatpush1.msra.mxu0 0.0
      %2858 = vmatprep.subr.mxu0 0.0
      %2859 = vmatpush1.msra.mxu0 0.0
      %2860 = vmatprep.subr.mxu0 0.0
      %2861 = vmatpush1.msra.mxu0 0.0
      %2862 = vmatprep.subr.mxu0 0.0
      %2863 = vmatpush1.msra.mxu0 0.0
      %2864 = vmatprep.subr.mxu0 0.0
      %2865 = vmatpush1.msra.mxu0 0.0
      %2866 = vmatprep.subr.mxu0 0.0
      %2867 = vmatpush1.msra.mxu0 0.0
      %2868 = vmatprep.subr.mxu0 0.0
      %2869 = vmatpush1.msra.mxu0 0.0
      %2870 = vmatprep.subr.mxu0 0.0
      %2871 = vmatpush1.msra.mxu0 0.0
      %2872 = vmatprep.subr.mxu0 0.0
      %2873 = vmatpush1.msra.mxu0 0.0
      %2874 = vmatprep.subr.mxu0 0.0
      %2875 = vmatpush1.msra.mxu0 0.0
      %2876 = vmatprep.subr.mxu0 0.0
      %2877 = vmatpush1.msra.mxu0 0.0
      %2878 = vmatprep.mubr.f32.mxu0 0.0
      %2879 = vmatmul.mubr.f32.gmra.mrb[0].mxu0 %v2610
      %v2880 = vpop.f32.mrb[0].mxu0
      %v2881 = vadd.f32 %v2792, %v2880
      %v2882 = vpop.f32.mrb[0].mxu0
      %v2883 = vadd.f32 %v2794, %v2882
      %2884 = vmatprep.mubr.f32.mxu0 0.0
      %2885 = vmatmul.mubr.f32.gmra.mrb[0].mxu0 %v2612
      %v2886 = vpop.f32.mrb[0].mxu0
      %v2887 = vadd.f32 %v2798, %v2886
      %v2888 = vpop.f32.mrb[0].mxu0
      %v2889 = vadd.f32 %v2800, %v2888
      %2890 = vmatprep.mubr.f32.mxu0 0.0
      %2891 = vmatmul.mubr.f32.gmra.mrb[0].mxu0 %v2614
      %v2892 = vpop.f32.mrb[0].mxu0
      %v2893 = vadd.f32 %v2804, %v2892
      %v2894 = vpop.f32.mrb[0].mxu0
      %v2895 = vadd.f32 %v2806, %v2894
      %2896 = vmatprep.mubr.f32.mxu0 0.0
      %2897 = vmatmul.mubr.f32.gmra.mrb[0].mxu0 %v2616
      %v2898 = vpop.f32.mrb[0].mxu0
      %v2899 = vadd.f32 %v2810, %v2898
      %v2900 = vpop.f32.mrb[0].mxu0
      %v2901 = vadd.f32 %v2812, %v2900
      %2902 = vdwg.mxu0
      %2903 = vst [vmem:[#allocation6] sm:$0xff] %v2881
      %2904 = vst [vmem:[#allocation6 + $0x8] sm:$0xff] %v2883
      %2905 = vst [vmem:[#allocation6 + $0x10] sm:$0xff] %v2887
      %2906 = vst [vmem:[#allocation6 + $0x18] sm:$0xff] %v2889
      %2907 = vst [vmem:[#allocation6 + $0x20] sm:$0xff] %v2893
      %2908 = vst [vmem:[#allocation6 + $0x28] sm:$0xff] %v2895
      %2909 = vst [vmem:[#allocation6 + $0x30] sm:$0x7f] %v2899
      %2910 = vst [vmem:[#allocation6 + $0x38] sm:$0x7f] %v2901
      %v2911 = vld [vmem:[#allocation6] sm:$0xff]
      %v2912 = vld [vmem:[#allocation6 + $0x8] sm:$0xff]
      %v2913 = vld [vmem:[#allocation6 + $0x10] sm:$0xff]
      %v2914 = vld [vmem:[#allocation6 + $0x18] sm:$0xff]
      %v2915 = vld [vmem:[#allocation6 + $0x20] sm:$0xff]
      %v2916 = vld [vmem:[#allocation6 + $0x28] sm:$0xff]
      %v2917 = vld [vmem:[#allocation6 + $0x30] sm:$0x3f]
      %v2918 = vld [vmem:[#allocation6 + $0x38] sm:$0x3f]
      %v2919 = vld [vmem:[#allocation6] sm:$0xfe]
      %v2920 = vld [vmem:[#allocation6 + $0x8] sm:$0xfe]
      %v2921 = vld [vmem:[#allocation6 + $0x30] sm:$0x7f]
      %v2922 = vld [vmem:[#allocation6 + $0x38] sm:$0x7f]
      %vm2931 = vcmask 1046528
      %v2932 = vrot.slane %v2919, 1
      %v2933 = vrot.slane %v2913, 1
      %v2934 = vsel %vm2931, %v2932, %v2933
      %v2935 = vrot.slane %v2920, 1
      %v2936 = vrot.slane %v2914, 1
      %v2937 = vsel %vm2931, %v2935, %v2936
      %v2938 = vrot.slane %v2915, 1
      %v2939 = vsel %vm2931, %v2933, %v2938
      %v2940 = vrot.slane %v2916, 1
      %v2941 = vsel %vm2931, %v2936, %v2940
      %v2942 = vrot.slane %v2921, 1
      %v2943 = vsel %vm2931, %v2938, %v2942
      %v2944 = vrot.slane %v2922, 1
      %v2945 = vsel %vm2931, %v2940, %v2944
      %v2954 = vmax.f32 %v2911, %v2934
      %v2955 = vmax.f32 %v2912, %v2937
      %v2956 = vmax.f32 %v2913, %v2939
      %v2957 = vmax.f32 %v2914, %v2941
      %v2958 = vmax.f32 %v2915, %v2943
      %v2959 = vmax.f32 %v2916, %v2945
      %v2960 = vmax.f32 %v2917, %v2942
      %v2961 = vmax.f32 %v2918, %v2944
      %v2962 = vld [vmem:[%s7] sm:$0xff]
      %v2963 = vld [vmem:[%s7 + $0x8] sm:$0xff]
      %v2964 = vld [vmem:[%s7 + $0x10] sm:$0xff]
      %v2965 = vld [vmem:[%s7 + $0x18] sm:$0xff]
      %v2966 = vld [vmem:[%s7 + $0x20] sm:$0xff]
      %v2967 = vld [vmem:[%s7 + $0x28] sm:$0xff]
      %v2968 = vld [vmem:[%s7 + $0x30] sm:$0xff]
      %v2969 = vld [vmem:[%s7 + $0x38] sm:$0xff]
      %v2970 = vld [vmem:[%s7 + $0x40] sm:$0xff]
      %v2971 = vld [vmem:[%s7 + $0x48] sm:$0xff]
      %v2972 = vld [vmem:[%s7 + $0x50] sm:$0xff]
      %v2973 = vld [vmem:[%s7 + $0x58] sm:$0xff]
      %v2974 = vld [vmem:[%s7 + $0x60] sm:$0xff]
      %v2975 = vld [vmem:[%s7 + $0x68] sm:$0xff]
      %v2976 = vld [vmem:[%s7 + $0x70] sm:$0xff]
      %v2977 = vld [vmem:[%s7 + $0x78] sm:$0xff]
      %v2978 = vld [vmem:[%s7 + $0x80] sm:$0xff]
      %v2979 = vld [vmem:[%s7 + $0x88] sm:$0xff]
      %v2980 = vld [vmem:[%s7 + $0x90] sm:$0xff]
      %v2981 = vld [vmem:[%s7 + $0x98] sm:$0xff]
      %v2982 = vld [vmem:[%s7 + $0xa0] sm:$0xff]
      %v2983 = vld [vmem:[%s7 + $0xa8] sm:$0xff]
      %v2984 = vld [vmem:[%s7 + $0xb0] sm:$0xff]
      %v2985 = vld [vmem:[%s7 + $0xb8] sm:$0xff]
      %v2986 = vld [vmem:[%s7 + $0xc0] sm:$0xff]
      %v2987 = vld [vmem:[%s7 + $0xc8] sm:$0xff]
      %v2988 = vld [vmem:[%s7 + $0xd0] sm:$0xff]
      %v2989 = vld [vmem:[%s7 + $0xd8] sm:$0xff]
      %v2990 = vld [vmem:[%s7 + $0xe0] sm:$0xff]
      %v2991 = vld [vmem:[%s7 + $0xe8] sm:$0xff]
      %v2992 = vld [vmem:[%s7 + $0xf0] sm:$0xff]
      %v2993 = vld [vmem:[%s7 + $0xf8] sm:$0xff]
      %v2994 = vld [vmem:[%s7 + $0x100] sm:$0xff]
      %v2995 = vld [vmem:[%s7 + $0x108] sm:$0xff]
      %v2996 = vld [vmem:[%s7 + $0x110] sm:$0xff]
      %v2997 = vld [vmem:[%s7 + $0x118] sm:$0xff]
      %v2998 = vld [vmem:[%s7 + $0x120] sm:$0xff]
      %v2999 = vld [vmem:[%s7 + $0x128] sm:$0xff]
      %v3000 = vld [vmem:[%s7 + $0x130] sm:$0xff]
      %v3001 = vld [vmem:[%s7 + $0x138] sm:$0xff]
      %v3002 = vld [vmem:[%s7 + $0x140] sm:$0xff]
      %v3003 = vld [vmem:[%s7 + $0x148] sm:$0xff]
      %v3004 = vld [vmem:[%s7 + $0x150] sm:$0xff]
      %v3005 = vld [vmem:[%s7 + $0x158] sm:$0xff]
      %v3006 = vld [vmem:[%s7 + $0x160] sm:$0xff]
      %v3007 = vld [vmem:[%s7 + $0x168] sm:$0xff]
      %v3008 = vld [vmem:[%s7 + $0x170] sm:$0xff]
      %v3009 = vld [vmem:[%s7 + $0x178] sm:$0xff]
      %v3010 = vld [vmem:[%s7 + $0x180] sm:$0xff]
      %v3011 = vld [vmem:[%s7 + $0x188] sm:$0xff]
      %v3012 = vld [vmem:[%s7 + $0x190] sm:$0xff]
      %v3013 = vld [vmem:[%s7 + $0x198] sm:$0xff]
      %v3014 = vld [vmem:[%s7 + $0x1a0] sm:$0xff]
      %v3015 = vld [vmem:[%s7 + $0x1a8] sm:$0xff]
      %v3016 = vld [vmem:[%s7 + $0x1b0] sm:$0xff]
      %v3017 = vld [vmem:[%s7 + $0x1b8] sm:$0xff]
      %v3018 = vld [vmem:[%s7 + $0x1c0] sm:$0xff]
      %v3019 = vld [vmem:[%s7 + $0x1c8] sm:$0xff]
      %v3020 = vld [vmem:[%s7 + $0x1d0] sm:$0xff]
      %v3021 = vld [vmem:[%s7 + $0x1d8] sm:$0xff]
      %v3022 = vld [vmem:[%s7 + $0x1e0] sm:$0xff]
      %v3023 = vld [vmem:[%s7 + $0x1e8] sm:$0xff]
      %v3024 = vld [vmem:[%s7 + $0x1f0] sm:$0xff]
      %v3025 = vld [vmem:[%s7 + $0x1f8] sm:$0xff]
      %vm3026 = vcmask 244736
      %v3028 = vsel %vm3026, %v2962, 0
      %v3031 = vsel %vm3026, %v2963, 0
      %v3034 = vsel %vm3026, %v2964, 0
      %v3037 = vsel %vm3026, %v2965, 0
      %v3040 = vsel %vm3026, %v2966, 0
      %v3043 = vsel %vm3026, %v2967, 0
      %v3046 = vsel %vm3026, %v2968, 0
      %v3049 = vsel %vm3026, %v2969, 0
      %v3052 = vsel %vm3026, %v2970, 0
      %v3055 = vsel %vm3026, %v2971, 0
      %v3058 = vsel %vm3026, %v2972, 0
      %v3061 = vsel %vm3026, %v2973, 0
      %v3064 = vsel %vm3026, %v2974, 0
      %v3067 = vsel %vm3026, %v2975, 0
      %v3070 = vsel %vm3026, %v2976, 0
      %v3073 = vsel %vm3026, %v2977, 0
      %v3076 = vsel %vm3026, %v2978, 0
      %v3079 = vsel %vm3026, %v2979, 0
      %v3082 = vsel %vm3026, %v2980, 0
      %v3085 = vsel %vm3026, %v2981, 0
      %v3088 = vsel %vm3026, %v2982, 0
      %v3091 = vsel %vm3026, %v2983, 0
      %v3094 = vsel %vm3026, %v2984, 0
      %v3097 = vsel %vm3026, %v2985, 0
      %v3100 = vsel %vm3026, %v2986, 0
      %v3103 = vsel %vm3026, %v2987, 0
      %v3106 = vsel %vm3026, %v2988, 0
      %v3109 = vsel %vm3026, %v2989, 0
      %v3112 = vsel %vm3026, %v2990, 0
      %v3115 = vsel %vm3026, %v2991, 0
      %v3118 = vsel %vm3026, %v2992, 0
      %v3121 = vsel %vm3026, %v2993, 0
      %v3124 = vsel %vm3026, %v2994, 0
      %v3127 = vsel %vm3026, %v2995, 0
      %v3130 = vsel %vm3026, %v2996, 0
      %v3133 = vsel %vm3026, %v2997, 0
      %v3136 = vsel %vm3026, %v2998, 0
      %v3139 = vsel %vm3026, %v2999, 0
      %v3142 = vsel %vm3026, %v3000, 0
      %v3145 = vsel %vm3026, %v3001, 0
      %v3148 = vsel %vm3026, %v3002, 0
      %v3151 = vsel %vm3026, %v3003, 0
      %v3154 = vsel %vm3026, %v3004, 0
      %v3157 = vsel %vm3026, %v3005, 0
      %v3160 = vsel %vm3026, %v3006, 0
      %v3163 = vsel %vm3026, %v3007, 0
      %v3166 = vsel %vm3026, %v3008, 0
      %v3169 = vsel %vm3026, %v3009, 0
      %v3172 = vsel %vm3026, %v3010, 0
      %v3175 = vsel %vm3026, %v3011, 0
      %v3178 = vsel %vm3026, %v3012, 0
      %v3181 = vsel %vm3026, %v3013, 0
      %v3184 = vsel %vm3026, %v3014, 0
      %v3187 = vsel %vm3026, %v3015, 0
      %v3190 = vsel %vm3026, %v3016, 0
      %v3193 = vsel %vm3026, %v3017, 0
      %v3196 = vsel %vm3026, %v3018, 0
      %v3199 = vsel %vm3026, %v3019, 0
      %v3202 = vsel %vm3026, %v3020, 0
      %v3205 = vsel %vm3026, %v3021, 0
      %v3208 = vsel %vm3026, %v3022, 0
      %v3211 = vsel %vm3026, %v3023, 0
      %v3214 = vsel %vm3026, %v3024, 0
      %v3217 = vsel %vm3026, %v3025, 0
      %vm3219 = vcmask 1045504
      %v3221 = vsel %vm3219, %v2960, 0
      %v3224 = vsel %vm3219, %v2961, 0
      %3226 = vmatprep.subr.mxu0 %v2955
      %3227 = vmatpush1.msra.mxu0 %v2954
      %3228 = vmatprep.subr.mxu0 %v2957
      %3229 = vmatpush1.msra.mxu0 %v2956
      %3230 = vmatprep.subr.mxu0 %v2959
      %3231 = vmatpush1.msra.mxu0 %v2958
      %3232 = vmatprep.subr.mxu0 %v3224
      %3233 = vmatpush1.msra.mxu0 %v3221
      %3234 = vmatprep.subr.mxu0 0.0
      %3235 = vmatpush1.msra.mxu0 0.0
      %3236 = vmatprep.subr.mxu0 0.0
      %3237 = vmatpush1.msra.mxu0 0.0
      %3238 = vmatprep.subr.mxu0 0.0
      %3239 = vmatpush1.msra.mxu0 0.0
      %3240 = vmatprep.subr.mxu0 0.0
      %3241 = vmatpush1.msra.mxu0 0.0
      %3242 = vmatprep.subr.mxu0 0.0
      %3243 = vmatpush1.msra.mxu0 0.0
      %3244 = vmatprep.subr.mxu0 0.0
      %3245 = vmatpush1.msra.mxu0 0.0
      %3246 = vmatprep.subr.mxu0 0.0
      %3247 = vmatpush1.msra.mxu0 0.0
      %3248 = vmatprep.subr.mxu0 0.0
      %3249 = vmatpush1.msra.mxu0 0.0
      %3250 = vmatprep.subr.mxu0 0.0
      %3251 = vmatpush1.msra.mxu0 0.0
      %3252 = vmatprep.subr.mxu0 0.0
      %3253 = vmatpush1.msra.mxu0 0.0
      %3254 = vmatprep.subr.mxu0 0.0
      %3255 = vmatpush1.msra.mxu0 0.0
      %3256 = vmatprep.subr.mxu0 0.0
      %3257 = vmatpush1.msra.mxu0 0.0
      %3258 = vmatprep.subr.mxu0 0.0
      %3259 = vmatpush1.msra.mxu0 0.0
      %3260 = vmatprep.subr.mxu0 0.0
      %3261 = vmatpush1.msra.mxu0 0.0
      %3262 = vmatprep.subr.mxu0 0.0
      %3263 = vmatpush1.msra.mxu0 0.0
      %3264 = vmatprep.subr.mxu0 0.0
      %3265 = vmatpush1.msra.mxu0 0.0
      %3266 = vmatprep.subr.mxu0 0.0
      %3267 = vmatpush1.msra.mxu0 0.0
      %3268 = vmatprep.subr.mxu0 0.0
      %3269 = vmatpush1.msra.mxu0 0.0
      %3270 = vmatprep.subr.mxu0 0.0
      %3271 = vmatpush1.msra.mxu0 0.0
      %3272 = vmatprep.subr.mxu0 0.0
      %3273 = vmatpush1.msra.mxu0 0.0
      %3274 = vmatprep.subr.mxu0 0.0
      %3275 = vmatpush1.msra.mxu0 0.0
      %3276 = vmatprep.subr.mxu0 0.0
      %3277 = vmatpush1.msra.mxu0 0.0
      %3278 = vmatprep.subr.mxu0 0.0
      %3279 = vmatpush1.msra.mxu0 0.0
      %3280 = vmatprep.subr.mxu0 0.0
      %3281 = vmatpush1.msra.mxu0 0.0
      %3282 = vmatprep.subr.mxu0 0.0
      %3283 = vmatpush1.msra.mxu0 0.0
      %3284 = vmatprep.subr.mxu0 0.0
      %3285 = vmatpush1.msra.mxu0 0.0
      %3286 = vmatprep.subr.mxu0 0.0
      %3287 = vmatpush1.msra.mxu0 0.0
      %3288 = vmatprep.subr.mxu0 0.0
      %3289 = vmatpush1.msra.mxu0 0.0
      %3290 = vmatprep.mubr.f32.mxu0 0.0
      %3291 = vmatmul.mubr.f32.gmra.mrb[0].mxu0 %v3028
      %v3292 = vpop.f32.mrb[0].mxu0
      %v3293 = vadd.f32 0.0, %v3292
      %v3294 = vpop.f32.mrb[0].mxu0
      %v3295 = vadd.f32 0.0, %v3294
      %3296 = vmatprep.mubr.f32.mxu0 0.0
      %3297 = vmatmul.mubr.f32.gmra.mrb[0].mxu0 %v3031
      %v3298 = vpop.f32.mrb[0].mxu0
      %v3299 = vadd.f32 0.0, %v3298
      %v3300 = vpop.f32.mrb[0].mxu0
      %v3301 = vadd.f32 0.0, %v3300
      %3302 = vmatprep.mubr.f32.mxu0 0.0
      %3303 = vmatmul.mubr.f32.gmra.mrb[0].mxu0 %v3034
      %v3304 = vpop.f32.mrb[0].mxu0
      %v3305 = vadd.f32 0.0, %v3304
      %v3306 = vpop.f32.mrb[0].mxu0
      %v3307 = vadd.f32 0.0, %v3306
      %3308 = vmatprep.mubr.f32.mxu0 0.0
      %3309 = vmatmul.mubr.f32.gmra.mrb[0].mxu0 %v3037
      %v3310 = vpop.f32.mrb[0].mxu0
      %v3311 = vadd.f32 0.0, %v3310
      %v3312 = vpop.f32.mrb[0].mxu0
      %v3313 = vadd.f32 0.0, %v3312
      %3314 = vmatprep.mubr.f32.mxu0 0.0
      %3315 = vmatmul.mubr.f32.gmra.mrb[0].mxu0 %v3040
      %v3316 = vpop.f32.mrb[0].mxu0
      %v3317 = vadd.f32 0.0, %v3316
      %v3318 = vpop.f32.mrb[0].mxu0
      %v3319 = vadd.f32 0.0, %v3318
      %3320 = vmatprep.mubr.f32.mxu0 0.0
      %3321 = vmatmul.mubr.f32.gmra.mrb[0].mxu0 %v3043
      %v3322 = vpop.f32.mrb[0].mxu0
      %v3323 = vadd.f32 0.0, %v3322
      %v3324 = vpop.f32.mrb[0].mxu0
      %v3325 = vadd.f32 0.0, %v3324
      %3326 = vmatprep.mubr.f32.mxu0 0.0
      %3327 = vmatmul.mubr.f32.gmra.mrb[0].mxu0 %v3046
      %v3328 = vpop.f32.mrb[0].mxu0
      %v3329 = vadd.f32 0.0, %v3328
      %v3330 = vpop.f32.mrb[0].mxu0
      %v3331 = vadd.f32 0.0, %v3330
      %3332 = vmatprep.mubr.f32.mxu0 0.0
      %3333 = vmatmul.mubr.f32.gmra.mrb[0].mxu0 %v3049
      %v3334 = vpop.f32.mrb[0].mxu0
      %v3335 = vadd.f32 0.0, %v3334
      %v3336 = vpop.f32.mrb[0].mxu0
      %v3337 = vadd.f32 0.0, %v3336
      %3338 = vmatprep.mubr.f32.mxu0 0.0
      %3339 = vmatmul.mubr.f32.gmra.mrb[0].mxu0 %v3052
      %v3340 = vpop.f32.mrb[0].mxu0
      %v3341 = vadd.f32 0.0, %v3340
      %v3342 = vpop.f32.mrb[0].mxu0
      %v3343 = vadd.f32 0.0, %v3342
      %3344 = vmatprep.mubr.f32.mxu0 0.0
      %3345 = vmatmul.mubr.f32.gmra.mrb[0].mxu0 %v3055
      %v3346 = vpop.f32.mrb[0].mxu0
      %v3347 = vadd.f32 0.0, %v3346
      %v3348 = vpop.f32.mrb[0].mxu0
      %v3349 = vadd.f32 0.0, %v3348
      %3350 = vmatprep.mubr.f32.mxu0 0.0
      %3351 = vmatmul.mubr.f32.gmra.mrb[0].mxu0 %v3058
      %v3352 = vpop.f32.mrb[0].mxu0
      %v3353 = vadd.f32 0.0, %v3352
      %v3354 = vpop.f32.mrb[0].mxu0
      %v3355 = vadd.f32 0.0, %v3354
      %3356 = vmatprep.mubr.f32.mxu0 0.0
      %3357 = vmatmul.mubr.f32.gmra.mrb[0].mxu0 %v3061
      %v3358 = vpop.f32.mrb[0].mxu0
      %v3359 = vadd.f32 0.0, %v3358
      %v3360 = vpop.f32.mrb[0].mxu0
      %v3361 = vadd.f32 0.0, %v3360
      %3362 = vmatprep.mubr.f32.mxu0 0.0
      %3363 = vmatmul.mubr.f32.gmra.mrb[0].mxu0 %v3064
      %v3364 = vpop.f32.mrb[0].mxu0
      %v3365 = vadd.f32 0.0, %v3364
      %v3366 = vpop.f32.mrb[0].mxu0
      %v3367 = vadd.f32 0.0, %v3366
      %3368 = vmatprep.mubr.f32.mxu0 0.0
      %3369 = vmatmul.mubr.f32.gmra.mrb[0].mxu0 %v3067
      %v3370 = vpop.f32.mrb[0].mxu0
      %v3371 = vadd.f32 0.0, %v3370
      %v3372 = vpop.f32.mrb[0].mxu0
      %v3373 = vadd.f32 0.0, %v3372
      %3374 = vmatprep.mubr.f32.mxu0 0.0
      %3375 = vmatmul.mubr.f32.gmra.mrb[0].mxu0 %v3070
      %v3376 = vpop.f32.mrb[0].mxu0
      %v3377 = vadd.f32 0.0, %v3376
      %v3378 = vpop.f32.mrb[0].mxu0
      %v3379 = vadd.f32 0.0, %v3378
      %3380 = vmatprep.mubr.f32.mxu0 0.0
      %3381 = vmatmul.mubr.f32.gmra.mrb[0].mxu0 %v3073
      %v3382 = vpop.f32.mrb[0].mxu0
      %v3383 = vadd.f32 0.0, %v3382
      %v3384 = vpop.f32.mrb[0].mxu0
      %v3385 = vadd.f32 0.0, %v3384
      %3386 = vmatprep.mubr.f32.mxu0 0.0
      %3387 = vmatmul.mubr.f32.gmra.mrb[0].mxu0 %v3076
      %v3388 = vpop.f32.mrb[0].mxu0
      %v3389 = vadd.f32 0.0, %v3388
      %v3390 = vpop.f32.mrb[0].mxu0
      %v3391 = vadd.f32 0.0, %v3390
      %3392 = vmatprep.mubr.f32.mxu0 0.0
      %3393 = vmatmul.mubr.f32.gmra.mrb[0].mxu0 %v3079
      %v3394 = vpop.f32.mrb[0].mxu0
      %v3395 = vadd.f32 0.0, %v3394
      %v3396 = vpop.f32.mrb[0].mxu0
      %v3397 = vadd.f32 0.0, %v3396
      %3398 = vmatprep.mubr.f32.mxu0 0.0
      %3399 = vmatmul.mubr.f32.gmra.mrb[0].mxu0 %v3082
      %v3400 = vpop.f32.mrb[0].mxu0
      %v3401 = vadd.f32 0.0, %v3400
      %v3402 = vpop.f32.mrb[0].mxu0
      %v3403 = vadd.f32 0.0, %v3402
      %3404 = vmatprep.mubr.f32.mxu0 0.0
      %3405 = vmatmul.mubr.f32.gmra.mrb[0].mxu0 %v3085
      %v3406 = vpop.f32.mrb[0].mxu0
      %v3407 = vadd.f32 0.0, %v3406
      %v3408 = vpop.f32.mrb[0].mxu0
      %v3409 = vadd.f32 0.0, %v3408
      %3410 = vmatprep.mubr.f32.mxu0 0.0
      %3411 = vmatmul.mubr.f32.gmra.mrb[0].mxu0 %v3088
      %v3412 = vpop.f32.mrb[0].mxu0
      %v3413 = vadd.f32 0.0, %v3412
      %v3414 = vpop.f32.mrb[0].mxu0
      %v3415 = vadd.f32 0.0, %v3414
      %3416 = vmatprep.mubr.f32.mxu0 0.0
      %3417 = vmatmul.mubr.f32.gmra.mrb[0].mxu0 %v3091
      %v3418 = vpop.f32.mrb[0].mxu0
      %v3419 = vadd.f32 0.0, %v3418
      %v3420 = vpop.f32.mrb[0].mxu0
      %v3421 = vadd.f32 0.0, %v3420
      %3422 = vmatprep.mubr.f32.mxu0 0.0
      %3423 = vmatmul.mubr.f32.gmra.mrb[0].mxu0 %v3094
      %v3424 = vpop.f32.mrb[0].mxu0
      %v3425 = vadd.f32 0.0, %v3424
      %v3426 = vpop.f32.mrb[0].mxu0
      %v3427 = vadd.f32 0.0, %v3426
      %3428 = vmatprep.mubr.f32.mxu0 0.0
      %3429 = vmatmul.mubr.f32.gmra.mrb[0].mxu0 %v3097
      %v3430 = vpop.f32.mrb[0].mxu0
      %v3431 = vadd.f32 0.0, %v3430
      %v3432 = vpop.f32.mrb[0].mxu0
      %v3433 = vadd.f32 0.0, %v3432
      %3434 = vmatprep.mubr.f32.mxu0 0.0
      %3435 = vmatmul.mubr.f32.gmra.mrb[0].mxu0 %v3100
      %v3436 = vpop.f32.mrb[0].mxu0
      %v3437 = vadd.f32 0.0, %v3436
      %v3438 = vpop.f32.mrb[0].mxu0
      %v3439 = vadd.f32 0.0, %v3438
      %3440 = vmatprep.mubr.f32.mxu0 0.0
      %3441 = vmatmul.mubr.f32.gmra.mrb[0].mxu0 %v3103
      %v3442 = vpop.f32.mrb[0].mxu0
      %v3443 = vadd.f32 0.0, %v3442
      %v3444 = vpop.f32.mrb[0].mxu0
      %v3445 = vadd.f32 0.0, %v3444
      %3446 = vmatprep.mubr.f32.mxu0 0.0
      %3447 = vmatmul.mubr.f32.gmra.mrb[0].mxu0 %v3106
      %v3448 = vpop.f32.mrb[0].mxu0
      %v3449 = vadd.f32 0.0, %v3448
      %v3450 = vpop.f32.mrb[0].mxu0
      %v3451 = vadd.f32 0.0, %v3450
      %3452 = vmatprep.mubr.f32.mxu0 0.0
      %3453 = vmatmul.mubr.f32.gmra.mrb[0].mxu0 %v3109
      %v3454 = vpop.f32.mrb[0].mxu0
      %v3455 = vadd.f32 0.0, %v3454
      %v3456 = vpop.f32.mrb[0].mxu0
      %v3457 = vadd.f32 0.0, %v3456
      %3458 = vmatprep.mubr.f32.mxu0 0.0
      %3459 = vmatmul.mubr.f32.gmra.mrb[0].mxu0 %v3112
      %v3460 = vpop.f32.mrb[0].mxu0
      %v3461 = vadd.f32 0.0, %v3460
      %v3462 = vpop.f32.mrb[0].mxu0
      %v3463 = vadd.f32 0.0, %v3462
      %3464 = vmatprep.mubr.f32.mxu0 0.0
      %3465 = vmatmul.mubr.f32.gmra.mrb[0].mxu0 %v3115
      %v3466 = vpop.f32.mrb[0].mxu0
      %v3467 = vadd.f32 0.0, %v3466
      %v3468 = vpop.f32.mrb[0].mxu0
      %v3469 = vadd.f32 0.0, %v3468
      %3470 = vmatprep.mubr.f32.mxu0 0.0
      %3471 = vmatmul.mubr.f32.gmra.mrb[0].mxu0 %v3118
      %v3472 = vpop.f32.mrb[0].mxu0
      %v3473 = vadd.f32 0.0, %v3472
      %v3474 = vpop.f32.mrb[0].mxu0
      %v3475 = vadd.f32 0.0, %v3474
      %3476 = vmatprep.mubr.f32.mxu0 0.0
      %3477 = vmatmul.mubr.f32.gmra.mrb[0].mxu0 %v3121
      %v3478 = vpop.f32.mrb[0].mxu0
      %v3479 = vadd.f32 0.0, %v3478
      %v3480 = vpop.f32.mrb[0].mxu0
      %v3481 = vadd.f32 0.0, %v3480
      %3482 = vmatprep.mubr.f32.mxu0 0.0
      %3483 = vmatmul.mubr.f32.gmra.mrb[0].mxu0 %v3124
      %v3484 = vpop.f32.mrb[0].mxu0
      %v3485 = vadd.f32 0.0, %v3484
      %v3486 = vpop.f32.mrb[0].mxu0
      %v3487 = vadd.f32 0.0, %v3486
      %3488 = vmatprep.mubr.f32.mxu0 0.0
      %3489 = vmatmul.mubr.f32.gmra.mrb[0].mxu0 %v3127
      %v3490 = vpop.f32.mrb[0].mxu0
      %v3491 = vadd.f32 0.0, %v3490
      %v3492 = vpop.f32.mrb[0].mxu0
      %v3493 = vadd.f32 0.0, %v3492
      %3494 = vmatprep.mubr.f32.mxu0 0.0
      %3495 = vmatmul.mubr.f32.gmra.mrb[0].mxu0 %v3130
      %v3496 = vpop.f32.mrb[0].mxu0
      %v3497 = vadd.f32 0.0, %v3496
      %v3498 = vpop.f32.mrb[0].mxu0
      %v3499 = vadd.f32 0.0, %v3498
      %3500 = vmatprep.mubr.f32.mxu0 0.0
      %3501 = vmatmul.mubr.f32.gmra.mrb[0].mxu0 %v3133
      %v3502 = vpop.f32.mrb[0].mxu0
      %v3503 = vadd.f32 0.0, %v3502
      %v3504 = vpop.f32.mrb[0].mxu0
      %v3505 = vadd.f32 0.0, %v3504
      %3506 = vmatprep.mubr.f32.mxu0 0.0
      %3507 = vmatmul.mubr.f32.gmra.mrb[0].mxu0 %v3136
      %v3508 = vpop.f32.mrb[0].mxu0
      %v3509 = vadd.f32 0.0, %v3508
      %v3510 = vpop.f32.mrb[0].mxu0
      %v3511 = vadd.f32 0.0, %v3510
      %3512 = vmatprep.mubr.f32.mxu0 0.0
      %3513 = vmatmul.mubr.f32.gmra.mrb[0].mxu0 %v3139
      %v3514 = vpop.f32.mrb[0].mxu0
      %v3515 = vadd.f32 0.0, %v3514
      %v3516 = vpop.f32.mrb[0].mxu0
      %v3517 = vadd.f32 0.0, %v3516
      %3518 = vmatprep.mubr.f32.mxu0 0.0
      %3519 = vmatmul.mubr.f32.gmra.mrb[0].mxu0 %v3142
      %v3520 = vpop.f32.mrb[0].mxu0
      %v3521 = vadd.f32 0.0, %v3520
      %v3522 = vpop.f32.mrb[0].mxu0
      %v3523 = vadd.f32 0.0, %v3522
      %3524 = vmatprep.mubr.f32.mxu0 0.0
      %3525 = vmatmul.mubr.f32.gmra.mrb[0].mxu0 %v3145
      %v3526 = vpop.f32.mrb[0].mxu0
      %v3527 = vadd.f32 0.0, %v3526
      %v3528 = vpop.f32.mrb[0].mxu0
      %v3529 = vadd.f32 0.0, %v3528
      %3530 = vmatprep.mubr.f32.mxu0 0.0
      %3531 = vmatmul.mubr.f32.gmra.mrb[0].mxu0 %v3148
      %v3532 = vpop.f32.mrb[0].mxu0
      %v3533 = vadd.f32 0.0, %v3532
      %v3534 = vpop.f32.mrb[0].mxu0
      %v3535 = vadd.f32 0.0, %v3534
      %3536 = vmatprep.mubr.f32.mxu0 0.0
      %3537 = vmatmul.mubr.f32.gmra.mrb[0].mxu0 %v3151
      %v3538 = vpop.f32.mrb[0].mxu0
      %v3539 = vadd.f32 0.0, %v3538
      %v3540 = vpop.f32.mrb[0].mxu0
      %v3541 = vadd.f32 0.0, %v3540
      %3542 = vmatprep.mubr.f32.mxu0 0.0
      %3543 = vmatmul.mubr.f32.gmra.mrb[0].mxu0 %v3154
      %v3544 = vpop.f32.mrb[0].mxu0
      %v3545 = vadd.f32 0.0, %v3544
      %v3546 = vpop.f32.mrb[0].mxu0
      %v3547 = vadd.f32 0.0, %v3546
      %3548 = vmatprep.mubr.f32.mxu0 0.0
      %3549 = vmatmul.mubr.f32.gmra.mrb[0].mxu0 %v3157
      %v3550 = vpop.f32.mrb[0].mxu0
      %v3551 = vadd.f32 0.0, %v3550
      %v3552 = vpop.f32.mrb[0].mxu0
      %v3553 = vadd.f32 0.0, %v3552
      %3554 = vmatprep.mubr.f32.mxu0 0.0
      %3555 = vmatmul.mubr.f32.gmra.mrb[0].mxu0 %v3160
      %v3556 = vpop.f32.mrb[0].mxu0
      %v3557 = vadd.f32 0.0, %v3556
      %v3558 = vpop.f32.mrb[0].mxu0
      %v3559 = vadd.f32 0.0, %v3558
      %3560 = vmatprep.mubr.f32.mxu0 0.0
      %3561 = vmatmul.mubr.f32.gmra.mrb[0].mxu0 %v3163
      %v3562 = vpop.f32.mrb[0].mxu0
      %v3563 = vadd.f32 0.0, %v3562
      %v3564 = vpop.f32.mrb[0].mxu0
      %v3565 = vadd.f32 0.0, %v3564
      %3566 = vmatprep.mubr.f32.mxu0 0.0
      %3567 = vmatmul.mubr.f32.gmra.mrb[0].mxu0 %v3166
      %v3568 = vpop.f32.mrb[0].mxu0
      %v3569 = vadd.f32 0.0, %v3568
      %v3570 = vpop.f32.mrb[0].mxu0
      %v3571 = vadd.f32 0.0, %v3570
      %3572 = vmatprep.mubr.f32.mxu0 0.0
      %3573 = vmatmul.mubr.f32.gmra.mrb[0].mxu0 %v3169
      %v3574 = vpop.f32.mrb[0].mxu0
      %v3575 = vadd.f32 0.0, %v3574
      %v3576 = vpop.f32.mrb[0].mxu0
      %v3577 = vadd.f32 0.0, %v3576
      %3578 = vmatprep.mubr.f32.mxu0 0.0
      %3579 = vmatmul.mubr.f32.gmra.mrb[0].mxu0 %v3172
      %v3580 = vpop.f32.mrb[0].mxu0
      %v3581 = vadd.f32 0.0, %v3580
      %v3582 = vpop.f32.mrb[0].mxu0
      %v3583 = vadd.f32 0.0, %v3582
      %3584 = vmatprep.mubr.f32.mxu0 0.0
      %3585 = vmatmul.mubr.f32.gmra.mrb[0].mxu0 %v3175
      %v3586 = vpop.f32.mrb[0].mxu0
      %v3587 = vadd.f32 0.0, %v3586
      %v3588 = vpop.f32.mrb[0].mxu0
      %v3589 = vadd.f32 0.0, %v3588
      %3590 = vmatprep.mubr.f32.mxu0 0.0
      %3591 = vmatmul.mubr.f32.gmra.mrb[0].mxu0 %v3178
      %v3592 = vpop.f32.mrb[0].mxu0
      %v3593 = vadd.f32 0.0, %v3592
      %v3594 = vpop.f32.mrb[0].mxu0
      %v3595 = vadd.f32 0.0, %v3594
      %3596 = vmatprep.mubr.f32.mxu0 0.0
      %3597 = vmatmul.mubr.f32.gmra.mrb[0].mxu0 %v3181
      %v3598 = vpop.f32.mrb[0].mxu0
      %v3599 = vadd.f32 0.0, %v3598
      %v3600 = vpop.f32.mrb[0].mxu0
      %v3601 = vadd.f32 0.0, %v3600
      %3602 = vmatprep.mubr.f32.mxu0 0.0
      %3603 = vmatmul.mubr.f32.gmra.mrb[0].mxu0 %v3184
      %v3604 = vpop.f32.mrb[0].mxu0
      %v3605 = vadd.f32 0.0, %v3604
      %v3606 = vpop.f32.mrb[0].mxu0
      %v3607 = vadd.f32 0.0, %v3606
      %3608 = vmatprep.mubr.f32.mxu0 0.0
      %3609 = vmatmul.mubr.f32.gmra.mrb[0].mxu0 %v3187
      %v3610 = vpop.f32.mrb[0].mxu0
      %v3611 = vadd.f32 0.0, %v3610
      %v3612 = vpop.f32.mrb[0].mxu0
      %v3613 = vadd.f32 0.0, %v3612
      %3614 = vmatprep.mubr.f32.mxu0 0.0
      %3615 = vmatmul.mubr.f32.gmra.mrb[0].mxu0 %v3190
      %v3616 = vpop.f32.mrb[0].mxu0
      %v3617 = vadd.f32 0.0, %v3616
      %v3618 = vpop.f32.mrb[0].mxu0
      %v3619 = vadd.f32 0.0, %v3618
      %3620 = vmatprep.mubr.f32.mxu0 0.0
      %3621 = vmatmul.mubr.f32.gmra.mrb[0].mxu0 %v3193
      %v3622 = vpop.f32.mrb[0].mxu0
      %v3623 = vadd.f32 0.0, %v3622
      %v3624 = vpop.f32.mrb[0].mxu0
      %v3625 = vadd.f32 0.0, %v3624
      %3626 = vmatprep.mubr.f32.mxu0 0.0
      %3627 = vmatmul.mubr.f32.gmra.mrb[0].mxu0 %v3196
      %v3628 = vpop.f32.mrb[0].mxu0
      %v3629 = vadd.f32 0.0, %v3628
      %v3630 = vpop.f32.mrb[0].mxu0
      %v3631 = vadd.f32 0.0, %v3630
      %3632 = vmatprep.mubr.f32.mxu0 0.0
      %3633 = vmatmul.mubr.f32.gmra.mrb[0].mxu0 %v3199
      %v3634 = vpop.f32.mrb[0].mxu0
      %v3635 = vadd.f32 0.0, %v3634
      %v3636 = vpop.f32.mrb[0].mxu0
      %v3637 = vadd.f32 0.0, %v3636
      %3638 = vmatprep.mubr.f32.mxu0 0.0
      %3639 = vmatmul.mubr.f32.gmra.mrb[0].mxu0 %v3202
      %v3640 = vpop.f32.mrb[0].mxu0
      %v3641 = vadd.f32 0.0, %v3640
      %v3642 = vpop.f32.mrb[0].mxu0
      %v3643 = vadd.f32 0.0, %v3642
      %3644 = vmatprep.mubr.f32.mxu0 0.0
      %3645 = vmatmul.mubr.f32.gmra.mrb[0].mxu0 %v3205
      %v3646 = vpop.f32.mrb[0].mxu0
      %v3647 = vadd.f32 0.0, %v3646
      %v3648 = vpop.f32.mrb[0].mxu0
      %v3649 = vadd.f32 0.0, %v3648
      %3650 = vmatprep.mubr.f32.mxu0 0.0
      %3651 = vmatmul.mubr.f32.gmra.mrb[0].mxu0 %v3208
      %v3652 = vpop.f32.mrb[0].mxu0
      %v3653 = vadd.f32 0.0, %v3652
      %v3654 = vpop.f32.mrb[0].mxu0
      %v3655 = vadd.f32 0.0, %v3654
      %3656 = vmatprep.mubr.f32.mxu0 0.0
      %3657 = vmatmul.mubr.f32.gmra.mrb[0].mxu0 %v3211
      %v3658 = vpop.f32.mrb[0].mxu0
      %v3659 = vadd.f32 0.0, %v3658
      %v3660 = vpop.f32.mrb[0].mxu0
      %v3661 = vadd.f32 0.0, %v3660
      %3662 = vmatprep.mubr.f32.mxu0 0.0
      %3663 = vmatmul.mubr.f32.gmra.mrb[0].mxu0 %v3214
      %v3664 = vpop.f32.mrb[0].mxu0
      %v3665 = vadd.f32 0.0, %v3664
      %v3666 = vpop.f32.mrb[0].mxu0
      %v3667 = vadd.f32 0.0, %v3666
      %3668 = vmatprep.mubr.f32.mxu0 0.0
      %3669 = vmatmul.mubr.f32.gmra.mrb[0].mxu0 %v3217
      %v3670 = vpop.f32.mrb[0].mxu0
      %v3671 = vadd.f32 0.0, %v3670
      %v3672 = vpop.f32.mrb[0].mxu0
      %v3673 = vadd.f32 0.0, %v3672
      %3674 = vdwg.mxu0
      %3675 = vst [vmem:[#allocation7] sm:$0xff] %v3293
      %3676 = vst [vmem:[#allocation7 + $0x8] sm:$0xff] %v3295
      %3677 = vst [vmem:[#allocation7 + $0x10] sm:$0xff] %v3299
      %3678 = vst [vmem:[#allocation7 + $0x18] sm:$0xff] %v3301
      %3679 = vst [vmem:[#allocation7 + $0x20] sm:$0xff] %v3305
      %3680 = vst [vmem:[#allocation7 + $0x28] sm:$0xff] %v3307
      %3681 = vst [vmem:[#allocation7 + $0x30] sm:$0xff] %v3311
      %3682 = vst [vmem:[#allocation7 + $0x38] sm:$0xff] %v3313
      %3683 = vst [vmem:[#allocation7 + $0x40] sm:$0xff] %v3317
      %3684 = vst [vmem:[#allocation7 + $0x48] sm:$0xff] %v3319
      %3685 = vst [vmem:[#allocation7 + $0x50] sm:$0xff] %v3323
      %3686 = vst [vmem:[#allocation7 + $0x58] sm:$0xff] %v3325
      %3687 = vst [vmem:[#allocation7 + $0x60] sm:$0xff] %v3329
      %3688 = vst [vmem:[#allocation7 + $0x68] sm:$0xff] %v3331
      %3689 = vst [vmem:[#allocation7 + $0x70] sm:$0xff] %v3335
      %3690 = vst [vmem:[#allocation7 + $0x78] sm:$0xff] %v3337
      %3691 = vst [vmem:[#allocation7 + $0x80] sm:$0xff] %v3341
      %3692 = vst [vmem:[#allocation7 + $0x88] sm:$0xff] %v3343
      %3693 = vst [vmem:[#allocation7 + $0x90] sm:$0xff] %v3347
      %3694 = vst [vmem:[#allocation7 + $0x98] sm:$0xff] %v3349
      %3695 = vst [vmem:[#allocation7 + $0xa0] sm:$0xff] %v3353
      %3696 = vst [vmem:[#allocation7 + $0xa8] sm:$0xff] %v3355
      %3697 = vst [vmem:[#allocation7 + $0xb0] sm:$0xff] %v3359
      %3698 = vst [vmem:[#allocation7 + $0xb8] sm:$0xff] %v3361
      %3699 = vst [vmem:[#allocation7 + $0xc0] sm:$0xff] %v3365
      %3700 = vst [vmem:[#allocation7 + $0xc8] sm:$0xff] %v3367
      %3701 = vst [vmem:[#allocation7 + $0xd0] sm:$0xff] %v3371
      %3702 = vst [vmem:[#allocation7 + $0xd8] sm:$0xff] %v3373
      %3703 = vst [vmem:[#allocation7 + $0xe0] sm:$0xff] %v3377
      %3704 = vst [vmem:[#allocation7 + $0xe8] sm:$0xff] %v3379
      %3705 = vst [vmem:[#allocation7 + $0xf0] sm:$0xff] %v3383
      %3706 = vst [vmem:[#allocation7 + $0xf8] sm:$0xff] %v3385
      %3707 = vst [vmem:[#allocation7 + $0x100] sm:$0xff] %v3389
      %3708 = vst [vmem:[#allocation7 + $0x108] sm:$0xff] %v3391
      %3709 = vst [vmem:[#allocation7 + $0x110] sm:$0xff] %v3395
      %3710 = vst [vmem:[#allocation7 + $0x118] sm:$0xff] %v3397
      %3711 = vst [vmem:[#allocation7 + $0x120] sm:$0xff] %v3401
      %3712 = vst [vmem:[#allocation7 + $0x128] sm:$0xff] %v3403
      %3713 = vst [vmem:[#allocation7 + $0x130] sm:$0xff] %v3407
      %3714 = vst [vmem:[#allocation7 + $0x138] sm:$0xff] %v3409
      %3715 = vst [vmem:[#allocation7 + $0x140] sm:$0xff] %v3413
      %3716 = vst [vmem:[#allocation7 + $0x148] sm:$0xff] %v3415
      %3717 = vst [vmem:[#allocation7 + $0x150] sm:$0xff] %v3419
      %3718 = vst [vmem:[#allocation7 + $0x158] sm:$0xff] %v3421
      %3719 = vst [vmem:[#allocation7 + $0x160] sm:$0xff] %v3425
      %3720 = vst [vmem:[#allocation7 + $0x168] sm:$0xff] %v3427
      %3721 = vst [vmem:[#allocation7 + $0x170] sm:$0xff] %v3431
      %3722 = vst [vmem:[#allocation7 + $0x178] sm:$0xff] %v3433
      %3723 = vst [vmem:[#allocation7 + $0x180] sm:$0xff] %v3437
      %3724 = vst [vmem:[#allocation7 + $0x188] sm:$0xff] %v3439
      %3725 = vst [vmem:[#allocation7 + $0x190] sm:$0xff] %v3443
      %3726 = vst [vmem:[#allocation7 + $0x198] sm:$0xff] %v3445
      %3727 = vst [vmem:[#allocation7 + $0x1a0] sm:$0xff] %v3449
      %3728 = vst [vmem:[#allocation7 + $0x1a8] sm:$0xff] %v3451
      %3729 = vst [vmem:[#allocation7 + $0x1b0] sm:$0xff] %v3455
      %3730 = vst [vmem:[#allocation7 + $0x1b8] sm:$0xff] %v3457
      %3731 = vst [vmem:[#allocation7 + $0x1c0] sm:$0xff] %v3461
      %3732 = vst [vmem:[#allocation7 + $0x1c8] sm:$0xff] %v3463
      %3733 = vst [vmem:[#allocation7 + $0x1d0] sm:$0xff] %v3467
      %3734 = vst [vmem:[#allocation7 + $0x1d8] sm:$0xff] %v3469
      %3735 = vst [vmem:[#allocation7 + $0x1e0] sm:$0xff] %v3473
      %3736 = vst [vmem:[#allocation7 + $0x1e8] sm:$0xff] %v3475
      %3737 = vst [vmem:[#allocation7 + $0x1f0] sm:$0xff] %v3479
      %3738 = vst [vmem:[#allocation7 + $0x1f8] sm:$0xff] %v3481
      %3739 = vst [vmem:[#allocation7 + $0x200] sm:$0xff] %v3485
      %3740 = vst [vmem:[#allocation7 + $0x208] sm:$0xff] %v3487
      %3741 = vst [vmem:[#allocation7 + $0x210] sm:$0xff] %v3491
      %3742 = vst [vmem:[#allocation7 + $0x218] sm:$0xff] %v3493
      %3743 = vst [vmem:[#allocation7 + $0x220] sm:$0xff] %v3497
      %3744 = vst [vmem:[#allocation7 + $0x228] sm:$0xff] %v3499
      %3745 = vst [vmem:[#allocation7 + $0x230] sm:$0xff] %v3503
      %3746 = vst [vmem:[#allocation7 + $0x238] sm:$0xff] %v3505
      %3747 = vst [vmem:[#allocation7 + $0x240] sm:$0xff] %v3509
      %3748 = vst [vmem:[#allocation7 + $0x248] sm:$0xff] %v3511
      %3749 = vst [vmem:[#allocation7 + $0x250] sm:$0xff] %v3515
      %3750 = vst [vmem:[#allocation7 + $0x258] sm:$0xff] %v3517
      %3751 = vst [vmem:[#allocation7 + $0x260] sm:$0xff] %v3521
      %3752 = vst [vmem:[#allocation7 + $0x268] sm:$0xff] %v3523
      %3753 = vst [vmem:[#allocation7 + $0x270] sm:$0xff] %v3527
      %3754 = vst [vmem:[#allocation7 + $0x278] sm:$0xff] %v3529
      %3755 = vst [vmem:[#allocation7 + $0x280] sm:$0xff] %v3533
      %3756 = vst [vmem:[#allocation7 + $0x288] sm:$0xff] %v3535
      %3757 = vst [vmem:[#allocation7 + $0x290] sm:$0xff] %v3539
      %3758 = vst [vmem:[#allocation7 + $0x298] sm:$0xff] %v3541
      %3759 = vst [vmem:[#allocation7 + $0x2a0] sm:$0xff] %v3545
      %3760 = vst [vmem:[#allocation7 + $0x2a8] sm:$0xff] %v3547
      %3761 = vst [vmem:[#allocation7 + $0x2b0] sm:$0xff] %v3551
      %3762 = vst [vmem:[#allocation7 + $0x2b8] sm:$0xff] %v3553
      %3763 = vst [vmem:[#allocation7 + $0x2c0] sm:$0xff] %v3557
      %3764 = vst [vmem:[#allocation7 + $0x2c8] sm:$0xff] %v3559
      %3765 = vst [vmem:[#allocation7 + $0x2d0] sm:$0xff] %v3563
      %3766 = vst [vmem:[#allocation7 + $0x2d8] sm:$0xff] %v3565
      %3767 = vst [vmem:[#allocation7 + $0x2e0] sm:$0xff] %v3569
      %3768 = vst [vmem:[#allocation7 + $0x2e8] sm:$0xff] %v3571
      %3769 = vst [vmem:[#allocation7 + $0x2f0] sm:$0xff] %v3575
      %3770 = vst [vmem:[#allocation7 + $0x2f8] sm:$0xff] %v3577
      %3771 = vst [vmem:[#allocation7 + $0x300] sm:$0xff] %v3581
      %3772 = vst [vmem:[#allocation7 + $0x308] sm:$0xff] %v3583
      %3773 = vst [vmem:[#allocation7 + $0x310] sm:$0xff] %v3587
      %3774 = vst [vmem:[#allocation7 + $0x318] sm:$0xff] %v3589
      %3775 = vst [vmem:[#allocation7 + $0x320] sm:$0xff] %v3593
      %3776 = vst [vmem:[#allocation7 + $0x328] sm:$0xff] %v3595
      %3777 = vst [vmem:[#allocation7 + $0x330] sm:$0xff] %v3599
      %3778 = vst [vmem:[#allocation7 + $0x338] sm:$0xff] %v3601
      %3779 = vst [vmem:[#allocation7 + $0x340] sm:$0xff] %v3605
      %3780 = vst [vmem:[#allocation7 + $0x348] sm:$0xff] %v3607
      %3781 = vst [vmem:[#allocation7 + $0x350] sm:$0xff] %v3611
      %3782 = vst [vmem:[#allocation7 + $0x358] sm:$0xff] %v3613
      %3783 = vst [vmem:[#allocation7 + $0x360] sm:$0xff] %v3617
      %3784 = vst [vmem:[#allocation7 + $0x368] sm:$0xff] %v3619
      %3785 = vst [vmem:[#allocation7 + $0x370] sm:$0xff] %v3623
      %3786 = vst [vmem:[#allocation7 + $0x378] sm:$0xff] %v3625
      %3787 = vst [vmem:[#allocation7 + $0x380] sm:$0xff] %v3629
      %3788 = vst [vmem:[#allocation7 + $0x388] sm:$0xff] %v3631
      %3789 = vst [vmem:[#allocation7 + $0x390] sm:$0xff] %v3635
      %3790 = vst [vmem:[#allocation7 + $0x398] sm:$0xff] %v3637
      %3791 = vst [vmem:[#allocation7 + $0x3a0] sm:$0xff] %v3641
      %3792 = vst [vmem:[#allocation7 + $0x3a8] sm:$0xff] %v3643
      %3793 = vst [vmem:[#allocation7 + $0x3b0] sm:$0xff] %v3647
      %3794 = vst [vmem:[#allocation7 + $0x3b8] sm:$0xff] %v3649
      %3795 = vst [vmem:[#allocation7 + $0x3c0] sm:$0xff] %v3653
      %3796 = vst [vmem:[#allocation7 + $0x3c8] sm:$0xff] %v3655
      %3797 = vst [vmem:[#allocation7 + $0x3d0] sm:$0xff] %v3659
      %3798 = vst [vmem:[#allocation7 + $0x3d8] sm:$0xff] %v3661
      %3799 = vst [vmem:[#allocation7 + $0x3e0] sm:$0xff] %v3665
      %3800 = vst [vmem:[#allocation7 + $0x3e8] sm:$0xff] %v3667
      %3801 = vst [vmem:[#allocation7 + $0x3f0] sm:$0xff] %v3671
      %3802 = vst [vmem:[#allocation7 + $0x3f8] sm:$0xff] %v3673
      %v3803 = vld [vmem:[#allocation7] sm:$0xff]
      %v3804 = vld [vmem:[#allocation7 + $0x8] sm:$0xff]
      %v3805 = vld [vmem:[#allocation7 + $0x10] sm:$0xff]
      %v3806 = vld [vmem:[#allocation7 + $0x18] sm:$0xff]
      %v3807 = vld [vmem:[%s8] sm:$0xff]
      %v3808 = vld [vmem:[%s8 + $0x8] sm:$0xff]
      %v3809 = vld [vmem:[%s8 + $0x10] sm:$0xff]
      %v3810 = vld [vmem:[%s8 + $0x18] sm:$0xff]
      %v3811 = vmul.f32 %v3803, %v3807
      %v3812 = vmul.f32 %v3804, %v3808
      %v3813 = vmul.f32 %v3805, %v3809
      %v3814 = vmul.f32 %v3806, %v3810
      %v3815 = vld [vmem:[#allocation7 + $0x20] sm:$0xff]
      %v3816 = vld [vmem:[#allocation7 + $0x28] sm:$0xff]
      %v3817 = vld [vmem:[#allocation7 + $0x30] sm:$0xff]
      %v3818 = vld [vmem:[#allocation7 + $0x38] sm:$0xff]
      %v3819 = vld [vmem:[%s8 + $0x20] sm:$0xff]
      %v3820 = vld [vmem:[%s8 + $0x28] sm:$0xff]
      %v3821 = vld [vmem:[%s8 + $0x30] sm:$0xff]
      %v3822 = vld [vmem:[%s8 + $0x38] sm:$0xff]
      %v3823 = vmul.f32 %v3815, %v3819
      %v3824 = vmul.f32 %v3816, %v3820
      %v3825 = vmul.f32 %v3817, %v3821
      %v3826 = vmul.f32 %v3818, %v3822
      %v3827 = vadd.f32 %v3811, %v3823
      %v3828 = vadd.f32 %v3812, %v3824
      %v3829 = vadd.f32 %v3813, %v3825
      %v3830 = vadd.f32 %v3814, %v3826
      %v3831 = vld [vmem:[#allocation7 + $0x40] sm:$0xff]
      %v3832 = vld [vmem:[#allocation7 + $0x48] sm:$0xff]
      %v3833 = vld [vmem:[#allocation7 + $0x50] sm:$0xff]
      %v3834 = vld [vmem:[#allocation7 + $0x58] sm:$0xff]
      %v3835 = vld [vmem:[%s8 + $0x40] sm:$0xff]
      %v3836 = vld [vmem:[%s8 + $0x48] sm:$0xff]
      %v3837 = vld [vmem:[%s8 + $0x50] sm:$0xff]
      %v3838 = vld [vmem:[%s8 + $0x58] sm:$0xff]
      %v3839 = vmul.f32 %v3831, %v3835
      %v3840 = vmul.f32 %v3832, %v3836
      %v3841 = vmul.f32 %v3833, %v3837
      %v3842 = vmul.f32 %v3834, %v3838
      %v3843 = vadd.f32 %v3827, %v3839
      %v3844 = vadd.f32 %v3828, %v3840
      %v3845 = vadd.f32 %v3829, %v3841
      %v3846 = vadd.f32 %v3830, %v3842
      %v3847 = vld [vmem:[#allocation7 + $0x60] sm:$0xff]
      %v3848 = vld [vmem:[#allocation7 + $0x68] sm:$0xff]
      %v3849 = vld [vmem:[#allocation7 + $0x70] sm:$0xff]
      %v3850 = vld [vmem:[#allocation7 + $0x78] sm:$0xff]
      %v3851 = vld [vmem:[%s8 + $0x60] sm:$0xff]
      %v3852 = vld [vmem:[%s8 + $0x68] sm:$0xff]
      %v3853 = vld [vmem:[%s8 + $0x70] sm:$0xff]
      %v3854 = vld [vmem:[%s8 + $0x78] sm:$0xff]
      %v3855 = vmul.f32 %v3847, %v3851
      %v3856 = vmul.f32 %v3848, %v3852
      %v3857 = vmul.f32 %v3849, %v3853
      %v3858 = vmul.f32 %v3850, %v3854
      %v3859 = vadd.f32 %v3843, %v3855
      %v3860 = vadd.f32 %v3844, %v3856
      %v3861 = vadd.f32 %v3845, %v3857
      %v3862 = vadd.f32 %v3846, %v3858
      %v3863 = vld [vmem:[#allocation7 + $0x80] sm:$0xff]
      %v3864 = vld [vmem:[#allocation7 + $0x88] sm:$0xff]
      %v3865 = vld [vmem:[#allocation7 + $0x90] sm:$0xff]
      %v3866 = vld [vmem:[#allocation7 + $0x98] sm:$0xff]
      %v3867 = vld [vmem:[%s8 + $0x80] sm:$0xff]
      %v3868 = vld [vmem:[%s8 + $0x88] sm:$0xff]
      %v3869 = vld [vmem:[%s8 + $0x90] sm:$0xff]
      %v3870 = vld [vmem:[%s8 + $0x98] sm:$0xff]
      %v3871 = vmul.f32 %v3863, %v3867
      %v3872 = vmul.f32 %v3864, %v3868
      %v3873 = vmul.f32 %v3865, %v3869
      %v3874 = vmul.f32 %v3866, %v3870
      %v3875 = vadd.f32 %v3859, %v3871
      %v3876 = vadd.f32 %v3860, %v3872
      %v3877 = vadd.f32 %v3861, %v3873
      %v3878 = vadd.f32 %v3862, %v3874
      %v3879 = vld [vmem:[#allocation7 + $0xa0] sm:$0xff]
      %v3880 = vld [vmem:[#allocation7 + $0xa8] sm:$0xff]
      %v3881 = vld [vmem:[#allocation7 + $0xb0] sm:$0xff]
      %v3882 = vld [vmem:[#allocation7 + $0xb8] sm:$0xff]
      %v3883 = vld [vmem:[%s8 + $0xa0] sm:$0xff]
      %v3884 = vld [vmem:[%s8 + $0xa8] sm:$0xff]
      %v3885 = vld [vmem:[%s8 + $0xb0] sm:$0xff]
      %v3886 = vld [vmem:[%s8 + $0xb8] sm:$0xff]
      %v3887 = vmul.f32 %v3879, %v3883
      %v3888 = vmul.f32 %v3880, %v3884
      %v3889 = vmul.f32 %v3881, %v3885
      %v3890 = vmul.f32 %v3882, %v3886
      %v3891 = vadd.f32 %v3875, %v3887
      %v3892 = vadd.f32 %v3876, %v3888
      %v3893 = vadd.f32 %v3877, %v3889
      %v3894 = vadd.f32 %v3878, %v3890
      %v3895 = vld [vmem:[#allocation7 + $0xc0] sm:$0xff]
      %v3896 = vld [vmem:[#allocation7 + $0xc8] sm:$0xff]
      %v3897 = vld [vmem:[#allocation7 + $0xd0] sm:$0xff]
      %v3898 = vld [vmem:[#allocation7 + $0xd8] sm:$0xff]
      %v3899 = vld [vmem:[%s8 + $0xc0] sm:$0xff]
      %v3900 = vld [vmem:[%s8 + $0xc8] sm:$0xff]
      %v3901 = vld [vmem:[%s8 + $0xd0] sm:$0xff]
      %v3902 = vld [vmem:[%s8 + $0xd8] sm:$0xff]
      %v3903 = vmul.f32 %v3895, %v3899
      %v3904 = vmul.f32 %v3896, %v3900
      %v3905 = vmul.f32 %v3897, %v3901
      %v3906 = vmul.f32 %v3898, %v3902
      %v3907 = vadd.f32 %v3891, %v3903
      %v3908 = vadd.f32 %v3892, %v3904
      %v3909 = vadd.f32 %v3893, %v3905
      %v3910 = vadd.f32 %v3894, %v3906
      %v3911 = vld [vmem:[#allocation7 + $0xe0] sm:$0xff]
      %v3912 = vld [vmem:[#allocation7 + $0xe8] sm:$0xff]
      %v3913 = vld [vmem:[#allocation7 + $0xf0] sm:$0xff]
      %v3914 = vld [vmem:[#allocation7 + $0xf8] sm:$0xff]
      %v3915 = vld [vmem:[%s8 + $0xe0] sm:$0xff]
      %v3916 = vld [vmem:[%s8 + $0xe8] sm:$0xff]
      %v3917 = vld [vmem:[%s8 + $0xf0] sm:$0xff]
      %v3918 = vld [vmem:[%s8 + $0xf8] sm:$0xff]
      %v3919 = vmul.f32 %v3911, %v3915
      %v3920 = vmul.f32 %v3912, %v3916
      %v3921 = vmul.f32 %v3913, %v3917
      %v3922 = vmul.f32 %v3914, %v3918
      %v3923 = vadd.f32 %v3907, %v3919
      %v3924 = vadd.f32 %v3908, %v3920
      %v3925 = vadd.f32 %v3909, %v3921
      %v3926 = vadd.f32 %v3910, %v3922
      %v3927 = vld [vmem:[#allocation7 + $0x100] sm:$0xff]
      %v3928 = vld [vmem:[#allocation7 + $0x108] sm:$0xff]
      %v3929 = vld [vmem:[#allocation7 + $0x110] sm:$0xff]
      %v3930 = vld [vmem:[#allocation7 + $0x118] sm:$0xff]
      %v3931 = vld [vmem:[%s8 + $0x100] sm:$0xff]
      %v3932 = vld [vmem:[%s8 + $0x108] sm:$0xff]
      %v3933 = vld [vmem:[%s8 + $0x110] sm:$0xff]
      %v3934 = vld [vmem:[%s8 + $0x118] sm:$0xff]
      %v3935 = vmul.f32 %v3927, %v3931
      %v3936 = vmul.f32 %v3928, %v3932
      %v3937 = vmul.f32 %v3929, %v3933
      %v3938 = vmul.f32 %v3930, %v3934
      %v3939 = vadd.f32 %v3923, %v3935
      %v3940 = vadd.f32 %v3924, %v3936
      %v3941 = vadd.f32 %v3925, %v3937
      %v3942 = vadd.f32 %v3926, %v3938
      %v3943 = vld [vmem:[#allocation7 + $0x120] sm:$0xff]
      %v3944 = vld [vmem:[#allocation7 + $0x128] sm:$0xff]
      %v3945 = vld [vmem:[#allocation7 + $0x130] sm:$0xff]
      %v3946 = vld [vmem:[#allocation7 + $0x138] sm:$0xff]
      %v3947 = vld [vmem:[%s8 + $0x120] sm:$0xff]
      %v3948 = vld [vmem:[%s8 + $0x128] sm:$0xff]
      %v3949 = vld [vmem:[%s8 + $0x130] sm:$0xff]
      %v3950 = vld [vmem:[%s8 + $0x138] sm:$0xff]
      %v3951 = vmul.f32 %v3943, %v3947
      %v3952 = vmul.f32 %v3944, %v3948
      %v3953 = vmul.f32 %v3945, %v3949
      %v3954 = vmul.f32 %v3946, %v3950
      %v3955 = vadd.f32 %v3939, %v3951
      %v3956 = vadd.f32 %v3940, %v3952
      %v3957 = vadd.f32 %v3941, %v3953
      %v3958 = vadd.f32 %v3942, %v3954
      %v3959 = vld [vmem:[#allocation7 + $0x140] sm:$0xff]
      %v3960 = vld [vmem:[#allocation7 + $0x148] sm:$0xff]
      %v3961 = vld [vmem:[#allocation7 + $0x150] sm:$0xff]
      %v3962 = vld [vmem:[#allocation7 + $0x158] sm:$0xff]
      %v3963 = vld [vmem:[%s8 + $0x140] sm:$0xff]
      %v3964 = vld [vmem:[%s8 + $0x148] sm:$0xff]
      %v3965 = vld [vmem:[%s8 + $0x150] sm:$0xff]
      %v3966 = vld [vmem:[%s8 + $0x158] sm:$0xff]
      %v3967 = vmul.f32 %v3959, %v3963
      %v3968 = vmul.f32 %v3960, %v3964
      %v3969 = vmul.f32 %v3961, %v3965
      %v3970 = vmul.f32 %v3962, %v3966
      %v3971 = vadd.f32 %v3955, %v3967
      %v3972 = vadd.f32 %v3956, %v3968
      %v3973 = vadd.f32 %v3957, %v3969
      %v3974 = vadd.f32 %v3958, %v3970
      %v3975 = vld [vmem:[#allocation7 + $0x160] sm:$0xff]
      %v3976 = vld [vmem:[#allocation7 + $0x168] sm:$0xff]
      %v3977 = vld [vmem:[#allocation7 + $0x170] sm:$0xff]
      %v3978 = vld [vmem:[#allocation7 + $0x178] sm:$0xff]
      %v3979 = vld [vmem:[%s8 + $0x160] sm:$0xff]
      %v3980 = vld [vmem:[%s8 + $0x168] sm:$0xff]
      %v3981 = vld [vmem:[%s8 + $0x170] sm:$0xff]
      %v3982 = vld [vmem:[%s8 + $0x178] sm:$0xff]
      %v3983 = vmul.f32 %v3975, %v3979
      %v3984 = vmul.f32 %v3976, %v3980
      %v3985 = vmul.f32 %v3977, %v3981
      %v3986 = vmul.f32 %v3978, %v3982
      %v3987 = vadd.f32 %v3971, %v3983
      %v3988 = vadd.f32 %v3972, %v3984
      %v3989 = vadd.f32 %v3973, %v3985
      %v3990 = vadd.f32 %v3974, %v3986
      %v3991 = vld [vmem:[#allocation7 + $0x180] sm:$0xff]
      %v3992 = vld [vmem:[#allocation7 + $0x188] sm:$0xff]
      %v3993 = vld [vmem:[#allocation7 + $0x190] sm:$0xff]
      %v3994 = vld [vmem:[#allocation7 + $0x198] sm:$0xff]
      %v3995 = vld [vmem:[%s8 + $0x180] sm:$0xff]
      %v3996 = vld [vmem:[%s8 + $0x188] sm:$0xff]
      %v3997 = vld [vmem:[%s8 + $0x190] sm:$0xff]
      %v3998 = vld [vmem:[%s8 + $0x198] sm:$0xff]
      %v3999 = vmul.f32 %v3991, %v3995
      %v4000 = vmul.f32 %v3992, %v3996
      %v4001 = vmul.f32 %v3993, %v3997
      %v4002 = vmul.f32 %v3994, %v3998
      %v4003 = vadd.f32 %v3987, %v3999
      %v4004 = vadd.f32 %v3988, %v4000
      %v4005 = vadd.f32 %v3989, %v4001
      %v4006 = vadd.f32 %v3990, %v4002
      %v4007 = vld [vmem:[#allocation7 + $0x1a0] sm:$0xff]
      %v4008 = vld [vmem:[#allocation7 + $0x1a8] sm:$0xff]
      %v4009 = vld [vmem:[#allocation7 + $0x1b0] sm:$0xff]
      %v4010 = vld [vmem:[#allocation7 + $0x1b8] sm:$0xff]
      %v4011 = vld [vmem:[%s8 + $0x1a0] sm:$0xff]
      %v4012 = vld [vmem:[%s8 + $0x1a8] sm:$0xff]
      %v4013 = vld [vmem:[%s8 + $0x1b0] sm:$0xff]
      %v4014 = vld [vmem:[%s8 + $0x1b8] sm:$0xff]
      %v4015 = vmul.f32 %v4007, %v4011
      %v4016 = vmul.f32 %v4008, %v4012
      %v4017 = vmul.f32 %v4009, %v4013
      %v4018 = vmul.f32 %v4010, %v4014
      %v4019 = vadd.f32 %v4003, %v4015
      %v4020 = vadd.f32 %v4004, %v4016
      %v4021 = vadd.f32 %v4005, %v4017
      %v4022 = vadd.f32 %v4006, %v4018
      %v4023 = vld [vmem:[#allocation7 + $0x1c0] sm:$0xff]
      %v4024 = vld [vmem:[#allocation7 + $0x1c8] sm:$0xff]
      %v4025 = vld [vmem:[#allocation7 + $0x1d0] sm:$0xff]
      %v4026 = vld [vmem:[#allocation7 + $0x1d8] sm:$0xff]
      %v4027 = vld [vmem:[%s8 + $0x1c0] sm:$0xff]
      %v4028 = vld [vmem:[%s8 + $0x1c8] sm:$0xff]
      %v4029 = vld [vmem:[%s8 + $0x1d0] sm:$0xff]
      %v4030 = vld [vmem:[%s8 + $0x1d8] sm:$0xff]
      %v4031 = vmul.f32 %v4023, %v4027
      %v4032 = vmul.f32 %v4024, %v4028
      %v4033 = vmul.f32 %v4025, %v4029
      %v4034 = vmul.f32 %v4026, %v4030
      %v4035 = vadd.f32 %v4019, %v4031
      %v4036 = vadd.f32 %v4020, %v4032
      %v4037 = vadd.f32 %v4021, %v4033
      %v4038 = vadd.f32 %v4022, %v4034
      %v4039 = vld [vmem:[#allocation7 + $0x1e0] sm:$0xff]
      %v4040 = vld [vmem:[#allocation7 + $0x1e8] sm:$0xff]
      %v4041 = vld [vmem:[#allocation7 + $0x1f0] sm:$0xff]
      %v4042 = vld [vmem:[#allocation7 + $0x1f8] sm:$0xff]
      %v4043 = vld [vmem:[%s8 + $0x1e0] sm:$0xff]
      %v4044 = vld [vmem:[%s8 + $0x1e8] sm:$0xff]
      %v4045 = vld [vmem:[%s8 + $0x1f0] sm:$0xff]
      %v4046 = vld [vmem:[%s8 + $0x1f8] sm:$0xff]
      %v4047 = vmul.f32 %v4039, %v4043
      %v4048 = vmul.f32 %v4040, %v4044
      %v4049 = vmul.f32 %v4041, %v4045
      %v4050 = vmul.f32 %v4042, %v4046
      %v4051 = vadd.f32 %v4035, %v4047
      %v4052 = vadd.f32 %v4036, %v4048
      %v4053 = vadd.f32 %v4037, %v4049
      %v4054 = vadd.f32 %v4038, %v4050
      %v4055 = vld [vmem:[#allocation7 + $0x200] sm:$0xff]
      %v4056 = vld [vmem:[#allocation7 + $0x208] sm:$0xff]
      %v4057 = vld [vmem:[#allocation7 + $0x210] sm:$0xff]
      %v4058 = vld [vmem:[#allocation7 + $0x218] sm:$0xff]
      %v4059 = vld [vmem:[%s8 + $0x200] sm:$0xff]
      %v4060 = vld [vmem:[%s8 + $0x208] sm:$0xff]
      %v4061 = vld [vmem:[%s8 + $0x210] sm:$0xff]
      %v4062 = vld [vmem:[%s8 + $0x218] sm:$0xff]
      %v4063 = vmul.f32 %v4055, %v4059
      %v4064 = vmul.f32 %v4056, %v4060
      %v4065 = vmul.f32 %v4057, %v4061
      %v4066 = vmul.f32 %v4058, %v4062
      %v4067 = vadd.f32 %v4051, %v4063
      %v4068 = vadd.f32 %v4052, %v4064
      %v4069 = vadd.f32 %v4053, %v4065
      %v4070 = vadd.f32 %v4054, %v4066
      %v4071 = vld [vmem:[#allocation7 + $0x220] sm:$0xff]
      %v4072 = vld [vmem:[#allocation7 + $0x228] sm:$0xff]
      %v4073 = vld [vmem:[#allocation7 + $0x230] sm:$0xff]
      %v4074 = vld [vmem:[#allocation7 + $0x238] sm:$0xff]
      %v4075 = vld [vmem:[%s8 + $0x220] sm:$0xff]
      %v4076 = vld [vmem:[%s8 + $0x228] sm:$0xff]
      %v4077 = vld [vmem:[%s8 + $0x230] sm:$0xff]
      %v4078 = vld [vmem:[%s8 + $0x238] sm:$0xff]
      %v4079 = vmul.f32 %v4071, %v4075
      %v4080 = vmul.f32 %v4072, %v4076
      %v4081 = vmul.f32 %v4073, %v4077
      %v4082 = vmul.f32 %v4074, %v4078
      %v4083 = vadd.f32 %v4067, %v4079
      %v4084 = vadd.f32 %v4068, %v4080
      %v4085 = vadd.f32 %v4069, %v4081
      %v4086 = vadd.f32 %v4070, %v4082
      %v4087 = vld [vmem:[#allocation7 + $0x240] sm:$0xff]
      %v4088 = vld [vmem:[#allocation7 + $0x248] sm:$0xff]
      %v4089 = vld [vmem:[#allocation7 + $0x250] sm:$0xff]
      %v4090 = vld [vmem:[#allocation7 + $0x258] sm:$0xff]
      %v4091 = vld [vmem:[%s8 + $0x240] sm:$0xff]
      %v4092 = vld [vmem:[%s8 + $0x248] sm:$0xff]
      %v4093 = vld [vmem:[%s8 + $0x250] sm:$0xff]
      %v4094 = vld [vmem:[%s8 + $0x258] sm:$0xff]
      %v4095 = vmul.f32 %v4087, %v4091
      %v4096 = vmul.f32 %v4088, %v4092
      %v4097 = vmul.f32 %v4089, %v4093
      %v4098 = vmul.f32 %v4090, %v4094
      %v4099 = vadd.f32 %v4083, %v4095
      %v4100 = vadd.f32 %v4084, %v4096
      %v4101 = vadd.f32 %v4085, %v4097
      %v4102 = vadd.f32 %v4086, %v4098
      %v4103 = vld [vmem:[#allocation7 + $0x260] sm:$0xff]
      %v4104 = vld [vmem:[#allocation7 + $0x268] sm:$0xff]
      %v4105 = vld [vmem:[#allocation7 + $0x270] sm:$0xff]
      %v4106 = vld [vmem:[#allocation7 + $0x278] sm:$0xff]
      %v4107 = vld [vmem:[%s8 + $0x260] sm:$0xff]
      %v4108 = vld [vmem:[%s8 + $0x268] sm:$0xff]
      %v4109 = vld [vmem:[%s8 + $0x270] sm:$0xff]
      %v4110 = vld [vmem:[%s8 + $0x278] sm:$0xff]
      %v4111 = vmul.f32 %v4103, %v4107
      %v4112 = vmul.f32 %v4104, %v4108
      %v4113 = vmul.f32 %v4105, %v4109
      %v4114 = vmul.f32 %v4106, %v4110
      %v4115 = vadd.f32 %v4099, %v4111
      %v4116 = vadd.f32 %v4100, %v4112
      %v4117 = vadd.f32 %v4101, %v4113
      %v4118 = vadd.f32 %v4102, %v4114
      %v4119 = vld [vmem:[#allocation7 + $0x280] sm:$0xff]
      %v4120 = vld [vmem:[#allocation7 + $0x288] sm:$0xff]
      %v4121 = vld [vmem:[#allocation7 + $0x290] sm:$0xff]
      %v4122 = vld [vmem:[#allocation7 + $0x298] sm:$0xff]
      %v4123 = vld [vmem:[%s8 + $0x280] sm:$0xff]
      %v4124 = vld [vmem:[%s8 + $0x288] sm:$0xff]
      %v4125 = vld [vmem:[%s8 + $0x290] sm:$0xff]
      %v4126 = vld [vmem:[%s8 + $0x298] sm:$0xff]
      %v4127 = vmul.f32 %v4119, %v4123
      %v4128 = vmul.f32 %v4120, %v4124
      %v4129 = vmul.f32 %v4121, %v4125
      %v4130 = vmul.f32 %v4122, %v4126
      %v4131 = vadd.f32 %v4115, %v4127
      %v4132 = vadd.f32 %v4116, %v4128
      %v4133 = vadd.f32 %v4117, %v4129
      %v4134 = vadd.f32 %v4118, %v4130
      %v4135 = vld [vmem:[#allocation7 + $0x2a0] sm:$0xff]
      %v4136 = vld [vmem:[#allocation7 + $0x2a8] sm:$0xff]
      %v4137 = vld [vmem:[#allocation7 + $0x2b0] sm:$0xff]
      %v4138 = vld [vmem:[#allocation7 + $0x2b8] sm:$0xff]
      %v4139 = vld [vmem:[%s8 + $0x2a0] sm:$0xff]
      %v4140 = vld [vmem:[%s8 + $0x2a8] sm:$0xff]
      %v4141 = vld [vmem:[%s8 + $0x2b0] sm:$0xff]
      %v4142 = vld [vmem:[%s8 + $0x2b8] sm:$0xff]
      %v4143 = vmul.f32 %v4135, %v4139
      %v4144 = vmul.f32 %v4136, %v4140
      %v4145 = vmul.f32 %v4137, %v4141
      %v4146 = vmul.f32 %v4138, %v4142
      %v4147 = vadd.f32 %v4131, %v4143
      %v4148 = vadd.f32 %v4132, %v4144
      %v4149 = vadd.f32 %v4133, %v4145
      %v4150 = vadd.f32 %v4134, %v4146
      %v4151 = vld [vmem:[#allocation7 + $0x2c0] sm:$0xff]
      %v4152 = vld [vmem:[#allocation7 + $0x2c8] sm:$0xff]
      %v4153 = vld [vmem:[#allocation7 + $0x2d0] sm:$0xff]
      %v4154 = vld [vmem:[#allocation7 + $0x2d8] sm:$0xff]
      %v4155 = vld [vmem:[%s8 + $0x2c0] sm:$0xff]
      %v4156 = vld [vmem:[%s8 + $0x2c8] sm:$0xff]
      %v4157 = vld [vmem:[%s8 + $0x2d0] sm:$0xff]
      %v4158 = vld [vmem:[%s8 + $0x2d8] sm:$0xff]
      %v4159 = vmul.f32 %v4151, %v4155
      %v4160 = vmul.f32 %v4152, %v4156
      %v4161 = vmul.f32 %v4153, %v4157
      %v4162 = vmul.f32 %v4154, %v4158
      %v4163 = vadd.f32 %v4147, %v4159
      %v4164 = vadd.f32 %v4148, %v4160
      %v4165 = vadd.f32 %v4149, %v4161
      %v4166 = vadd.f32 %v4150, %v4162
      %v4167 = vld [vmem:[#allocation7 + $0x2e0] sm:$0xff]
      %v4168 = vld [vmem:[#allocation7 + $0x2e8] sm:$0xff]
      %v4169 = vld [vmem:[#allocation7 + $0x2f0] sm:$0xff]
      %v4170 = vld [vmem:[#allocation7 + $0x2f8] sm:$0xff]
      %v4171 = vld [vmem:[%s8 + $0x2e0] sm:$0xff]
      %v4172 = vld [vmem:[%s8 + $0x2e8] sm:$0xff]
      %v4173 = vld [vmem:[%s8 + $0x2f0] sm:$0xff]
      %v4174 = vld [vmem:[%s8 + $0x2f8] sm:$0xff]
      %v4175 = vmul.f32 %v4167, %v4171
      %v4176 = vmul.f32 %v4168, %v4172
      %v4177 = vmul.f32 %v4169, %v4173
      %v4178 = vmul.f32 %v4170, %v4174
      %v4179 = vadd.f32 %v4163, %v4175
      %v4180 = vadd.f32 %v4164, %v4176
      %v4181 = vadd.f32 %v4165, %v4177
      %v4182 = vadd.f32 %v4166, %v4178
      %v4183 = vld [vmem:[#allocation7 + $0x300] sm:$0xff]
      %v4184 = vld [vmem:[#allocation7 + $0x308] sm:$0xff]
      %v4185 = vld [vmem:[#allocation7 + $0x310] sm:$0xff]
      %v4186 = vld [vmem:[#allocation7 + $0x318] sm:$0xff]
      %v4187 = vld [vmem:[%s8 + $0x300] sm:$0xff]
      %v4188 = vld [vmem:[%s8 + $0x308] sm:$0xff]
      %v4189 = vld [vmem:[%s8 + $0x310] sm:$0xff]
      %v4190 = vld [vmem:[%s8 + $0x318] sm:$0xff]
      %v4191 = vmul.f32 %v4183, %v4187
      %v4192 = vmul.f32 %v4184, %v4188
      %v4193 = vmul.f32 %v4185, %v4189
      %v4194 = vmul.f32 %v4186, %v4190
      %v4195 = vadd.f32 %v4179, %v4191
      %v4196 = vadd.f32 %v4180, %v4192
      %v4197 = vadd.f32 %v4181, %v4193
      %v4198 = vadd.f32 %v4182, %v4194
      %v4199 = vld [vmem:[#allocation7 + $0x320] sm:$0xff]
      %v4200 = vld [vmem:[#allocation7 + $0x328] sm:$0xff]
      %v4201 = vld [vmem:[#allocation7 + $0x330] sm:$0xff]
      %v4202 = vld [vmem:[#allocation7 + $0x338] sm:$0xff]
      %v4203 = vld [vmem:[%s8 + $0x320] sm:$0xff]
      %v4204 = vld [vmem:[%s8 + $0x328] sm:$0xff]
      %v4205 = vld [vmem:[%s8 + $0x330] sm:$0xff]
      %v4206 = vld [vmem:[%s8 + $0x338] sm:$0xff]
      %v4207 = vmul.f32 %v4199, %v4203
      %v4208 = vmul.f32 %v4200, %v4204
      %v4209 = vmul.f32 %v4201, %v4205
      %v4210 = vmul.f32 %v4202, %v4206
      %v4211 = vadd.f32 %v4195, %v4207
      %v4212 = vadd.f32 %v4196, %v4208
      %v4213 = vadd.f32 %v4197, %v4209
      %v4214 = vadd.f32 %v4198, %v4210
      %v4215 = vld [vmem:[#allocation7 + $0x340] sm:$0xff]
      %v4216 = vld [vmem:[#allocation7 + $0x348] sm:$0xff]
      %v4217 = vld [vmem:[#allocation7 + $0x350] sm:$0xff]
      %v4218 = vld [vmem:[#allocation7 + $0x358] sm:$0xff]
      %v4219 = vld [vmem:[%s8 + $0x340] sm:$0xff]
      %v4220 = vld [vmem:[%s8 + $0x348] sm:$0xff]
      %v4221 = vld [vmem:[%s8 + $0x350] sm:$0xff]
      %v4222 = vld [vmem:[%s8 + $0x358] sm:$0xff]
      %v4223 = vmul.f32 %v4215, %v4219
      %v4224 = vmul.f32 %v4216, %v4220
      %v4225 = vmul.f32 %v4217, %v4221
      %v4226 = vmul.f32 %v4218, %v4222
      %v4227 = vadd.f32 %v4211, %v4223
      %v4228 = vadd.f32 %v4212, %v4224
      %v4229 = vadd.f32 %v4213, %v4225
      %v4230 = vadd.f32 %v4214, %v4226
      %v4231 = vld [vmem:[#allocation7 + $0x360] sm:$0xff]
      %v4232 = vld [vmem:[#allocation7 + $0x368] sm:$0xff]
      %v4233 = vld [vmem:[#allocation7 + $0x370] sm:$0xff]
      %v4234 = vld [vmem:[#allocation7 + $0x378] sm:$0xff]
      %v4235 = vld [vmem:[%s8 + $0x360] sm:$0xff]
      %v4236 = vld [vmem:[%s8 + $0x368] sm:$0xff]
      %v4237 = vld [vmem:[%s8 + $0x370] sm:$0xff]
      %v4238 = vld [vmem:[%s8 + $0x378] sm:$0xff]
      %v4239 = vmul.f32 %v4231, %v4235
      %v4240 = vmul.f32 %v4232, %v4236
      %v4241 = vmul.f32 %v4233, %v4237
      %v4242 = vmul.f32 %v4234, %v4238
      %v4243 = vadd.f32 %v4227, %v4239
      %v4244 = vadd.f32 %v4228, %v4240
      %v4245 = vadd.f32 %v4229, %v4241
      %v4246 = vadd.f32 %v4230, %v4242
      %v4247 = vld [vmem:[#allocation7 + $0x380] sm:$0xff]
      %v4248 = vld [vmem:[#allocation7 + $0x388] sm:$0xff]
      %v4249 = vld [vmem:[#allocation7 + $0x390] sm:$0xff]
      %v4250 = vld [vmem:[#allocation7 + $0x398] sm:$0xff]
      %v4251 = vld [vmem:[%s8 + $0x380] sm:$0xff]
      %v4252 = vld [vmem:[%s8 + $0x388] sm:$0xff]
      %v4253 = vld [vmem:[%s8 + $0x390] sm:$0xff]
      %v4254 = vld [vmem:[%s8 + $0x398] sm:$0xff]
      %v4255 = vmul.f32 %v4247, %v4251
      %v4256 = vmul.f32 %v4248, %v4252
      %v4257 = vmul.f32 %v4249, %v4253
      %v4258 = vmul.f32 %v4250, %v4254
      %v4259 = vadd.f32 %v4243, %v4255
      %v4260 = vadd.f32 %v4244, %v4256
      %v4261 = vadd.f32 %v4245, %v4257
      %v4262 = vadd.f32 %v4246, %v4258
      %v4263 = vld [vmem:[#allocation7 + $0x3a0] sm:$0xff]
      %v4264 = vld [vmem:[#allocation7 + $0x3a8] sm:$0xff]
      %v4265 = vld [vmem:[#allocation7 + $0x3b0] sm:$0xff]
      %v4266 = vld [vmem:[#allocation7 + $0x3b8] sm:$0xff]
      %v4267 = vld [vmem:[%s8 + $0x3a0] sm:$0xff]
      %v4268 = vld [vmem:[%s8 + $0x3a8] sm:$0xff]
      %v4269 = vld [vmem:[%s8 + $0x3b0] sm:$0xff]
      %v4270 = vld [vmem:[%s8 + $0x3b8] sm:$0xff]
      %v4271 = vmul.f32 %v4263, %v4267
      %v4272 = vmul.f32 %v4264, %v4268
      %v4273 = vmul.f32 %v4265, %v4269
      %v4274 = vmul.f32 %v4266, %v4270
      %v4275 = vadd.f32 %v4259, %v4271
      %v4276 = vadd.f32 %v4260, %v4272
      %v4277 = vadd.f32 %v4261, %v4273
      %v4278 = vadd.f32 %v4262, %v4274
      %v4279 = vld [vmem:[#allocation7 + $0x3c0] sm:$0xff]
      %v4280 = vld [vmem:[#allocation7 + $0x3c8] sm:$0xff]
      %v4281 = vld [vmem:[#allocation7 + $0x3d0] sm:$0xff]
      %v4282 = vld [vmem:[#allocation7 + $0x3d8] sm:$0xff]
      %v4283 = vld [vmem:[%s8 + $0x3c0] sm:$0xff]
      %v4284 = vld [vmem:[%s8 + $0x3c8] sm:$0xff]
      %v4285 = vld [vmem:[%s8 + $0x3d0] sm:$0xff]
      %v4286 = vld [vmem:[%s8 + $0x3d8] sm:$0xff]
      %v4287 = vmul.f32 %v4279, %v4283
      %v4288 = vmul.f32 %v4280, %v4284
      %v4289 = vmul.f32 %v4281, %v4285
      %v4290 = vmul.f32 %v4282, %v4286
      %v4291 = vadd.f32 %v4275, %v4287
      %v4292 = vadd.f32 %v4276, %v4288
      %v4293 = vadd.f32 %v4277, %v4289
      %v4294 = vadd.f32 %v4278, %v4290
      %v4295 = vld [vmem:[#allocation7 + $0x3e0] sm:$0xff]
      %v4296 = vld [vmem:[#allocation7 + $0x3e8] sm:$0xff]
      %v4297 = vld [vmem:[#allocation7 + $0x3f0] sm:$0xff]
      %v4298 = vld [vmem:[#allocation7 + $0x3f8] sm:$0xff]
      %v4299 = vld [vmem:[%s8 + $0x3e0] sm:$0xff]
      %v4300 = vld [vmem:[%s8 + $0x3e8] sm:$0xff]
      %v4301 = vld [vmem:[%s8 + $0x3f0] sm:$0xff]
      %v4302 = vld [vmem:[%s8 + $0x3f8] sm:$0xff]
      %v4303 = vmul.f32 %v4295, %v4299
      %v4304 = vmul.f32 %v4296, %v4300
      %v4305 = vmul.f32 %v4297, %v4301
      %v4306 = vmul.f32 %v4298, %v4302
      %v4307 = vadd.f32 %v4291, %v4303
      %v4308 = vadd.f32 %v4292, %v4304
      %v4309 = vadd.f32 %v4293, %v4305
      %v4310 = vadd.f32 %v4294, %v4306
      %v4311 = vld [vmem:[%s9] sm:$0xff]
      %v4312 = vld [vmem:[%s9 + $0x8] sm:$0xff]
      %v4313 = vld [vmem:[%s9 + $0x10] sm:$0xff]
      %v4314 = vld [vmem:[%s9 + $0x18] sm:$0xff]
      %v4315 = vld [vmem:[%s9 + $0x20] sm:$0xff]
      %v4316 = vld [vmem:[%s9 + $0x28] sm:$0xff]
      %v4317 = vld [vmem:[%s9 + $0x30] sm:$0xff]
      %v4318 = vld [vmem:[%s9 + $0x38] sm:$0xff]
      %v4319 = vld [vmem:[%s9 + $0x40] sm:$0xff]
      %v4320 = vld [vmem:[%s9 + $0x48] sm:$0xff]
      %v4321 = vld [vmem:[%s9 + $0x50] sm:$0xff]
      %v4322 = vld [vmem:[%s9 + $0x58] sm:$0xff]
      %v4323 = vld [vmem:[%s9 + $0x60] sm:$0xff]
      %v4324 = vld [vmem:[%s9 + $0x68] sm:$0xff]
      %v4325 = vld [vmem:[%s9 + $0x70] sm:$0xff]
      %v4326 = vld [vmem:[%s9 + $0x78] sm:$0xff]
      %v4327 = vld [vmem:[%s9 + $0x80] sm:$0xff]
      %v4328 = vld [vmem:[%s9 + $0x88] sm:$0xff]
      %v4329 = vld [vmem:[%s9 + $0x90] sm:$0xff]
      %v4330 = vld [vmem:[%s9 + $0x98] sm:$0xff]
      %v4331 = vld [vmem:[%s9 + $0xa0] sm:$0xff]
      %v4332 = vld [vmem:[%s9 + $0xa8] sm:$0xff]
      %v4333 = vld [vmem:[%s9 + $0xb0] sm:$0xff]
      %v4334 = vld [vmem:[%s9 + $0xb8] sm:$0xff]
      %v4335 = vld [vmem:[%s9 + $0xc0] sm:$0xff]
      %v4336 = vld [vmem:[%s9 + $0xc8] sm:$0xff]
      %v4337 = vld [vmem:[%s9 + $0xd0] sm:$0xff]
      %v4338 = vld [vmem:[%s9 + $0xd8] sm:$0xff]
      %v4339 = vld [vmem:[%s9 + $0xe0] sm:$0xff]
      %v4340 = vld [vmem:[%s9 + $0xe8] sm:$0xff]
      %v4341 = vld [vmem:[%s9 + $0xf0] sm:$0xff]
      %v4342 = vld [vmem:[%s9 + $0xf8] sm:$0xff]
      %v4343 = vld [vmem:[%s10] sm:$0xff]
      %v4344 = vld [vmem:[%s10 + $0x8] sm:$0xff]
      %4345 = vmatprep.subr.mxu0 0.0
      %4346 = vmatpush1.msra.mxu0 %v4311
      %4347 = vmatprep.subr.mxu0 0.0
      %4348 = vmatpush1.msra.mxu0 %v4312
      %4349 = vmatprep.subr.mxu0 0.0
      %4350 = vmatpush1.msra.mxu0 %v4313
      %4351 = vmatprep.subr.mxu0 0.0
      %4352 = vmatpush1.msra.mxu0 %v4314
      %4353 = vmatprep.subr.mxu0 0.0
      %4354 = vmatpush1.msra.mxu0 %v4315
      %4355 = vmatprep.subr.mxu0 0.0
      %4356 = vmatpush1.msra.mxu0 %v4316
      %4357 = vmatprep.subr.mxu0 0.0
      %4358 = vmatpush1.msra.mxu0 %v4317
      %4359 = vmatprep.subr.mxu0 0.0
      %4360 = vmatpush1.msra.mxu0 %v4318
      %4361 = vmatprep.subr.mxu0 0.0
      %4362 = vmatpush1.msra.mxu0 %v4319
      %4363 = vmatprep.subr.mxu0 0.0
      %4364 = vmatpush1.msra.mxu0 %v4320
      %4365 = vmatprep.subr.mxu0 0.0
      %4366 = vmatpush1.msra.mxu0 %v4321
      %4367 = vmatprep.subr.mxu0 0.0
      %4368 = vmatpush1.msra.mxu0 %v4322
      %4369 = vmatprep.subr.mxu0 0.0
      %4370 = vmatpush1.msra.mxu0 %v4323
      %4371 = vmatprep.subr.mxu0 0.0
      %4372 = vmatpush1.msra.mxu0 %v4324
      %4373 = vmatprep.subr.mxu0 0.0
      %4374 = vmatpush1.msra.mxu0 %v4325
      %4375 = vmatprep.subr.mxu0 0.0
      %4376 = vmatpush1.msra.mxu0 %v4326
      %4377 = vmatprep.subr.mxu0 0.0
      %4378 = vmatpush1.msra.mxu0 %v4327
      %4379 = vmatprep.subr.mxu0 0.0
      %4380 = vmatpush1.msra.mxu0 %v4328
      %4381 = vmatprep.subr.mxu0 0.0
      %4382 = vmatpush1.msra.mxu0 %v4329
      %4383 = vmatprep.subr.mxu0 0.0
      %4384 = vmatpush1.msra.mxu0 %v4330
      %4385 = vmatprep.subr.mxu0 0.0
      %4386 = vmatpush1.msra.mxu0 %v4331
      %4387 = vmatprep.subr.mxu0 0.0
      %4388 = vmatpush1.msra.mxu0 %v4332
      %4389 = vmatprep.subr.mxu0 0.0
      %4390 = vmatpush1.msra.mxu0 %v4333
      %4391 = vmatprep.subr.mxu0 0.0
      %4392 = vmatpush1.msra.mxu0 %v4334
      %4393 = vmatprep.subr.mxu0 0.0
      %4394 = vmatpush1.msra.mxu0 %v4335
      %4395 = vmatprep.subr.mxu0 0.0
      %4396 = vmatpush1.msra.mxu0 %v4336
      %4397 = vmatprep.subr.mxu0 0.0
      %4398 = vmatpush1.msra.mxu0 %v4337
      %4399 = vmatprep.subr.mxu0 0.0
      %4400 = vmatpush1.msra.mxu0 %v4338
      %4401 = vmatprep.subr.mxu0 0.0
      %4402 = vmatpush1.msra.mxu0 %v4339
      %4403 = vmatprep.subr.mxu0 0.0
      %4404 = vmatpush1.msra.mxu0 %v4340
      %4405 = vmatprep.subr.mxu0 0.0
      %4406 = vmatpush1.msra.mxu0 %v4341
      %4407 = vmatprep.subr.mxu0 0.0
      %4408 = vmatpush1.msra.mxu0 %v4342
      %4409 = vmatprep.mubr.f32.mxu0 %v4308
      %4410 = vmatmul.mubr.f32.gmra.mrb[0].mxu0 %v4307
      %v4411 = vpop.f32.mrb[0].mxu0
      %v4412 = vadd.f32 %v4343, %v4411
      %v4413 = vpop.f32.mrb[0].mxu0
      %4414 = vmatprep.mubr.f32.mxu0 %v4310
      %4415 = vmatmul.mubr.f32.gmra.mrb[0].mxu0 %v4309
      %v4416 = vpop.f32.mrb[0].mxu0
      %v4417 = vadd.f32 %v4344, %v4416
      %v4418 = vpop.f32.mrb[0].mxu0
      %4419 = vdwg.mxu0
      %v4420 = vld [vmem:[%s11] sm:$0xff]
      %v4421 = vld [vmem:[%s12] sm:$0xff]
      %v4423 = vsel %vm1298, %v4420, 0
      %4425 = vmatprep.subr.mxu0 0.0
      %4426 = vmatpush1.msra.mxu0 %v4412
      %4427 = vmatprep.subr.mxu0 0.0
      %4428 = vmatpush1.msra.mxu0 %v4417
      %4429 = vmatprep.subr.mxu0 0.0
      %4430 = vmatpush1.msra.mxu0 0.0
      %4431 = vmatprep.subr.mxu0 0.0
      %4432 = vmatpush1.msra.mxu0 0.0
      %4433 = vmatprep.subr.mxu0 0.0
      %4434 = vmatpush1.msra.mxu0 0.0
      %4435 = vmatprep.subr.mxu0 0.0
      %4436 = vmatpush1.msra.mxu0 0.0
      %4437 = vmatprep.subr.mxu0 0.0
      %4438 = vmatpush1.msra.mxu0 0.0
      %4439 = vmatprep.subr.mxu0 0.0
      %4440 = vmatpush1.msra.mxu0 0.0
      %4441 = vmatprep.subr.mxu0 0.0
      %4442 = vmatpush1.msra.mxu0 0.0
      %4443 = vmatprep.subr.mxu0 0.0
      %4444 = vmatpush1.msra.mxu0 0.0
      %4445 = vmatprep.subr.mxu0 0.0
      %4446 = vmatpush1.msra.mxu0 0.0
      %4447 = vmatprep.subr.mxu0 0.0
      %4448 = vmatpush1.msra.mxu0 0.0
      %4449 = vmatprep.subr.mxu0 0.0
      %4450 = vmatpush1.msra.mxu0 0.0
      %4451 = vmatprep.subr.mxu0 0.0
      %4452 = vmatpush1.msra.mxu0 0.0
      %4453 = vmatprep.subr.mxu0 0.0
      %4454 = vmatpush1.msra.mxu0 0.0
      %4455 = vmatprep.subr.mxu0 0.0
      %4456 = vmatpush1.msra.mxu0 0.0
      %4457 = vmatprep.subr.mxu0 0.0
      %4458 = vmatpush1.msra.mxu0 0.0
      %4459 = vmatprep.subr.mxu0 0.0
      %4460 = vmatpush1.msra.mxu0 0.0
      %4461 = vmatprep.subr.mxu0 0.0
      %4462 = vmatpush1.msra.mxu0 0.0
      %4463 = vmatprep.subr.mxu0 0.0
      %4464 = vmatpush1.msra.mxu0 0.0
      %4465 = vmatprep.subr.mxu0 0.0
      %4466 = vmatpush1.msra.mxu0 0.0
      %4467 = vmatprep.subr.mxu0 0.0
      %4468 = vmatpush1.msra.mxu0 0.0
      %4469 = vmatprep.subr.mxu0 0.0
      %4470 = vmatpush1.msra.mxu0 0.0
      %4471 = vmatprep.subr.mxu0 0.0
      %4472 = vmatpush1.msra.mxu0 0.0
      %4473 = vmatprep.subr.mxu0 0.0
      %4474 = vmatpush1.msra.mxu0 0.0
      %4475 = vmatprep.subr.mxu0 0.0
      %4476 = vmatpush1.msra.mxu0 0.0
      %4477 = vmatprep.subr.mxu0 0.0
      %4478 = vmatpush1.msra.mxu0 0.0
      %4479 = vmatprep.subr.mxu0 0.0
      %4480 = vmatpush1.msra.mxu0 0.0
      %4481 = vmatprep.subr.mxu0 0.0
      %4482 = vmatpush1.msra.mxu0 0.0
      %4483 = vmatprep.subr.mxu0 0.0
      %4484 = vmatpush1.msra.mxu0 0.0
      %4485 = vmatprep.subr.mxu0 0.0
      %4486 = vmatpush1.msra.mxu0 0.0
      %4487 = vmatprep.subr.mxu0 0.0
      %4488 = vmatpush1.msra.mxu0 0.0
      %4489 = vmatprep.mubr.f32.mxu0 0.0
      %4490 = vmatmul.mubr.f32.gmra.mrb[0].mxu0 %v4423
      %v4491 = vpop.f32.mrb[0].mxu0
      %v4492 = vadd.f32 %v4421, %v4491
      %v4493 = vpop.f32.mrb[0].mxu0
      %4494 = vdwg.mxu0
      %4495 = vst [vmem:[%s438] sm:$0xff] %v4492
      %p4496 = scmp.lt.s32.totalorder %s24, 1
      %s4497 = scalar_select %p4496, %s24, 1
      %s4498 = smul.addr %s4497, 8
      %s4499 = scalar_lea.vmem %s13, %s4498
      // Predicated region
      $region73: #{gait_forward_pallas.1} parent=71 // pred_check
        %p4500 = pneg %p320
      $region74: #{gait_forward_pallas.1} parent=71 // pred_check_branch
        %4502 = sbr.rel (%p4500) target = $region76
      $region75: #{gait_forward_pallas.1} parent=71 // pred_region
        _
      $region76: #{gait_forward_pallas.1} parent=71 // pred_fallthru
        _
    $region72: #{gait_forward_pallas.1} parent=5 // pred_fallthru
      _
    %p4503 = scmp.le.s32.totalorder 2, %s19
    // Predicated region
    $region77: #{gait_forward_pallas.1} parent=5 // pred_check
      %p4504 = pneg %p4503
    $region78: #{gait_forward_pallas.1} parent=5 // pred_check_branch
      %4506 = sbr.rel (%p4504) target = $region80
    $region79: #{gait_forward_pallas.1} parent=5 // pred_region
      %s4507 = ssub.s32 %s19, 2
      // Predicated region
      $region81: #{gait_forward_pallas.1} parent=79 // pred_check
        %p4508 = pneg %p326
      $region82: #{gait_forward_pallas.1} parent=79 // pred_check_branch
        %4510 = sbr.rel (%p4508) target = $region84
      $region83: #{gait_forward_pallas.1} parent=79 // pred_region
        %p4511 = scmp.lt.s32.totalorder %s25, 1
        %s4512 = scalar_select %p4511, %s25, 1
        %s4513 = smul.addr %s4512, 8
        %s4514 = scalar_lea.vmem %s13, %s4513
      $region84: #{gait_forward_pallas.1} parent=79 // pred_fallthru
        _
    $region80: #{gait_forward_pallas.1} parent=5 // pred_fallthru
      _
  $region6: #{gait_forward_pallas.1} parent=0 // loop_footer
    %s23 = sadd.s32 1, %s19
  $region7: #{gait_forward_pallas.1} parent=0 // loop_footer_branch
    %18 = sbr.rel target = $region3
  $region8: #{gait_forward_pallas.1} parent=0 // loop_exit
    _

</llo_original>
